<compile_context>
chip_gen: v7x
topology: tpu7x:2x2x1
jax: 0.10.0
libtpu: 0.0.40
codegen_flags: <defaults>
</compile_context>

<pallas_src>
import math

import jax
import jax.numpy as jnp
from jax.experimental import pallas as pl
from jax.experimental.pallas import tpu as pltpu


# ---------------------------------------------------------------------------
# Exact (erf-based) GELU, matching torch.nn.functional.gelu's default.
# Uses only exp/abs/where so it lowers cleanly in Mosaic (|err| < 1.5e-7).
# ---------------------------------------------------------------------------
_SQRT1_2 = 0.7071067811865476


def _erf(x):
    a1, a2, a3, a4, a5 = 0.254829592, -0.284496736, 1.421413741, -1.453152027, 1.061405429
    pp = 0.3275911
    sign = jnp.where(x >= 0.0, 1.0, -1.0)
    ax = jnp.abs(x)
    t = 1.0 / (1.0 + pp * ax)
    poly = ((((a5 * t + a4) * t + a3) * t + a2) * t + a1) * t
    return sign * (1.0 - poly * jnp.exp(-ax * ax))


def _gelu(x):
    return 0.5 * x * (1.0 + _erf(x * _SQRT1_2))


# ---------------------------------------------------------------------------
# The fused MERA kernel.
#   refs = [x_flat, <10 params per level>..., <8 attention params>, out, head_scratch]
# Per-level params (all pre-transposed / pre-folded in the wrapper):
#   w1t (2h,2h), b1 (1,2h), w2t (2h,2h), b2 (1,2h), s_dis (1,2h), u_dis (2h,2h),
#   w3t (2h,out), b3 (1,out), s_iso (1,out), u_iso (out,out)
# Attention params: wq_t, bq, wk_t, bk, wv_t, bv, wo_t, bo
# ---------------------------------------------------------------------------
def _make_mera_kernel(num_levels, num_heads, n_inputs):
    def kernel(*refs):
        o_ref = refs[n_inputs]
        head_s = refs[n_inputs + 1]  # VMEM scratch (3, heads*rows, head_dim)

        cur = refs[0][...].astype(jnp.float32)  # (rows, 2*hidden_dims[0])
        pos = 1

        # ----------------- MERA levels: disentangler -> isometry -----------------
        for _lvl in range(num_levels):
            w1t, b1, w2t, b2, sd, ud, w3t, b3, si, ui = refs[pos:pos + 10]
            pos += 10
            two_h = w1t.shape[0]
            rows, feat = cur.shape
            merge = two_h // feat  # how many consecutive rows fuse into one "view" row

            if merge == 1:
                y = jnp.dot(cur, w1t[...], preferred_element_type=jnp.float32)
            else:
                # current.view(B, -1, 2h) folded into the first Linear via one-hot
                # row-selection matrices (built with iota, applied on the MXU).
                new_rows = rows // merge
                ri = jax.lax.broadcasted_iota(jnp.int32, (new_rows, rows), 0)
                ci = jax.lax.broadcasted_iota(jnp.int32, (new_rows, rows), 1)
                y = jnp.zeros((new_rows, two_h), jnp.float32)
                for m in range(merge):
                    sel = jnp.where(ci == merge * ri + m, 1.0, 0.0)  # (new_rows, rows)
                    piece = jnp.dot(sel, cur, preferred_element_type=jnp.float32)
                    y = y + jnp.dot(piece, w1t[m * feat:(m + 1) * feat, :],
                                    preferred_element_type=jnp.float32)

            # disentangler: Linear -> ReLU -> Linear -> QuantumInspiredGate
            y = jnp.maximum(y + b1[...], 0.0)
            y = jnp.dot(y, w2t[...], preferred_element_type=jnp.float32) + b2[...]
            y = _gelu(jnp.dot(y * sd[...], ud[...], preferred_element_type=jnp.float32))
            # isometry: Linear -> ReLU -> QuantumInspiredGate
            y = jnp.maximum(
                jnp.dot(y, w3t[...], preferred_element_type=jnp.float32) + b3[...], 0.0)
            cur = _gelu(jnp.dot(y * si[...], ui[...], preferred_element_type=jnp.float32))

        # ----------------- quantum-inspired attention -----------------
        wq, bq, wk, bk, wv, bv, wo, bo = refs[pos:pos + 8]
        rows, dim = cur.shape
        heads = num_heads
        dh = dim // heads

        q_act = jnp.dot(cur, wq[...], preferred_element_type=jnp.float32) + bq[...]
        k_act = jnp.dot(cur, wk[...], preferred_element_type=jnp.float32) + bk[...]
        v_act = jnp.dot(cur, wv[...], preferred_element_type=jnp.float32) + bv[...]
        # TODO(synk): SimulatedQuantumEmbedding.embed()/measure() not provided -> identity.

        # Head split into (heads*rows, dh), head-major row order (a fixed row
        # permutation of the reference order; softmax is row-wise so it commutes,
        # and the merge below applies the matching inverse permutation).
        ri = jax.lax.broadcasted_iota(jnp.int32, (dim, dh), 0)
        ci = jax.lax.broadcasted_iota(jnp.int32, (dim, dh), 1)
        for h in range(heads):
            col_sel = jnp.where(ri == h * dh + ci, 1.0, 0.0)  # (dim, dh) one-hot columns
            head_s[0, h * rows:(h + 1) * rows, :] = jnp.dot(
                q_act, col_sel, preferred_element_type=jnp.float32)
            head_s[1, h * rows:(h + 1) * rows, :] = jnp.dot(
                k_act, col_sel, preferred_element_type=jnp.float32)
            head_s[2, h * rows:(h + 1) * rows, :] = jnp.dot(
                v_act, col_sel, preferred_element_type=jnp.float32)

        q2 = head_s[0]  # (heads*rows, dh)
        k2 = head_s[1]
        v2 = head_s[2]

        scores = jax.lax.dot_general(q2, k2, (((1,), (1,)), ((), ())),
                                     preferred_element_type=jnp.float32)
        scores = scores * (1.0 / math.sqrt(dh))
        scores = scores - jnp.max(scores, axis=-1, keepdims=True)
        e = jnp.exp(scores)
        probs = e / jnp.sum(e, axis=-1, keepdims=True)
        attended = jnp.dot(probs, v2, preferred_element_type=jnp.float32)  # (heads*rows, dh)

        # Head merge back to (rows, dim): out[r, h*dh:(h+1)*dh] = attended[h*rows + r].
        ri2 = jax.lax.broadcasted_iota(jnp.int32, (dh, dim), 0)
        ci2 = jax.lax.broadcasted_iota(jnp.int32, (dh, dim), 1)
        merged = jnp.zeros((rows, dim), jnp.float32)
        for h in range(heads):
            place = jnp.where(ci2 == h * dh + ri2, 1.0, 0.0)  # (dh, dim) one-hot placement
            merged = merged + jnp.dot(attended[h * rows:(h + 1) * rows, :], place,
                                      preferred_element_type=jnp.float32)

        out = jnp.dot(merged, wo[...], preferred_element_type=jnp.float32) + bo[...]
        o_ref[...] = out.astype(o_ref.dtype)

    return kernel


# ---------------------------------------------------------------------------
# Wrapper: layout plumbing + the single pallas_call.
# ---------------------------------------------------------------------------
def mera_forward(x, level_params, attn_params, hidden_dims, num_levels, num_heads):
    batch = x.shape[0]
    two_h0 = 2 * hidden_dims[0]
    total = x.size
    assert total % (batch * two_h0) == 0
    x_flat = x.reshape(batch, -1, two_h0).reshape(-1, two_h0).astype(jnp.float32)

    # Track (rows, feat) through the levels (static) to size output / scratch.
    rows, feat = x_flat.shape
    for lvl in range(num_levels):
        two_h = 2 * hidden_dims[lvl]
        assert two_h % feat == 0, "level width must divide the incoming row width"
        merge = two_h // feat
        rows_per_batch = rows // batch
        assert rows_per_batch % merge == 0, "row merge must not straddle batch boundaries"
        rows //= merge
        feat = hidden_dims[lvl + 1] if lvl < len(hidden_dims) - 1 else hidden_dims[-1]
    dim = hidden_dims[-1]
    assert feat == dim and dim % num_heads == 0
    dh = dim // num_heads

    flat_inputs = [x_flat]
    for lp in level_params:
        flat_inputs.extend(lp)
    flat_inputs.extend(attn_params)
    n_inputs = len(flat_inputs)

    kernel = _make_mera_kernel(num_levels, num_heads, n_inputs)
    out = pl.pallas_call(
        kernel,
        out_shape=jax.ShapeDtypeStruct((rows, dim), jnp.float32),
        scratch_shapes=[pltpu.VMEM((3, num_heads * rows, dh), jnp.float32)],
    )(*flat_inputs)
    return out.reshape(batch, rows // batch, dim)


# ---------------------------------------------------------------------------
# Parameter construction (deterministic; mirrors the PyTorch module's __init__).
# ---------------------------------------------------------------------------
def _linear_init(key, fan_in, fan_out):
    kw, kb = jax.random.split(key)
    bound = 1.0 / math.sqrt(fan_in)
    w = jax.random.uniform(kw, (fan_out, fan_in), jnp.float32, -bound, bound)
    b = jax.random.uniform(kb, (fan_out,), jnp.float32, -bound, bound)
    return w, b


def _orthogonal(key, dim):
    a = jax.random.normal(key, (dim, dim), jnp.float32)
    q, r = jnp.linalg.qr(a)
    d = jnp.sign(jnp.diagonal(r))
    d = jnp.where(d == 0, 1.0, d)
    return q * d[None, :]


def _gate_params(key, dim):
    kt, kp, ku = jax.random.split(key, 3)
    theta = jax.random.normal(kt, (dim,), jnp.float32) * 0.02
    phi = jax.random.normal(kp, (dim,), jnp.float32) * 0.02
    unitary = _orthogonal(ku, dim)
    # x*cos(theta) + x*sin(theta)*cos(phi) == x * scale  (parameter-only folding)
    scale = jnp.cos(theta) + jnp.sin(theta) * jnp.cos(phi)
    return scale.reshape(1, dim), unitary


def _tt_linear(key, in_f, out_f, rank=4):
    k1, k2, kb = jax.random.split(key, 3)
    g1 = jax.random.normal(k1, (1, out_f, rank), jnp.float32) * 0.1
    g2 = jax.random.normal(k2, (rank, in_f, 1), jnp.float32) * 0.1
    weight = jnp.einsum("aob,bie->oi", g1, g2)  # TensorTrain.to_tensor()
    bias = jax.random.normal(kb, (out_f,), jnp.float32) * 0.02
    return weight, bias


def make_mera_params(key, hidden_dims, num_levels, num_heads):
    level_params = []
    for lvl in range(num_levels):
        dim2 = 2 * hidden_dims[lvl]
        out_dim = hidden_dims[lvl + 1] if lvl < len(hidden_dims) - 1 else hidden_dims[-1]
        key, k1, k2, k3, k4, k5 = jax.random.split(key, 6)
        w1, b1 = _linear_init(k1, dim2, dim2)
        w2, b2 = _linear_init(k2, dim2, dim2)
        sd, ud = _gate_params(k3, dim2)
        w3, b3 = _linear_init(k4, dim2, out_dim)
        si, ui = _gate_params(k5, out_dim)
        level_params.append([
            w1.T, b1.reshape(1, -1), w2.T, b2.reshape(1, -1), sd, ud,
            w3.T, b3.reshape(1, -1), si, ui,
        ])
    dim = hidden_dims[-1]
    attn_params = []
    for _ in range(4):  # q, k, v, out projections (QuantumInspiredLinear, TT rank 4)
        key, kq = jax.random.split(key)
        w, b = _tt_linear(kq, dim, dim)
        attn_params.extend([w.T, b.reshape(1, -1)])
    return level_params, attn_params


# ---------------------------------------------------------------------------
# Pure-JAX reference (mirrors the PyTorch forward exactly, incl. the reference
# r-major head ordering), used to validate the kernel's permuted formulation.
# ---------------------------------------------------------------------------
def mera_reference(x, level_params, attn_params, hidden_dims, num_levels, num_heads):
    hi = jax.lax.Precision.HIGHEST
    batch = x.shape[0]
    cur = x.astype(jnp.float32)
    for lvl in range(num_levels):
        w1t, b1, w2t, b2, sd, ud, w3t, b3, si, ui = level_params[lvl]
        two_h = w1t.shape[0]
        cur = cur.reshape(batch, -1, two_h)
        y = jnp.maximum(jnp.dot(cur, w1t, precision=hi) + b1, 0.0)
        y = jnp.dot(y, w2t, precision=hi) + b2
        y = _gelu(jnp.dot(y * sd, ud, precision=hi))
        y = jnp.maximum(jnp.dot(y, w3t, precision=hi) + b3, 0.0)
        cur = _gelu(jnp.dot(y * si, ui, precision=hi))
    wq, bq, wk, bk, wv, bv, wo, bo = attn_params
    b_, seq, dim = cur.shape
    dh = dim // num_heads
    q = (jnp.dot(cur, wq, precision=hi) + bq).reshape(-1, dh)
    k = (jnp.dot(cur, wk, precision=hi) + bk).reshape(-1, dh)
    v = (jnp.dot(cur, wv, precision=hi) + bv).reshape(-1, dh)
    scores = jnp.dot(q, k.T, precision=hi) / math.sqrt(dh)
    probs = jax.nn.softmax(scores, axis=-1)
    attended = jnp.dot(probs, v, precision=hi).reshape(b_, seq, dim)
    return jnp.dot(attended, wo, precision=hi) + bo


if __name__ == "__main__":
    key = jax.random.PRNGKey(0)
    kx, kp = jax.random.split(key)

    batch, seq, width = 2, 8, 32          # per-sample input: 8 * 32 = 256 features
    hidden_dims = [16, 16]
    num_levels = 2
    num_heads = 4                          # QuantumInspiredAttention default

    x = jax.random.normal(kx, (batch, seq, width), jnp.float32)
    level_params, attn_params = make_mera_params(kp, hidden_dims, num_levels, num_heads)

    out = mera_forward(x, level_params, attn_params, hidden_dims, num_levels, num_heads)
    out = jax.block_until_ready(out)

    ref = mera_reference(x, level_params, attn_params, hidden_dims, num_levels, num_heads)
    ref = jax.block_until_ready(ref)

    assert out.shape == ref.shape == (batch, 4, hidden_dims[-1]), (out.shape, ref.shape)
    assert bool(jnp.isfinite(out).all())
    assert jnp.allclose(out, ref, rtol=1e-3, atol=1e-3), float(jnp.max(jnp.abs(out - ref)))
    print("KERNEL_OK")
</pallas_src>

<mosaic_0001>
module attributes {stable_mosaic.version = 11 : i64} {
  func.func @kernel(%arg0: memref<16x32xf32, #tpu.memory_space<vmem>>, %arg1: memref<32x32xf32, #tpu.memory_space<vmem>>, %arg2: memref<1x32xf32, #tpu.memory_space<vmem>>, %arg3: memref<32x32xf32, #tpu.memory_space<vmem>>, %arg4: memref<1x32xf32, #tpu.memory_space<vmem>>, %arg5: memref<1x32xf32, #tpu.memory_space<vmem>>, %arg6: memref<32x32xf32, #tpu.memory_space<vmem>>, %arg7: memref<32x16xf32, #tpu.memory_space<vmem>>, %arg8: memref<1x16xf32, #tpu.memory_space<vmem>>, %arg9: memref<1x16xf32, #tpu.memory_space<vmem>>, %arg10: memref<16x16xf32, #tpu.memory_space<vmem>>, %arg11: memref<32x32xf32, #tpu.memory_space<vmem>>, %arg12: memref<1x32xf32, #tpu.memory_space<vmem>>, %arg13: memref<32x32xf32, #tpu.memory_space<vmem>>, %arg14: memref<1x32xf32, #tpu.memory_space<vmem>>, %arg15: memref<1x32xf32, #tpu.memory_space<vmem>>, %arg16: memref<32x32xf32, #tpu.memory_space<vmem>>, %arg17: memref<32x16xf32, #tpu.memory_space<vmem>>, %arg18: memref<1x16xf32, #tpu.memory_space<vmem>>, %arg19: memref<1x16xf32, #tpu.memory_space<vmem>>, %arg20: memref<16x16xf32, #tpu.memory_space<vmem>>, %arg21: memref<16x16xf32, #tpu.memory_space<vmem>>, %arg22: memref<1x16xf32, #tpu.memory_space<vmem>>, %arg23: memref<16x16xf32, #tpu.memory_space<vmem>>, %arg24: memref<1x16xf32, #tpu.memory_space<vmem>>, %arg25: memref<16x16xf32, #tpu.memory_space<vmem>>, %arg26: memref<1x16xf32, #tpu.memory_space<vmem>>, %arg27: memref<16x16xf32, #tpu.memory_space<vmem>>, %arg28: memref<1x16xf32, #tpu.memory_space<vmem>>, %arg29: memref<8x16xf32, #tpu.memory_space<vmem>>, %arg30: memref<3x32x4xf32, #tpu.memory_space<vmem>>) attributes {dimension_semantics = [], scalar_prefetch = 0 : i64, scratch_operands = 1 : i64, tpu.core_type = #tpu.core_type<tc>} {
    %c0 = arith.constant 0 : index
    %c0_0 = arith.constant 0 : index
    %0 = vector.load %arg0[%c0, %c0_0] : memref<16x32xf32, #tpu.memory_space<vmem>>, vector<16x32xf32>
    %c0_1 = arith.constant 0 : index
    %c0_2 = arith.constant 0 : index
    %1 = vector.load %arg1[%c0_1, %c0_2] : memref<32x32xf32, #tpu.memory_space<vmem>>, vector<32x32xf32>
    %cst = arith.constant dense<0.000000e+00> : vector<16x32xf32>
    %2 = tpu.matmul %0, %1, %cst {dimension_numbers = #tpu.dot_dimension_numbers<[1], [0], [0], [1], [0, 0, 1, 1], [], []>} : vector<16x32xf32>, vector<32x32xf32>, vector<16x32xf32> -> vector<16x32xf32>
    %c0_3 = arith.constant 0 : index
    %c0_4 = arith.constant 0 : index
    %3 = vector.load %arg2[%c0_3, %c0_4] : memref<1x32xf32, #tpu.memory_space<vmem>>, vector<1x32xf32>
    %4 = vector.broadcast %3 : vector<1x32xf32> to vector<16x32xf32>
    %5 = arith.addf %2, %4 : vector<16x32xf32>
    %cst_5 = arith.constant 0.000000e+00 : f32
    %6 = vector.broadcast %cst_5 : f32 to vector<16x32xf32>
    %7 = arith.maximumf %5, %6 : vector<16x32xf32>
    %c0_6 = arith.constant 0 : index
    %c0_7 = arith.constant 0 : index
    %8 = vector.load %arg3[%c0_6, %c0_7] : memref<32x32xf32, #tpu.memory_space<vmem>>, vector<32x32xf32>
    %cst_8 = arith.constant dense<0.000000e+00> : vector<16x32xf32>
    %9 = tpu.matmul %7, %8, %cst_8 {dimension_numbers = #tpu.dot_dimension_numbers<[1], [0], [0], [1], [0, 0, 1, 1], [], []>} : vector<16x32xf32>, vector<32x32xf32>, vector<16x32xf32> -> vector<16x32xf32>
    %c0_9 = arith.constant 0 : index
    %c0_10 = arith.constant 0 : index
    %10 = vector.load %arg4[%c0_9, %c0_10] : memref<1x32xf32, #tpu.memory_space<vmem>>, vector<1x32xf32>
    %11 = vector.broadcast %10 : vector<1x32xf32> to vector<16x32xf32>
    %12 = arith.addf %9, %11 : vector<16x32xf32>
    %c0_11 = arith.constant 0 : index
    %c0_12 = arith.constant 0 : index
    %13 = vector.load %arg5[%c0_11, %c0_12] : memref<1x32xf32, #tpu.memory_space<vmem>>, vector<1x32xf32>
    %14 = vector.broadcast %13 : vector<1x32xf32> to vector<16x32xf32>
    %15 = arith.mulf %12, %14 : vector<16x32xf32>
    %c0_13 = arith.constant 0 : index
    %c0_14 = arith.constant 0 : index
    %16 = vector.load %arg6[%c0_13, %c0_14] : memref<32x32xf32, #tpu.memory_space<vmem>>, vector<32x32xf32>
    %cst_15 = arith.constant dense<0.000000e+00> : vector<16x32xf32>
    %17 = tpu.matmul %15, %16, %cst_15 {dimension_numbers = #tpu.dot_dimension_numbers<[1], [0], [0], [1], [0, 0, 1, 1], [], []>} : vector<16x32xf32>, vector<32x32xf32>, vector<16x32xf32> -> vector<16x32xf32>
    %cst_16 = arith.constant 5.000000e-01 : f32
    %18 = vector.broadcast %cst_16 : f32 to vector<16x32xf32>
    %19 = arith.mulf %18, %17 : vector<16x32xf32>
    %cst_17 = arith.constant 0.707106769 : f32
    %20 = vector.broadcast %cst_17 : f32 to vector<16x32xf32>
    %21 = arith.mulf %17, %20 : vector<16x32xf32>
    %cst_18 = arith.constant 0.000000e+00 : f32
    %22 = vector.broadcast %cst_18 : f32 to vector<16x32xf32>
    %23 = arith.cmpf oge, %21, %22 : vector<16x32xf32>
    %cst_19 = arith.constant 1.000000e+00 : f32
    %cst_20 = arith.constant -1.000000e+00 : f32
    %24 = vector.broadcast %cst_19 : f32 to vector<16x32xf32>
    %25 = vector.broadcast %cst_20 : f32 to vector<16x32xf32>
    %26 = arith.select %23, %24, %25 : vector<16x32xi1>, vector<16x32xf32>
    %27 = math.absf %21 : vector<16x32xf32>
    %cst_21 = arith.constant 0.327591091 : f32
    %28 = vector.broadcast %cst_21 : f32 to vector<16x32xf32>
    %29 = arith.mulf %28, %27 : vector<16x32xf32>
    %cst_22 = arith.constant 1.000000e+00 : f32
    %30 = vector.broadcast %cst_22 : f32 to vector<16x32xf32>
    %31 = arith.addf %30, %29 : vector<16x32xf32>
    %cst_23 = arith.constant 1.000000e+00 : f32
    %32 = vector.broadcast %cst_23 : f32 to vector<16x32xf32>
    %33 = arith.divf %32, %31 : vector<16x32xf32>
    %cst_24 = arith.constant 1.06140542 : f32
    %34 = vector.broadcast %cst_24 : f32 to vector<16x32xf32>
    %35 = arith.mulf %34, %33 : vector<16x32xf32>
    %cst_25 = arith.constant -1.45315206 : f32
    %36 = vector.broadcast %cst_25 : f32 to vector<16x32xf32>
    %37 = arith.addf %35, %36 : vector<16x32xf32>
    %38 = arith.mulf %37, %33 : vector<16x32xf32>
    %cst_26 = arith.constant 1.42141378 : f32
    %39 = vector.broadcast %cst_26 : f32 to vector<16x32xf32>
    %40 = arith.addf %38, %39 : vector<16x32xf32>
    %41 = arith.mulf %40, %33 : vector<16x32xf32>
    %cst_27 = arith.constant -0.284496725 : f32
    %42 = vector.broadcast %cst_27 : f32 to vector<16x32xf32>
    %43 = arith.addf %41, %42 : vector<16x32xf32>
    %44 = arith.mulf %43, %33 : vector<16x32xf32>
    %cst_28 = arith.constant 0.254829586 : f32
    %45 = vector.broadcast %cst_28 : f32 to vector<16x32xf32>
    %46 = arith.addf %44, %45 : vector<16x32xf32>
    %47 = arith.mulf %46, %33 : vector<16x32xf32>
    %cst_29 = arith.constant 0.000000e+00 : f32
    %48 = vector.broadcast %cst_29 : f32 to vector<16x32xf32>
    %49 = arith.subf %48, %27 : vector<16x32xf32>
    %50 = arith.mulf %49, %27 : vector<16x32xf32>
    %51 = math.exp %50 : vector<16x32xf32>
    %52 = arith.mulf %47, %51 : vector<16x32xf32>
    %cst_30 = arith.constant 1.000000e+00 : f32
    %53 = vector.broadcast %cst_30 : f32 to vector<16x32xf32>
    %54 = arith.subf %53, %52 : vector<16x32xf32>
    %55 = arith.mulf %26, %54 : vector<16x32xf32>
    %cst_31 = arith.constant 1.000000e+00 : f32
    %56 = vector.broadcast %cst_31 : f32 to vector<16x32xf32>
    %57 = arith.addf %56, %55 : vector<16x32xf32>
    %58 = arith.mulf %19, %57 : vector<16x32xf32>
    %c0_32 = arith.constant 0 : index
    %c0_33 = arith.constant 0 : index
    %59 = vector.load %arg7[%c0_32, %c0_33] : memref<32x16xf32, #tpu.memory_space<vmem>>, vector<32x16xf32>
    %cst_34 = arith.constant dense<0.000000e+00> : vector<16x16xf32>
    %60 = tpu.matmul %58, %59, %cst_34 {dimension_numbers = #tpu.dot_dimension_numbers<[1], [0], [0], [1], [0, 0, 1, 1], [], []>} : vector<16x32xf32>, vector<32x16xf32>, vector<16x16xf32> -> vector<16x16xf32>
    %c0_35 = arith.constant 0 : index
    %c0_36 = arith.constant 0 : index
    %61 = vector.load %arg8[%c0_35, %c0_36] : memref<1x16xf32, #tpu.memory_space<vmem>>, vector<1x16xf32>
    %62 = vector.broadcast %61 : vector<1x16xf32> to vector<16x16xf32>
    %63 = arith.addf %60, %62 : vector<16x16xf32>
    %cst_37 = arith.constant 0.000000e+00 : f32
    %64 = vector.broadcast %cst_37 : f32 to vector<16x16xf32>
    %65 = arith.maximumf %63, %64 : vector<16x16xf32>
    %c0_38 = arith.constant 0 : index
    %c0_39 = arith.constant 0 : index
    %66 = vector.load %arg9[%c0_38, %c0_39] : memref<1x16xf32, #tpu.memory_space<vmem>>, vector<1x16xf32>
    %67 = vector.broadcast %66 : vector<1x16xf32> to vector<16x16xf32>
    %68 = arith.mulf %65, %67 : vector<16x16xf32>
    %c0_40 = arith.constant 0 : index
    %c0_41 = arith.constant 0 : index
    %69 = vector.load %arg10[%c0_40, %c0_41] : memref<16x16xf32, #tpu.memory_space<vmem>>, vector<16x16xf32>
    %cst_42 = arith.constant dense<0.000000e+00> : vector<16x16xf32>
    %70 = tpu.matmul %68, %69, %cst_42 {dimension_numbers = #tpu.dot_dimension_numbers<[1], [0], [0], [1], [0, 0, 1, 1], [], []>} : vector<16x16xf32>, vector<16x16xf32>, vector<16x16xf32> -> vector<16x16xf32>
    %cst_43 = arith.constant 5.000000e-01 : f32
    %71 = vector.broadcast %cst_43 : f32 to vector<16x16xf32>
    %72 = arith.mulf %71, %70 : vector<16x16xf32>
    %cst_44 = arith.constant 0.707106769 : f32
    %73 = vector.broadcast %cst_44 : f32 to vector<16x16xf32>
    %74 = arith.mulf %70, %73 : vector<16x16xf32>
    %cst_45 = arith.constant 0.000000e+00 : f32
    %75 = vector.broadcast %cst_45 : f32 to vector<16x16xf32>
    %76 = arith.cmpf oge, %74, %75 : vector<16x16xf32>
    %cst_46 = arith.constant 1.000000e+00 : f32
    %cst_47 = arith.constant -1.000000e+00 : f32
    %77 = vector.broadcast %cst_46 : f32 to vector<16x16xf32>
    %78 = vector.broadcast %cst_47 : f32 to vector<16x16xf32>
    %79 = arith.select %76, %77, %78 : vector<16x16xi1>, vector<16x16xf32>
    %80 = math.absf %74 : vector<16x16xf32>
    %cst_48 = arith.constant 0.327591091 : f32
    %81 = vector.broadcast %cst_48 : f32 to vector<16x16xf32>
    %82 = arith.mulf %81, %80 : vector<16x16xf32>
    %cst_49 = arith.constant 1.000000e+00 : f32
    %83 = vector.broadcast %cst_49 : f32 to vector<16x16xf32>
    %84 = arith.addf %83, %82 : vector<16x16xf32>
    %cst_50 = arith.constant 1.000000e+00 : f32
    %85 = vector.broadcast %cst_50 : f32 to vector<16x16xf32>
    %86 = arith.divf %85, %84 : vector<16x16xf32>
    %cst_51 = arith.constant 1.06140542 : f32
    %87 = vector.broadcast %cst_51 : f32 to vector<16x16xf32>
    %88 = arith.mulf %87, %86 : vector<16x16xf32>
    %cst_52 = arith.constant -1.45315206 : f32
    %89 = vector.broadcast %cst_52 : f32 to vector<16x16xf32>
    %90 = arith.addf %88, %89 : vector<16x16xf32>
    %91 = arith.mulf %90, %86 : vector<16x16xf32>
    %cst_53 = arith.constant 1.42141378 : f32
    %92 = vector.broadcast %cst_53 : f32 to vector<16x16xf32>
    %93 = arith.addf %91, %92 : vector<16x16xf32>
    %94 = arith.mulf %93, %86 : vector<16x16xf32>
    %cst_54 = arith.constant -0.284496725 : f32
    %95 = vector.broadcast %cst_54 : f32 to vector<16x16xf32>
    %96 = arith.addf %94, %95 : vector<16x16xf32>
    %97 = arith.mulf %96, %86 : vector<16x16xf32>
    %cst_55 = arith.constant 0.254829586 : f32
    %98 = vector.broadcast %cst_55 : f32 to vector<16x16xf32>
    %99 = arith.addf %97, %98 : vector<16x16xf32>
    %100 = arith.mulf %99, %86 : vector<16x16xf32>
    %cst_56 = arith.constant 0.000000e+00 : f32
    %101 = vector.broadcast %cst_56 : f32 to vector<16x16xf32>
    %102 = arith.subf %101, %80 : vector<16x16xf32>
    %103 = arith.mulf %102, %80 : vector<16x16xf32>
    %104 = math.exp %103 : vector<16x16xf32>
    %105 = arith.mulf %100, %104 : vector<16x16xf32>
    %cst_57 = arith.constant 1.000000e+00 : f32
    %106 = vector.broadcast %cst_57 : f32 to vector<16x16xf32>
    %107 = arith.subf %106, %105 : vector<16x16xf32>
    %108 = arith.mulf %79, %107 : vector<16x16xf32>
    %cst_58 = arith.constant 1.000000e+00 : f32
    %109 = vector.broadcast %cst_58 : f32 to vector<16x16xf32>
    %110 = arith.addf %109, %108 : vector<16x16xf32>
    %111 = arith.mulf %72, %110 : vector<16x16xf32>
    %112 = tpu.iota {dimensions = array<i32: 0>} : vector<8x16xi32>
    %113 = tpu.iota {dimensions = array<i32: 1>} : vector<8x16xi32>
    %cst_59 = arith.constant 0.000000e+00 : f32
    %114 = vector.broadcast %cst_59 : f32 to vector<8x32xf32>
    %c2_i32 = arith.constant 2 : i32
    %115 = vector.broadcast %c2_i32 : i32 to vector<8x16xi32>
    %116 = arith.muli %115, %112 : vector<8x16xi32>
    %c0_i32 = arith.constant 0 : i32
    %117 = vector.broadcast %c0_i32 : i32 to vector<8x16xi32>
    %118 = arith.addi %116, %117 : vector<8x16xi32>
    %119 = arith.cmpi eq, %113, %118 : vector<8x16xi32>
    %cst_60 = arith.constant 1.000000e+00 : f32
    %cst_61 = arith.constant 0.000000e+00 : f32
    %120 = vector.broadcast %cst_60 : f32 to vector<8x16xf32>
    %121 = vector.broadcast %cst_61 : f32 to vector<8x16xf32>
    %122 = arith.select %119, %120, %121 : vector<8x16xi1>, vector<8x16xf32>
    %cst_62 = arith.constant dense<0.000000e+00> : vector<8x16xf32>
    %123 = tpu.matmul %122, %111, %cst_62 {dimension_numbers = #tpu.dot_dimension_numbers<[1], [0], [0], [1], [0, 0, 1, 1], [], []>} : vector<8x16xf32>, vector<16x16xf32>, vector<8x16xf32> -> vector<8x16xf32>
    %c0_63 = arith.constant 0 : index
    %c0_64 = arith.constant 0 : index
    %124 = vector.load %arg11[%c0_63, %c0_64] : memref<32x32xf32, #tpu.memory_space<vmem>>, vector<16x32xf32>
    %cst_65 = arith.constant dense<0.000000e+00> : vector<8x32xf32>
    %125 = tpu.matmul %123, %124, %cst_65 {dimension_numbers = #tpu.dot_dimension_numbers<[1], [0], [0], [1], [0, 0, 1, 1], [], []>} : vector<8x16xf32>, vector<16x32xf32>, vector<8x32xf32> -> vector<8x32xf32>
    %126 = arith.addf %114, %125 : vector<8x32xf32>
    %c2_i32_66 = arith.constant 2 : i32
    %127 = vector.broadcast %c2_i32_66 : i32 to vector<8x16xi32>
    %128 = arith.muli %127, %112 : vector<8x16xi32>
    %c1_i32 = arith.constant 1 : i32
    %129 = vector.broadcast %c1_i32 : i32 to vector<8x16xi32>
    %130 = arith.addi %128, %129 : vector<8x16xi32>
    %131 = arith.cmpi eq, %113, %130 : vector<8x16xi32>
    %cst_67 = arith.constant 1.000000e+00 : f32
    %cst_68 = arith.constant 0.000000e+00 : f32
    %132 = vector.broadcast %cst_67 : f32 to vector<8x16xf32>
    %133 = vector.broadcast %cst_68 : f32 to vector<8x16xf32>
    %134 = arith.select %131, %132, %133 : vector<8x16xi1>, vector<8x16xf32>
    %cst_69 = arith.constant dense<0.000000e+00> : vector<8x16xf32>
    %135 = tpu.matmul %134, %111, %cst_69 {dimension_numbers = #tpu.dot_dimension_numbers<[1], [0], [0], [1], [0, 0, 1, 1], [], []>} : vector<8x16xf32>, vector<16x16xf32>, vector<8x16xf32> -> vector<8x16xf32>
    %c16 = arith.constant 16 : index
    %c0_70 = arith.constant 0 : index
    %136 = vector.load %arg11[%c16, %c0_70] : memref<32x32xf32, #tpu.memory_space<vmem>>, vector<16x32xf32>
    %cst_71 = arith.constant dense<0.000000e+00> : vector<8x32xf32>
    %137 = tpu.matmul %135, %136, %cst_71 {dimension_numbers = #tpu.dot_dimension_numbers<[1], [0], [0], [1], [0, 0, 1, 1], [], []>} : vector<8x16xf32>, vector<16x32xf32>, vector<8x32xf32> -> vector<8x32xf32>
    %138 = arith.addf %126, %137 : vector<8x32xf32>
    %c0_72 = arith.constant 0 : index
    %c0_73 = arith.constant 0 : index
    %139 = vector.load %arg12[%c0_72, %c0_73] : memref<1x32xf32, #tpu.memory_space<vmem>>, vector<1x32xf32>
    %140 = vector.broadcast %139 : vector<1x32xf32> to vector<8x32xf32>
    %141 = arith.addf %138, %140 : vector<8x32xf32>
    %cst_74 = arith.constant 0.000000e+00 : f32
    %142 = vector.broadcast %cst_74 : f32 to vector<8x32xf32>
    %143 = arith.maximumf %141, %142 : vector<8x32xf32>
    %c0_75 = arith.constant 0 : index
    %c0_76 = arith.constant 0 : index
    %144 = vector.load %arg13[%c0_75, %c0_76] : memref<32x32xf32, #tpu.memory_space<vmem>>, vector<32x32xf32>
    %cst_77 = arith.constant dense<0.000000e+00> : vector<8x32xf32>
    %145 = tpu.matmul %143, %144, %cst_77 {dimension_numbers = #tpu.dot_dimension_numbers<[1], [0], [0], [1], [0, 0, 1, 1], [], []>} : vector<8x32xf32>, vector<32x32xf32>, vector<8x32xf32> -> vector<8x32xf32>
    %c0_78 = arith.constant 0 : index
    %c0_79 = arith.constant 0 : index
    %146 = vector.load %arg14[%c0_78, %c0_79] : memref<1x32xf32, #tpu.memory_space<vmem>>, vector<1x32xf32>
    %147 = vector.broadcast %146 : vector<1x32xf32> to vector<8x32xf32>
    %148 = arith.addf %145, %147 : vector<8x32xf32>
    %c0_80 = arith.constant 0 : index
    %c0_81 = arith.constant 0 : index
    %149 = vector.load %arg15[%c0_80, %c0_81] : memref<1x32xf32, #tpu.memory_space<vmem>>, vector<1x32xf32>
    %150 = vector.broadcast %149 : vector<1x32xf32> to vector<8x32xf32>
    %151 = arith.mulf %148, %150 : vector<8x32xf32>
    %c0_82 = arith.constant 0 : index
    %c0_83 = arith.constant 0 : index
    %152 = vector.load %arg16[%c0_82, %c0_83] : memref<32x32xf32, #tpu.memory_space<vmem>>, vector<32x32xf32>
    %cst_84 = arith.constant dense<0.000000e+00> : vector<8x32xf32>
    %153 = tpu.matmul %151, %152, %cst_84 {dimension_numbers = #tpu.dot_dimension_numbers<[1], [0], [0], [1], [0, 0, 1, 1], [], []>} : vector<8x32xf32>, vector<32x32xf32>, vector<8x32xf32> -> vector<8x32xf32>
    %cst_85 = arith.constant 5.000000e-01 : f32
    %154 = vector.broadcast %cst_85 : f32 to vector<8x32xf32>
    %155 = arith.mulf %154, %153 : vector<8x32xf32>
    %cst_86 = arith.constant 0.707106769 : f32
    %156 = vector.broadcast %cst_86 : f32 to vector<8x32xf32>
    %157 = arith.mulf %153, %156 : vector<8x32xf32>
    %cst_87 = arith.constant 0.000000e+00 : f32
    %158 = vector.broadcast %cst_87 : f32 to vector<8x32xf32>
    %159 = arith.cmpf oge, %157, %158 : vector<8x32xf32>
    %cst_88 = arith.constant 1.000000e+00 : f32
    %cst_89 = arith.constant -1.000000e+00 : f32
    %160 = vector.broadcast %cst_88 : f32 to vector<8x32xf32>
    %161 = vector.broadcast %cst_89 : f32 to vector<8x32xf32>
    %162 = arith.select %159, %160, %161 : vector<8x32xi1>, vector<8x32xf32>
    %163 = math.absf %157 : vector<8x32xf32>
    %cst_90 = arith.constant 0.327591091 : f32
    %164 = vector.broadcast %cst_90 : f32 to vector<8x32xf32>
    %165 = arith.mulf %164, %163 : vector<8x32xf32>
    %cst_91 = arith.constant 1.000000e+00 : f32
    %166 = vector.broadcast %cst_91 : f32 to vector<8x32xf32>
    %167 = arith.addf %166, %165 : vector<8x32xf32>
    %cst_92 = arith.constant 1.000000e+00 : f32
    %168 = vector.broadcast %cst_92 : f32 to vector<8x32xf32>
    %169 = arith.divf %168, %167 : vector<8x32xf32>
    %cst_93 = arith.constant 1.06140542 : f32
    %170 = vector.broadcast %cst_93 : f32 to vector<8x32xf32>
    %171 = arith.mulf %170, %169 : vector<8x32xf32>
    %cst_94 = arith.constant -1.45315206 : f32
    %172 = vector.broadcast %cst_94 : f32 to vector<8x32xf32>
    %173 = arith.addf %171, %172 : vector<8x32xf32>
    %174 = arith.mulf %173, %169 : vector<8x32xf32>
    %cst_95 = arith.constant 1.42141378 : f32
    %175 = vector.broadcast %cst_95 : f32 to vector<8x32xf32>
    %176 = arith.addf %174, %175 : vector<8x32xf32>
    %177 = arith.mulf %176, %169 : vector<8x32xf32>
    %cst_96 = arith.constant -0.284496725 : f32
    %178 = vector.broadcast %cst_96 : f32 to vector<8x32xf32>
    %179 = arith.addf %177, %178 : vector<8x32xf32>
    %180 = arith.mulf %179, %169 : vector<8x32xf32>
    %cst_97 = arith.constant 0.254829586 : f32
    %181 = vector.broadcast %cst_97 : f32 to vector<8x32xf32>
    %182 = arith.addf %180, %181 : vector<8x32xf32>
    %183 = arith.mulf %182, %169 : vector<8x32xf32>
    %cst_98 = arith.constant 0.000000e+00 : f32
    %184 = vector.broadcast %cst_98 : f32 to vector<8x32xf32>
    %185 = arith.subf %184, %163 : vector<8x32xf32>
    %186 = arith.mulf %185, %163 : vector<8x32xf32>
    %187 = math.exp %186 : vector<8x32xf32>
    %188 = arith.mulf %183, %187 : vector<8x32xf32>
    %cst_99 = arith.constant 1.000000e+00 : f32
    %189 = vector.broadcast %cst_99 : f32 to vector<8x32xf32>
    %190 = arith.subf %189, %188 : vector<8x32xf32>
    %191 = arith.mulf %162, %190 : vector<8x32xf32>
    %cst_100 = arith.constant 1.000000e+00 : f32
    %192 = vector.broadcast %cst_100 : f32 to vector<8x32xf32>
    %193 = arith.addf %192, %191 : vector<8x32xf32>
    %194 = arith.mulf %155, %193 : vector<8x32xf32>
    %c0_101 = arith.constant 0 : index
    %c0_102 = arith.constant 0 : index
    %195 = vector.load %arg17[%c0_101, %c0_102] : memref<32x16xf32, #tpu.memory_space<vmem>>, vector<32x16xf32>
    %cst_103 = arith.constant dense<0.000000e+00> : vector<8x16xf32>
    %196 = tpu.matmul %194, %195, %cst_103 {dimension_numbers = #tpu.dot_dimension_numbers<[1], [0], [0], [1], [0, 0, 1, 1], [], []>} : vector<8x32xf32>, vector<32x16xf32>, vector<8x16xf32> -> vector<8x16xf32>
    %c0_104 = arith.constant 0 : index
    %c0_105 = arith.constant 0 : index
    %197 = vector.load %arg18[%c0_104, %c0_105] : memref<1x16xf32, #tpu.memory_space<vmem>>, vector<1x16xf32>
    %198 = vector.broadcast %197 : vector<1x16xf32> to vector<8x16xf32>
    %199 = arith.addf %196, %198 : vector<8x16xf32>
    %cst_106 = arith.constant 0.000000e+00 : f32
    %200 = vector.broadcast %cst_106 : f32 to vector<8x16xf32>
    %201 = arith.maximumf %199, %200 : vector<8x16xf32>
    %c0_107 = arith.constant 0 : index
    %c0_108 = arith.constant 0 : index
    %202 = vector.load %arg19[%c0_107, %c0_108] : memref<1x16xf32, #tpu.memory_space<vmem>>, vector<1x16xf32>
    %203 = vector.broadcast %202 : vector<1x16xf32> to vector<8x16xf32>
    %204 = arith.mulf %201, %203 : vector<8x16xf32>
    %c0_109 = arith.constant 0 : index
    %c0_110 = arith.constant 0 : index
    %205 = vector.load %arg20[%c0_109, %c0_110] : memref<16x16xf32, #tpu.memory_space<vmem>>, vector<16x16xf32>
    %cst_111 = arith.constant dense<0.000000e+00> : vector<8x16xf32>
    %206 = tpu.matmul %204, %205, %cst_111 {dimension_numbers = #tpu.dot_dimension_numbers<[1], [0], [0], [1], [0, 0, 1, 1], [], []>} : vector<8x16xf32>, vector<16x16xf32>, vector<8x16xf32> -> vector<8x16xf32>
    %cst_112 = arith.constant 5.000000e-01 : f32
    %207 = vector.broadcast %cst_112 : f32 to vector<8x16xf32>
    %208 = arith.mulf %207, %206 : vector<8x16xf32>
    %cst_113 = arith.constant 0.707106769 : f32
    %209 = vector.broadcast %cst_113 : f32 to vector<8x16xf32>
    %210 = arith.mulf %206, %209 : vector<8x16xf32>
    %cst_114 = arith.constant 0.000000e+00 : f32
    %211 = vector.broadcast %cst_114 : f32 to vector<8x16xf32>
    %212 = arith.cmpf oge, %210, %211 : vector<8x16xf32>
    %cst_115 = arith.constant 1.000000e+00 : f32
    %cst_116 = arith.constant -1.000000e+00 : f32
    %213 = vector.broadcast %cst_115 : f32 to vector<8x16xf32>
    %214 = vector.broadcast %cst_116 : f32 to vector<8x16xf32>
    %215 = arith.select %212, %213, %214 : vector<8x16xi1>, vector<8x16xf32>
    %216 = math.absf %210 : vector<8x16xf32>
    %cst_117 = arith.constant 0.327591091 : f32
    %217 = vector.broadcast %cst_117 : f32 to vector<8x16xf32>
    %218 = arith.mulf %217, %216 : vector<8x16xf32>
    %cst_118 = arith.constant 1.000000e+00 : f32
    %219 = vector.broadcast %cst_118 : f32 to vector<8x16xf32>
    %220 = arith.addf %219, %218 : vector<8x16xf32>
    %cst_119 = arith.constant 1.000000e+00 : f32
    %221 = vector.broadcast %cst_119 : f32 to vector<8x16xf32>
    %222 = arith.divf %221, %220 : vector<8x16xf32>
    %cst_120 = arith.constant 1.06140542 : f32
    %223 = vector.broadcast %cst_120 : f32 to vector<8x16xf32>
    %224 = arith.mulf %223, %222 : vector<8x16xf32>
    %cst_121 = arith.constant -1.45315206 : f32
    %225 = vector.broadcast %cst_121 : f32 to vector<8x16xf32>
    %226 = arith.addf %224, %225 : vector<8x16xf32>
    %227 = arith.mulf %226, %222 : vector<8x16xf32>
    %cst_122 = arith.constant 1.42141378 : f32
    %228 = vector.broadcast %cst_122 : f32 to vector<8x16xf32>
    %229 = arith.addf %227, %228 : vector<8x16xf32>
    %230 = arith.mulf %229, %222 : vector<8x16xf32>
    %cst_123 = arith.constant -0.284496725 : f32
    %231 = vector.broadcast %cst_123 : f32 to vector<8x16xf32>
    %232 = arith.addf %230, %231 : vector<8x16xf32>
    %233 = arith.mulf %232, %222 : vector<8x16xf32>
    %cst_124 = arith.constant 0.254829586 : f32
    %234 = vector.broadcast %cst_124 : f32 to vector<8x16xf32>
    %235 = arith.addf %233, %234 : vector<8x16xf32>
    %236 = arith.mulf %235, %222 : vector<8x16xf32>
    %cst_125 = arith.constant 0.000000e+00 : f32
    %237 = vector.broadcast %cst_125 : f32 to vector<8x16xf32>
    %238 = arith.subf %237, %216 : vector<8x16xf32>
    %239 = arith.mulf %238, %216 : vector<8x16xf32>
    %240 = math.exp %239 : vector<8x16xf32>
    %241 = arith.mulf %236, %240 : vector<8x16xf32>
    %cst_126 = arith.constant 1.000000e+00 : f32
    %242 = vector.broadcast %cst_126 : f32 to vector<8x16xf32>
    %243 = arith.subf %242, %241 : vector<8x16xf32>
    %244 = arith.mulf %215, %243 : vector<8x16xf32>
    %cst_127 = arith.constant 1.000000e+00 : f32
    %245 = vector.broadcast %cst_127 : f32 to vector<8x16xf32>
    %246 = arith.addf %245, %244 : vector<8x16xf32>
    %247 = arith.mulf %208, %246 : vector<8x16xf32>
    %c0_128 = arith.constant 0 : index
    %c0_129 = arith.constant 0 : index
    %248 = vector.load %arg21[%c0_128, %c0_129] : memref<16x16xf32, #tpu.memory_space<vmem>>, vector<16x16xf32>
    %cst_130 = arith.constant dense<0.000000e+00> : vector<8x16xf32>
    %249 = tpu.matmul %247, %248, %cst_130 {dimension_numbers = #tpu.dot_dimension_numbers<[1], [0], [0], [1], [0, 0, 1, 1], [], []>} : vector<8x16xf32>, vector<16x16xf32>, vector<8x16xf32> -> vector<8x16xf32>
    %c0_131 = arith.constant 0 : index
    %c0_132 = arith.constant 0 : index
    %250 = vector.load %arg22[%c0_131, %c0_132] : memref<1x16xf32, #tpu.memory_space<vmem>>, vector<1x16xf32>
    %251 = vector.broadcast %250 : vector<1x16xf32> to vector<8x16xf32>
    %252 = arith.addf %249, %251 : vector<8x16xf32>
    %c0_133 = arith.constant 0 : index
    %c0_134 = arith.constant 0 : index
    %253 = vector.load %arg23[%c0_133, %c0_134] : memref<16x16xf32, #tpu.memory_space<vmem>>, vector<16x16xf32>
    %cst_135 = arith.constant dense<0.000000e+00> : vector<8x16xf32>
    %254 = tpu.matmul %247, %253, %cst_135 {dimension_numbers = #tpu.dot_dimension_numbers<[1], [0], [0], [1], [0, 0, 1, 1], [], []>} : vector<8x16xf32>, vector<16x16xf32>, vector<8x16xf32> -> vector<8x16xf32>
    %c0_136 = arith.constant 0 : index
    %c0_137 = arith.constant 0 : index
    %255 = vector.load %arg24[%c0_136, %c0_137] : memref<1x16xf32, #tpu.memory_space<vmem>>, vector<1x16xf32>
    %256 = vector.broadcast %255 : vector<1x16xf32> to vector<8x16xf32>
    %257 = arith.addf %254, %256 : vector<8x16xf32>
    %c0_138 = arith.constant 0 : index
    %c0_139 = arith.constant 0 : index
    %258 = vector.load %arg25[%c0_138, %c0_139] : memref<16x16xf32, #tpu.memory_space<vmem>>, vector<16x16xf32>
    %cst_140 = arith.constant dense<0.000000e+00> : vector<8x16xf32>
    %259 = tpu.matmul %247, %258, %cst_140 {dimension_numbers = #tpu.dot_dimension_numbers<[1], [0], [0], [1], [0, 0, 1, 1], [], []>} : vector<8x16xf32>, vector<16x16xf32>, vector<8x16xf32> -> vector<8x16xf32>
    %c0_141 = arith.constant 0 : index
    %c0_142 = arith.constant 0 : index
    %260 = vector.load %arg26[%c0_141, %c0_142] : memref<1x16xf32, #tpu.memory_space<vmem>>, vector<1x16xf32>
    %261 = vector.broadcast %260 : vector<1x16xf32> to vector<8x16xf32>
    %262 = arith.addf %259, %261 : vector<8x16xf32>
    %263 = tpu.iota {dimensions = array<i32: 0>} : vector<16x4xi32>
    %264 = tpu.iota {dimensions = array<i32: 1>} : vector<16x4xi32>
    %c0_i32_143 = arith.constant 0 : i32
    %265 = vector.broadcast %c0_i32_143 : i32 to vector<16x4xi32>
    %266 = arith.addi %265, %264 : vector<16x4xi32>
    %267 = arith.cmpi eq, %263, %266 : vector<16x4xi32>
    %cst_144 = arith.constant 1.000000e+00 : f32
    %cst_145 = arith.constant 0.000000e+00 : f32
    %268 = vector.broadcast %cst_144 : f32 to vector<16x4xf32>
    %269 = vector.broadcast %cst_145 : f32 to vector<16x4xf32>
    %270 = arith.select %267, %268, %269 : vector<16x4xi1>, vector<16x4xf32>
    %cst_146 = arith.constant dense<0.000000e+00> : vector<8x4xf32>
    %271 = tpu.matmul %252, %270, %cst_146 {dimension_numbers = #tpu.dot_dimension_numbers<[1], [0], [0], [1], [0, 0, 1, 1], [], []>} : vector<8x16xf32>, vector<16x4xf32>, vector<8x4xf32> -> vector<8x4xf32>
    %c0_147 = arith.constant 0 : index
    %c0_148 = arith.constant 0 : index
    %c0_149 = arith.constant 0 : index
    %272 = vector.load %arg30[%c0_147, %c0_148, %c0_149] : memref<3x32x4xf32, #tpu.memory_space<vmem>>, vector<1x8x4xf32>
    %273 = vector.shape_cast %272 : vector<1x8x4xf32> to vector<8x4xf32>
    %274 = vector.shape_cast %271 : vector<8x4xf32> to vector<1x8x4xf32>
    tpu.vector_store %arg30[%c0_147, %c0_148, %c0_149], %274 {strides = array<i32>} : memref<3x32x4xf32, #tpu.memory_space<vmem>>, vector<1x8x4xf32>,
    %cst_150 = arith.constant dense<0.000000e+00> : vector<8x4xf32>
    %275 = tpu.matmul %257, %270, %cst_150 {dimension_numbers = #tpu.dot_dimension_numbers<[1], [0], [0], [1], [0, 0, 1, 1], [], []>} : vector<8x16xf32>, vector<16x4xf32>, vector<8x4xf32> -> vector<8x4xf32>
    %c1 = arith.constant 1 : index
    %c0_151 = arith.constant 0 : index
    %c0_152 = arith.constant 0 : index
    %276 = vector.load %arg30[%c1, %c0_151, %c0_152] : memref<3x32x4xf32, #tpu.memory_space<vmem>>, vector<1x8x4xf32>
    %277 = vector.shape_cast %276 : vector<1x8x4xf32> to vector<8x4xf32>
    %278 = vector.shape_cast %275 : vector<8x4xf32> to vector<1x8x4xf32>
    tpu.vector_store %arg30[%c1, %c0_151, %c0_152], %278 {strides = array<i32>} : memref<3x32x4xf32, #tpu.memory_space<vmem>>, vector<1x8x4xf32>,
    %cst_153 = arith.constant dense<0.000000e+00> : vector<8x4xf32>
    %279 = tpu.matmul %262, %270, %cst_153 {dimension_numbers = #tpu.dot_dimension_numbers<[1], [0], [0], [1], [0, 0, 1, 1], [], []>} : vector<8x16xf32>, vector<16x4xf32>, vector<8x4xf32> -> vector<8x4xf32>
    %c2 = arith.constant 2 : index
    %c0_154 = arith.constant 0 : index
    %c0_155 = arith.constant 0 : index
    %280 = vector.load %arg30[%c2, %c0_154, %c0_155] : memref<3x32x4xf32, #tpu.memory_space<vmem>>, vector<1x8x4xf32>
    %281 = vector.shape_cast %280 : vector<1x8x4xf32> to vector<8x4xf32>
    %282 = vector.shape_cast %279 : vector<8x4xf32> to vector<1x8x4xf32>
    tpu.vector_store %arg30[%c2, %c0_154, %c0_155], %282 {strides = array<i32>} : memref<3x32x4xf32, #tpu.memory_space<vmem>>, vector<1x8x4xf32>,
    %c4_i32 = arith.constant 4 : i32
    %283 = vector.broadcast %c4_i32 : i32 to vector<16x4xi32>
    %284 = arith.addi %283, %264 : vector<16x4xi32>
    %285 = arith.cmpi eq, %263, %284 : vector<16x4xi32>
    %cst_156 = arith.constant 1.000000e+00 : f32
    %cst_157 = arith.constant 0.000000e+00 : f32
    %286 = vector.broadcast %cst_156 : f32 to vector<16x4xf32>
    %287 = vector.broadcast %cst_157 : f32 to vector<16x4xf32>
    %288 = arith.select %285, %286, %287 : vector<16x4xi1>, vector<16x4xf32>
    %cst_158 = arith.constant dense<0.000000e+00> : vector<8x4xf32>
    %289 = tpu.matmul %252, %288, %cst_158 {dimension_numbers = #tpu.dot_dimension_numbers<[1], [0], [0], [1], [0, 0, 1, 1], [], []>} : vector<8x16xf32>, vector<16x4xf32>, vector<8x4xf32> -> vector<8x4xf32>
    %c0_159 = arith.constant 0 : index
    %c8 = arith.constant 8 : index
    %c0_160 = arith.constant 0 : index
    %290 = vector.load %arg30[%c0_159, %c8, %c0_160] : memref<3x32x4xf32, #tpu.memory_space<vmem>>, vector<1x8x4xf32>
    %291 = vector.shape_cast %290 : vector<1x8x4xf32> to vector<8x4xf32>
    %292 = vector.shape_cast %289 : vector<8x4xf32> to vector<1x8x4xf32>
    tpu.vector_store %arg30[%c0_159, %c8, %c0_160], %292 {strides = array<i32>} : memref<3x32x4xf32, #tpu.memory_space<vmem>>, vector<1x8x4xf32>,
    %cst_161 = arith.constant dense<0.000000e+00> : vector<8x4xf32>
    %293 = tpu.matmul %257, %288, %cst_161 {dimension_numbers = #tpu.dot_dimension_numbers<[1], [0], [0], [1], [0, 0, 1, 1], [], []>} : vector<8x16xf32>, vector<16x4xf32>, vector<8x4xf32> -> vector<8x4xf32>
    %c1_162 = arith.constant 1 : index
    %c8_163 = arith.constant 8 : index
    %c0_164 = arith.constant 0 : index
    %294 = vector.load %arg30[%c1_162, %c8_163, %c0_164] : memref<3x32x4xf32, #tpu.memory_space<vmem>>, vector<1x8x4xf32>
    %295 = vector.shape_cast %294 : vector<1x8x4xf32> to vector<8x4xf32>
    %296 = vector.shape_cast %293 : vector<8x4xf32> to vector<1x8x4xf32>
    tpu.vector_store %arg30[%c1_162, %c8_163, %c0_164], %296 {strides = array<i32>} : memref<3x32x4xf32, #tpu.memory_space<vmem>>, vector<1x8x4xf32>,
    %cst_165 = arith.constant dense<0.000000e+00> : vector<8x4xf32>
    %297 = tpu.matmul %262, %288, %cst_165 {dimension_numbers = #tpu.dot_dimension_numbers<[1], [0], [0], [1], [0, 0, 1, 1], [], []>} : vector<8x16xf32>, vector<16x4xf32>, vector<8x4xf32> -> vector<8x4xf32>
    %c2_166 = arith.constant 2 : index
    %c8_167 = arith.constant 8 : index
    %c0_168 = arith.constant 0 : index
    %298 = vector.load %arg30[%c2_166, %c8_167, %c0_168] : memref<3x32x4xf32, #tpu.memory_space<vmem>>, vector<1x8x4xf32>
    %299 = vector.shape_cast %298 : vector<1x8x4xf32> to vector<8x4xf32>
    %300 = vector.shape_cast %297 : vector<8x4xf32> to vector<1x8x4xf32>
    tpu.vector_store %arg30[%c2_166, %c8_167, %c0_168], %300 {strides = array<i32>} : memref<3x32x4xf32, #tpu.memory_space<vmem>>, vector<1x8x4xf32>,
    %c8_i32 = arith.constant 8 : i32
    %301 = vector.broadcast %c8_i32 : i32 to vector<16x4xi32>
    %302 = arith.addi %301, %264 : vector<16x4xi32>
    %303 = arith.cmpi eq, %263, %302 : vector<16x4xi32>
    %cst_169 = arith.constant 1.000000e+00 : f32
    %cst_170 = arith.constant 0.000000e+00 : f32
    %304 = vector.broadcast %cst_169 : f32 to vector<16x4xf32>
    %305 = vector.broadcast %cst_170 : f32 to vector<16x4xf32>
    %306 = arith.select %303, %304, %305 : vector<16x4xi1>, vector<16x4xf32>
    %cst_171 = arith.constant dense<0.000000e+00> : vector<8x4xf32>
    %307 = tpu.matmul %252, %306, %cst_171 {dimension_numbers = #tpu.dot_dimension_numbers<[1], [0], [0], [1], [0, 0, 1, 1], [], []>} : vector<8x16xf32>, vector<16x4xf32>, vector<8x4xf32> -> vector<8x4xf32>
    %c0_172 = arith.constant 0 : index
    %c16_173 = arith.constant 16 : index
    %c0_174 = arith.constant 0 : index
    %308 = vector.load %arg30[%c0_172, %c16_173, %c0_174] : memref<3x32x4xf32, #tpu.memory_space<vmem>>, vector<1x8x4xf32>
    %309 = vector.shape_cast %308 : vector<1x8x4xf32> to vector<8x4xf32>
    %310 = vector.shape_cast %307 : vector<8x4xf32> to vector<1x8x4xf32>
    tpu.vector_store %arg30[%c0_172, %c16_173, %c0_174], %310 {strides = array<i32>} : memref<3x32x4xf32, #tpu.memory_space<vmem>>, vector<1x8x4xf32>,
    %cst_175 = arith.constant dense<0.000000e+00> : vector<8x4xf32>
    %311 = tpu.matmul %257, %306, %cst_175 {dimension_numbers = #tpu.dot_dimension_numbers<[1], [0], [0], [1], [0, 0, 1, 1], [], []>} : vector<8x16xf32>, vector<16x4xf32>, vector<8x4xf32> -> vector<8x4xf32>
    %c1_176 = arith.constant 1 : index
    %c16_177 = arith.constant 16 : index
    %c0_178 = arith.constant 0 : index
    %312 = vector.load %arg30[%c1_176, %c16_177, %c0_178] : memref<3x32x4xf32, #tpu.memory_space<vmem>>, vector<1x8x4xf32>
    %313 = vector.shape_cast %312 : vector<1x8x4xf32> to vector<8x4xf32>
    %314 = vector.shape_cast %311 : vector<8x4xf32> to vector<1x8x4xf32>
    tpu.vector_store %arg30[%c1_176, %c16_177, %c0_178], %314 {strides = array<i32>} : memref<3x32x4xf32, #tpu.memory_space<vmem>>, vector<1x8x4xf32>,
    %cst_179 = arith.constant dense<0.000000e+00> : vector<8x4xf32>
    %315 = tpu.matmul %262, %306, %cst_179 {dimension_numbers = #tpu.dot_dimension_numbers<[1], [0], [0], [1], [0, 0, 1, 1], [], []>} : vector<8x16xf32>, vector<16x4xf32>, vector<8x4xf32> -> vector<8x4xf32>
    %c2_180 = arith.constant 2 : index
    %c16_181 = arith.constant 16 : index
    %c0_182 = arith.constant 0 : index
    %316 = vector.load %arg30[%c2_180, %c16_181, %c0_182] : memref<3x32x4xf32, #tpu.memory_space<vmem>>, vector<1x8x4xf32>
    %317 = vector.shape_cast %316 : vector<1x8x4xf32> to vector<8x4xf32>
    %318 = vector.shape_cast %315 : vector<8x4xf32> to vector<1x8x4xf32>
    tpu.vector_store %arg30[%c2_180, %c16_181, %c0_182], %318 {strides = array<i32>} : memref<3x32x4xf32, #tpu.memory_space<vmem>>, vector<1x8x4xf32>,
    %c12_i32 = arith.constant 12 : i32
    %319 = vector.broadcast %c12_i32 : i32 to vector<16x4xi32>
    %320 = arith.addi %319, %264 : vector<16x4xi32>
    %321 = arith.cmpi eq, %263, %320 : vector<16x4xi32>
    %cst_183 = arith.constant 1.000000e+00 : f32
    %cst_184 = arith.constant 0.000000e+00 : f32
    %322 = vector.broadcast %cst_183 : f32 to vector<16x4xf32>
    %323 = vector.broadcast %cst_184 : f32 to vector<16x4xf32>
    %324 = arith.select %321, %322, %323 : vector<16x4xi1>, vector<16x4xf32>
    %cst_185 = arith.constant dense<0.000000e+00> : vector<8x4xf32>
    %325 = tpu.matmul %252, %324, %cst_185 {dimension_numbers = #tpu.dot_dimension_numbers<[1], [0], [0], [1], [0, 0, 1, 1], [], []>} : vector<8x16xf32>, vector<16x4xf32>, vector<8x4xf32> -> vector<8x4xf32>
    %c0_186 = arith.constant 0 : index
    %c24 = arith.constant 24 : index
    %c0_187 = arith.constant 0 : index
    %326 = vector.load %arg30[%c0_186, %c24, %c0_187] : memref<3x32x4xf32, #tpu.memory_space<vmem>>, vector<1x8x4xf32>
    %327 = vector.shape_cast %326 : vector<1x8x4xf32> to vector<8x4xf32>
    %328 = vector.shape_cast %325 : vector<8x4xf32> to vector<1x8x4xf32>
    tpu.vector_store %arg30[%c0_186, %c24, %c0_187], %328 {strides = array<i32>} : memref<3x32x4xf32, #tpu.memory_space<vmem>>, vector<1x8x4xf32>,
    %cst_188 = arith.constant dense<0.000000e+00> : vector<8x4xf32>
    %329 = tpu.matmul %257, %324, %cst_188 {dimension_numbers = #tpu.dot_dimension_numbers<[1], [0], [0], [1], [0, 0, 1, 1], [], []>} : vector<8x16xf32>, vector<16x4xf32>, vector<8x4xf32> -> vector<8x4xf32>
    %c1_189 = arith.constant 1 : index
    %c24_190 = arith.constant 24 : index
    %c0_191 = arith.constant 0 : index
    %330 = vector.load %arg30[%c1_189, %c24_190, %c0_191] : memref<3x32x4xf32, #tpu.memory_space<vmem>>, vector<1x8x4xf32>
    %331 = vector.shape_cast %330 : vector<1x8x4xf32> to vector<8x4xf32>
    %332 = vector.shape_cast %329 : vector<8x4xf32> to vector<1x8x4xf32>
    tpu.vector_store %arg30[%c1_189, %c24_190, %c0_191], %332 {strides = array<i32>} : memref<3x32x4xf32, #tpu.memory_space<vmem>>, vector<1x8x4xf32>,
    %cst_192 = arith.constant dense<0.000000e+00> : vector<8x4xf32>
    %333 = tpu.matmul %262, %324, %cst_192 {dimension_numbers = #tpu.dot_dimension_numbers<[1], [0], [0], [1], [0, 0, 1, 1], [], []>} : vector<8x16xf32>, vector<16x4xf32>, vector<8x4xf32> -> vector<8x4xf32>
    %c2_193 = arith.constant 2 : index
    %c24_194 = arith.constant 24 : index
    %c0_195 = arith.constant 0 : index
    %334 = vector.load %arg30[%c2_193, %c24_194, %c0_195] : memref<3x32x4xf32, #tpu.memory_space<vmem>>, vector<1x8x4xf32>
    %335 = vector.shape_cast %334 : vector<1x8x4xf32> to vector<8x4xf32>
    %336 = vector.shape_cast %333 : vector<8x4xf32> to vector<1x8x4xf32>
    tpu.vector_store %arg30[%c2_193, %c24_194, %c0_195], %336 {strides = array<i32>} : memref<3x32x4xf32, #tpu.memory_space<vmem>>, vector<1x8x4xf32>,
    %c0_196 = arith.constant 0 : index
    %c0_197 = arith.constant 0 : index
    %c0_198 = arith.constant 0 : index
    %337 = vector.load %arg30[%c0_196, %c0_197, %c0_198] : memref<3x32x4xf32, #tpu.memory_space<vmem>>, vector<1x32x4xf32>
    %338 = vector.shape_cast %337 : vector<1x32x4xf32> to vector<32x4xf32>
    %c1_199 = arith.constant 1 : index
    %c0_200 = arith.constant 0 : index
    %c0_201 = arith.constant 0 : index
    %339 = vector.load %arg30[%c1_199, %c0_200, %c0_201] : memref<3x32x4xf32, #tpu.memory_space<vmem>>, vector<1x32x4xf32>
    %340 = vector.shape_cast %339 : vector<1x32x4xf32> to vector<32x4xf32>
    %c2_202 = arith.constant 2 : index
    %c0_203 = arith.constant 0 : index
    %c0_204 = arith.constant 0 : index
    %341 = vector.load %arg30[%c2_202, %c0_203, %c0_204] : memref<3x32x4xf32, #tpu.memory_space<vmem>>, vector<1x32x4xf32>
    %342 = vector.shape_cast %341 : vector<1x32x4xf32> to vector<32x4xf32>
    %cst_205 = arith.constant dense<0.000000e+00> : vector<32x32xf32>
    %343 = tpu.matmul %338, %340, %cst_205 {dimension_numbers = #tpu.dot_dimension_numbers<[1], [1], [0], [0], [0, 0, 1, 0], [], []>} : vector<32x4xf32>, vector<32x4xf32>, vector<32x32xf32> -> vector<32x32xf32>
    %cst_206 = arith.constant 5.000000e-01 : f32
    %344 = vector.broadcast %cst_206 : f32 to vector<32x32xf32>
    %345 = arith.mulf %343, %344 : vector<32x32xf32>
    %cst_207 = arith.constant dense<0xFF800000> : vector<32xf32>
    %346 = vector.multi_reduction <maximumf>, %345, %cst_207 [1] : vector<32x32xf32> to vector<32xf32>
    %347 = vector.shape_cast %346 : vector<32xf32> to vector<32x1xf32>
    %348 = vector.broadcast %347 : vector<32x1xf32> to vector<32x32xf32>
    %349 = arith.subf %345, %348 : vector<32x32xf32>
    %350 = math.exp %349 : vector<32x32xf32>
    %cst_208 = arith.constant dense<0.000000e+00> : vector<32xf32>
    %351 = vector.multi_reduction <add>, %350, %cst_208 [1] : vector<32x32xf32> to vector<32xf32>
    %352 = vector.shape_cast %351 : vector<32xf32> to vector<32x1xf32>
    %353 = vector.broadcast %352 : vector<32x1xf32> to vector<32x32xf32>
    %354 = arith.divf %350, %353 : vector<32x32xf32>
    %cst_209 = arith.constant dense<0.000000e+00> : vector<32x4xf32>
    %355 = tpu.matmul %354, %342, %cst_209 {dimension_numbers = #tpu.dot_dimension_numbers<[1], [0], [0], [1], [0, 0, 1, 1], [], []>} : vector<32x32xf32>, vector<32x4xf32>, vector<32x4xf32> -> vector<32x4xf32>
    %356 = tpu.iota {dimensions = array<i32: 0>} : vector<4x16xi32>
    %357 = tpu.iota {dimensions = array<i32: 1>} : vector<4x16xi32>
    %cst_210 = arith.constant 0.000000e+00 : f32
    %358 = vector.broadcast %cst_210 : f32 to vector<8x16xf32>
    %c0_i32_211 = arith.constant 0 : i32
    %359 = vector.broadcast %c0_i32_211 : i32 to vector<4x16xi32>
    %360 = arith.addi %359, %356 : vector<4x16xi32>
    %361 = arith.cmpi eq, %357, %360 : vector<4x16xi32>
    %cst_212 = arith.constant 1.000000e+00 : f32
    %cst_213 = arith.constant 0.000000e+00 : f32
    %362 = vector.broadcast %cst_212 : f32 to vector<4x16xf32>
    %363 = vector.broadcast %cst_213 : f32 to vector<4x16xf32>
    %364 = arith.select %361, %362, %363 : vector<4x16xi1>, vector<4x16xf32>
    %365 = vector.extract_strided_slice %355 {offsets = [0, 0], sizes = [8, 4], strides = [1, 1]} : vector<32x4xf32> to vector<8x4xf32>
    %cst_214 = arith.constant dense<0.000000e+00> : vector<8x16xf32>
    %366 = tpu.matmul %365, %364, %cst_214 {dimension_numbers = #tpu.dot_dimension_numbers<[1], [0], [0], [1], [0, 0, 1, 1], [], []>} : vector<8x4xf32>, vector<4x16xf32>, vector<8x16xf32> -> vector<8x16xf32>
    %367 = arith.addf %358, %366 : vector<8x16xf32>
    %c4_i32_215 = arith.constant 4 : i32
    %368 = vector.broadcast %c4_i32_215 : i32 to vector<4x16xi32>
    %369 = arith.addi %368, %356 : vector<4x16xi32>
    %370 = arith.cmpi eq, %357, %369 : vector<4x16xi32>
    %cst_216 = arith.constant 1.000000e+00 : f32
    %cst_217 = arith.constant 0.000000e+00 : f32
    %371 = vector.broadcast %cst_216 : f32 to vector<4x16xf32>
    %372 = vector.broadcast %cst_217 : f32 to vector<4x16xf32>
    %373 = arith.select %370, %371, %372 : vector<4x16xi1>, vector<4x16xf32>
    %374 = vector.extract_strided_slice %355 {offsets = [8, 0], sizes = [8, 4], strides = [1, 1]} : vector<32x4xf32> to vector<8x4xf32>
    %cst_218 = arith.constant dense<0.000000e+00> : vector<8x16xf32>
    %375 = tpu.matmul %374, %373, %cst_218 {dimension_numbers = #tpu.dot_dimension_numbers<[1], [0], [0], [1], [0, 0, 1, 1], [], []>} : vector<8x4xf32>, vector<4x16xf32>, vector<8x16xf32> -> vector<8x16xf32>
    %376 = arith.addf %367, %375 : vector<8x16xf32>
    %c8_i32_219 = arith.constant 8 : i32
    %377 = vector.broadcast %c8_i32_219 : i32 to vector<4x16xi32>
    %378 = arith.addi %377, %356 : vector<4x16xi32>
    %379 = arith.cmpi eq, %357, %378 : vector<4x16xi32>
    %cst_220 = arith.constant 1.000000e+00 : f32
    %cst_221 = arith.constant 0.000000e+00 : f32
    %380 = vector.broadcast %cst_220 : f32 to vector<4x16xf32>
    %381 = vector.broadcast %cst_221 : f32 to vector<4x16xf32>
    %382 = arith.select %379, %380, %381 : vector<4x16xi1>, vector<4x16xf32>
    %383 = vector.extract_strided_slice %355 {offsets = [16, 0], sizes = [8, 4], strides = [1, 1]} : vector<32x4xf32> to vector<8x4xf32>
    %cst_222 = arith.constant dense<0.000000e+00> : vector<8x16xf32>
    %384 = tpu.matmul %383, %382, %cst_222 {dimension_numbers = #tpu.dot_dimension_numbers<[1], [0], [0], [1], [0, 0, 1, 1], [], []>} : vector<8x4xf32>, vector<4x16xf32>, vector<8x16xf32> -> vector<8x16xf32>
    %385 = arith.addf %376, %384 : vector<8x16xf32>
    %c12_i32_223 = arith.constant 12 : i32
    %386 = vector.broadcast %c12_i32_223 : i32 to vector<4x16xi32>
    %387 = arith.addi %386, %356 : vector<4x16xi32>
    %388 = arith.cmpi eq, %357, %387 : vector<4x16xi32>
    %cst_224 = arith.constant 1.000000e+00 : f32
    %cst_225 = arith.constant 0.000000e+00 : f32
    %389 = vector.broadcast %cst_224 : f32 to vector<4x16xf32>
    %390 = vector.broadcast %cst_225 : f32 to vector<4x16xf32>
    %391 = arith.select %388, %389, %390 : vector<4x16xi1>, vector<4x16xf32>
    %392 = vector.extract_strided_slice %355 {offsets = [24, 0], sizes = [8, 4], strides = [1, 1]} : vector<32x4xf32> to vector<8x4xf32>
    %cst_226 = arith.constant dense<0.000000e+00> : vector<8x16xf32>
    %393 = tpu.matmul %392, %391, %cst_226 {dimension_numbers = #tpu.dot_dimension_numbers<[1], [0], [0], [1], [0, 0, 1, 1], [], []>} : vector<8x4xf32>, vector<4x16xf32>, vector<8x16xf32> -> vector<8x16xf32>
    %394 = arith.addf %385, %393 : vector<8x16xf32>
    %c0_227 = arith.constant 0 : index
    %c0_228 = arith.constant 0 : index
    %395 = vector.load %arg27[%c0_227, %c0_228] : memref<16x16xf32, #tpu.memory_space<vmem>>, vector<16x16xf32>
    %cst_229 = arith.constant dense<0.000000e+00> : vector<8x16xf32>
    %396 = tpu.matmul %394, %395, %cst_229 {dimension_numbers = #tpu.dot_dimension_numbers<[1], [0], [0], [1], [0, 0, 1, 1], [], []>} : vector<8x16xf32>, vector<16x16xf32>, vector<8x16xf32> -> vector<8x16xf32>
    %c0_230 = arith.constant 0 : index
    %c0_231 = arith.constant 0 : index
    %397 = vector.load %arg28[%c0_230, %c0_231] : memref<1x16xf32, #tpu.memory_space<vmem>>, vector<1x16xf32>
    %398 = vector.broadcast %397 : vector<1x16xf32> to vector<8x16xf32>
    %399 = arith.addf %396, %398 : vector<8x16xf32>
    %c0_232 = arith.constant 0 : index
    %c0_233 = arith.constant 0 : index
    %400 = vector.load %arg29[%c0_232, %c0_233] : memref<8x16xf32, #tpu.memory_space<vmem>>, vector<8x16xf32>
    tpu.vector_store %arg29[%c0_232, %c0_233], %399 {strides = array<i32>} : memref<8x16xf32, #tpu.memory_space<vmem>>, vector<8x16xf32>,
    return
  }
}

</mosaic_0001>

<llo_original>
// kernel: tpu_custom_call.1
$region0: #{tpu_custom_call.1}
  #allocation0 [shape = 'u32[]', space=smem, size = 0x4, offset = 0x4, fixed_abs, tag = 'smem constant byte address 0x4 - core index']
  #allocation1 [shape = 'u32[144,128]{1,0:T(1,128)}', space=vmem, size = 0x12000, scoped, tag = 'internal scratch']
  #allocation2 [shape = 'f32[3,32,4]{2,1,0:T(8,128)}', space=vmem, size = 0xc000, scoped, tag = 'scratch operand']
  %s0 = inlined_call_operand.smem [shape: u32[30], index: -1, kind: input, shape index: {}]
  %s1 = sld [smem:[%s0]]
  %s2 = scalar_lea.smem %s0, 1
  %s3 = sld [smem:[%s2]]
  %s4 = scalar_lea.smem %s0, 2
  %s5 = sld [smem:[%s4]]
  %s6 = scalar_lea.smem %s0, 3
  %s7 = sld [smem:[%s6]]
  %s8 = scalar_lea.smem %s0, 4
  %s9 = sld [smem:[%s8]]
  %s10 = scalar_lea.smem %s0, 5
  %s11 = sld [smem:[%s10]]
  %s12 = scalar_lea.smem %s0, 6
  %s13 = sld [smem:[%s12]]
  %s14 = scalar_lea.smem %s0, 7
  %s15 = sld [smem:[%s14]]
  %s16 = scalar_lea.smem %s0, 8
  %s17 = sld [smem:[%s16]]
  %s18 = scalar_lea.smem %s0, 9
  %s19 = sld [smem:[%s18]]
  %s20 = scalar_lea.smem %s0, 10
  %s21 = sld [smem:[%s20]]
  %s22 = scalar_lea.smem %s0, 11
  %s23 = sld [smem:[%s22]]
  %s24 = scalar_lea.smem %s0, 12
  %s25 = sld [smem:[%s24]]
  %s26 = scalar_lea.smem %s0, 13
  %s27 = sld [smem:[%s26]]
  %s28 = scalar_lea.smem %s0, 14
  %s29 = sld [smem:[%s28]]
  %s30 = scalar_lea.smem %s0, 15
  %s31 = sld [smem:[%s30]]
  %s32 = scalar_lea.smem %s0, 16
  %s33 = sld [smem:[%s32]]
  %s34 = scalar_lea.smem %s0, 17
  %s35 = sld [smem:[%s34]]
  %s36 = scalar_lea.smem %s0, 18
  %s37 = sld [smem:[%s36]]
  %s38 = scalar_lea.smem %s0, 19
  %s39 = sld [smem:[%s38]]
  %s40 = scalar_lea.smem %s0, 20
  %s41 = sld [smem:[%s40]]
  %s42 = scalar_lea.smem %s0, 21
  %s43 = sld [smem:[%s42]]
  %s44 = scalar_lea.smem %s0, 22
  %s45 = sld [smem:[%s44]]
  %s46 = scalar_lea.smem %s0, 23
  %s47 = sld [smem:[%s46]]
  %s48 = scalar_lea.smem %s0, 24
  %s49 = sld [smem:[%s48]]
  %s50 = scalar_lea.smem %s0, 25
  %s51 = sld [smem:[%s50]]
  %s52 = scalar_lea.smem %s0, 26
  %s53 = sld [smem:[%s52]]
  %s54 = scalar_lea.smem %s0, 27
  %s55 = sld [smem:[%s54]]
  %s56 = scalar_lea.smem %s0, 28
  %s57 = sld [smem:[%s56]]
  %s58 = scalar_lea.smem %s0, 29
  %s59 = sld [smem:[%s58]]
  %s60 = sld [smem:[#allocation0]]
  $region194: #{tpu_custom_call.1} parent=0
    _
  %s62 = ssub.s32 1, %s60
  %s63 = scalar_select 0, %s62, %s60
  $region1: #{tpu_custom_call.1} parent=0
    #allocation3 [shape = 'u8[8192]{0}', space=vmem, size = 0x2000, scoped, tag = 'input window, operand 0, single buffered']
    #allocation4 [shape = 's32[1]{0}', space=sflag, size = 0x4, scoped, tag = 'scoped memory for tpu_custom_call.1']
    #allocation5 [shape = 's32[1]{0}', space=sflag, size = 0x4, scoped, tag = 'scoped memory for tpu_custom_call.1']
    #allocation6 [shape = 'u8[512]{0}', space=vmem, size = 0x400, scoped, tag = 'input window, operand 2, single buffered']
    #allocation7 [shape = 's32[1]{0}', space=sflag, size = 0x4, scoped, tag = 'scoped memory for tpu_custom_call.1']
    #allocation8 [shape = 'u8[512]{0}', space=vmem, size = 0x400, scoped, tag = 'input window, operand 4, single buffered']
    #allocation9 [shape = 'u8[512]{0}', space=vmem, size = 0x400, scoped, tag = 'input window, operand 5, single buffered']
    #allocation10 [shape = 's32[1]{0}', space=sflag, size = 0x4, scoped, tag = 'scoped memory for tpu_custom_call.1']
    #allocation11 [shape = 'u8[512]{0}', space=vmem, size = 0x400, scoped, tag = 'input window, operand 8, single buffered']
    #allocation12 [shape = 'u8[512]{0}', space=vmem, size = 0x400, scoped, tag = 'input window, operand 9, single buffered']
    #allocation13 [shape = 's32[1]{0}', space=sflag, size = 0x4, scoped, tag = 'scoped memory for tpu_custom_call.1']
    #allocation14 [shape = 'u8[8192]{0}', space=vmem, size = 0x2000, scoped, tag = 'input window, operand 10, single buffered']
    #allocation15 [shape = 'u8[512]{0}', space=vmem, size = 0x400, scoped, tag = 'input window, operand 12, single buffered']
    #allocation16 [shape = 's32[1]{0}', space=sflag, size = 0x4, scoped, tag = 'scoped memory for tpu_custom_call.1']
    #allocation17 [shape = 'u8[16384]{0}', space=vmem, size = 0x4000, scoped, tag = 'input window, operand 13, single buffered']
    #allocation18 [shape = 'u8[512]{0}', space=vmem, size = 0x400, scoped, tag = 'input window, operand 14, single buffered']
    #allocation19 [shape = 's32[1]{0}', space=sflag, size = 0x4, scoped, tag = 'scoped memory for tpu_custom_call.1']
    #allocation20 [shape = 'u8[512]{0}', space=vmem, size = 0x400, scoped, tag = 'input window, operand 15, single buffered']
    #allocation21 [shape = 'u8[16384]{0}', space=vmem, size = 0x4000, scoped, tag = 'input window, operand 16, single buffered']
    #allocation22 [shape = 's32[1]{0}', space=sflag, size = 0x4, scoped, tag = 'scoped memory for tpu_custom_call.1']
    #allocation23 [shape = 'u8[8192]{0}', space=vmem, size = 0x2000, scoped, tag = 'input window, operand 21, single buffered']
    #allocation24 [shape = 'u8[512]{0}', space=vmem, size = 0x400, scoped, tag = 'input window, operand 22, single buffered']
    #allocation25 [shape = 's32[1]{0}', space=sflag, size = 0x4, scoped, tag = 'scoped memory for tpu_custom_call.1']
    #allocation26 [shape = 'u8[512]{0}', space=vmem, size = 0x400, scoped, tag = 'input window, operand 24, single buffered']
    #allocation27 [shape = 'u8[8192]{0}', space=vmem, size = 0x2000, scoped, tag = 'input window, operand 25, single buffered']
    #allocation28 [shape = 's32[1]{0}', space=sflag, size = 0x4, scoped, tag = 'scoped memory for tpu_custom_call.1']
    #allocation29 [shape = 'u8[512]{0}', space=vmem, size = 0x400, scoped, tag = 'input window, operand 26, single buffered']
    #allocation30 [shape = 'u8[4096]{0}', space=vmem, size = 0x1000, scoped, tag = 'output window, operand 0, single buffered']
    %64 = vsyncpa [#allocation4], 0
    %65 = vsyncpa [#allocation7], 0
    %66 = vsyncpa [#allocation10], 0
    %67 = vsyncpa [#allocation13], 0
    %68 = vsyncpa [#allocation16], 0
    %69 = vsyncpa [#allocation19], 0
    %70 = vsyncpa [#allocation22], 0
    %71 = vsyncpa [#allocation25], 0
    %72 = vsyncpa [#allocation28], 0
    %73 = vsyncpa [#allocation5], 0
    // Predicated region
    $region2: #{tpu_custom_call.1} parent=1 // pred_check
      _
    $region3: #{tpu_custom_call.1} parent=1 // pred_check_branch
      %75 = sbr.rel (0) target = $region5
    $region4: #{tpu_custom_call.1} parent=1 // pred_region
      %s77 = ssub.s32 256, 256
      %78 = vsyncadd [#allocation4], %s77
      %s79 = sshll.u32 [#allocation3], 4
      %s80 = int_to_ptr.vmem [resolvable:$true] %s79
      %85 = dma.hbm_to_vmem [thread:$0]  %s1, 256, %s80, [#allocation4], 128, 128, 8
    $region5: #{tpu_custom_call.1} parent=1 // pred_fallthru
      _
    // Predicated region
    $region6: #{tpu_custom_call.1} parent=1 // pred_check
      _
    $region7: #{tpu_custom_call.1} parent=1 // pred_check_branch
      %87 = sbr.rel (0) target = $region9
    $region8: #{tpu_custom_call.1} parent=1 // pred_region
      _
    $region9: #{tpu_custom_call.1} parent=1 // pred_fallthru
      _
    // Predicated region
    $region10: #{tpu_custom_call.1} parent=1 // pred_check
      _
    $region11: #{tpu_custom_call.1} parent=1 // pred_check_branch
      %89 = sbr.rel (0) target = $region13
    $region12: #{tpu_custom_call.1} parent=1 // pred_region
      %s91 = ssub.s32 16, 16
      %92 = vsyncadd [#allocation7], %s91
      %s94 = sshll.u32 [#allocation6], 4
      %s95 = int_to_ptr.vmem [resolvable:$true] %s94
      %97 = dma.hbm_to_vmem [thread:$0]  %s5, 16, %s95, [#allocation7]
    $region13: #{tpu_custom_call.1} parent=1 // pred_fallthru
      _
    // Predicated region
    $region14: #{tpu_custom_call.1} parent=1 // pred_check
      _
    $region15: #{tpu_custom_call.1} parent=1 // pred_check_branch
      %99 = sbr.rel (0) target = $region17
    $region16: #{tpu_custom_call.1} parent=1 // pred_region
      _
    $region17: #{tpu_custom_call.1} parent=1 // pred_fallthru
      _
    // Predicated region
    $region18: #{tpu_custom_call.1} parent=1 // pred_check
      _
    $region19: #{tpu_custom_call.1} parent=1 // pred_check_branch
      %101 = sbr.rel (0) target = $region21
    $region20: #{tpu_custom_call.1} parent=1 // pred_region
      %s103 = ssub.s32 16, 16
      %104 = vsyncadd [#allocation7], %s103
      %s106 = sshll.u32 [#allocation8], 4
      %s107 = int_to_ptr.vmem [resolvable:$true] %s106
      %109 = dma.hbm_to_vmem [thread:$0]  %s9, 16, %s107, [#allocation7]
    $region21: #{tpu_custom_call.1} parent=1 // pred_fallthru
      _
    // Predicated region
    $region22: #{tpu_custom_call.1} parent=1 // pred_check
      _
    $region23: #{tpu_custom_call.1} parent=1 // pred_check_branch
      %111 = sbr.rel (0) target = $region25
    $region24: #{tpu_custom_call.1} parent=1 // pred_region
      %s113 = ssub.s32 16, 16
      %114 = vsyncadd [#allocation10], %s113
      %s116 = sshll.u32 [#allocation9], 4
      %s117 = int_to_ptr.vmem [resolvable:$true] %s116
      %119 = dma.hbm_to_vmem [thread:$0]  %s11, 16, %s117, [#allocation10]
    $region25: #{tpu_custom_call.1} parent=1 // pred_fallthru
      _
    // Predicated region
    $region26: #{tpu_custom_call.1} parent=1 // pred_check
      _
    $region27: #{tpu_custom_call.1} parent=1 // pred_check_branch
      %121 = sbr.rel (0) target = $region29
    $region28: #{tpu_custom_call.1} parent=1 // pred_region
      _
    $region29: #{tpu_custom_call.1} parent=1 // pred_fallthru
      _
    // Predicated region
    $region30: #{tpu_custom_call.1} parent=1 // pred_check
      _
    $region31: #{tpu_custom_call.1} parent=1 // pred_check_branch
      %123 = sbr.rel (0) target = $region33
    $region32: #{tpu_custom_call.1} parent=1 // pred_region
      _
    $region33: #{tpu_custom_call.1} parent=1 // pred_fallthru
      _
    // Predicated region
    $region34: #{tpu_custom_call.1} parent=1 // pred_check
      _
    $region35: #{tpu_custom_call.1} parent=1 // pred_check_branch
      %125 = sbr.rel (0) target = $region37
    $region36: #{tpu_custom_call.1} parent=1 // pred_region
      %s127 = ssub.s32 16, 16
      %128 = vsyncadd [#allocation10], %s127
      %s130 = sshll.u32 [#allocation11], 4
      %s131 = int_to_ptr.vmem [resolvable:$true] %s130
      %133 = dma.hbm_to_vmem [thread:$0]  %s17, 16, %s131, [#allocation10]
    $region37: #{tpu_custom_call.1} parent=1 // pred_fallthru
      _
    // Predicated region
    $region38: #{tpu_custom_call.1} parent=1 // pred_check
      _
    $region39: #{tpu_custom_call.1} parent=1 // pred_check_branch
      %135 = sbr.rel (0) target = $region41
    $region40: #{tpu_custom_call.1} parent=1 // pred_region
      %s137 = ssub.s32 16, 16
      %138 = vsyncadd [#allocation13], %s137
      %s140 = sshll.u32 [#allocation12], 4
      %s141 = int_to_ptr.vmem [resolvable:$true] %s140
      %143 = dma.hbm_to_vmem [thread:$0]  %s19, 16, %s141, [#allocation13]
    $region41: #{tpu_custom_call.1} parent=1 // pred_fallthru
      _
    // Predicated region
    $region42: #{tpu_custom_call.1} parent=1 // pred_check
      _
    $region43: #{tpu_custom_call.1} parent=1 // pred_check_branch
      %145 = sbr.rel (0) target = $region45
    $region44: #{tpu_custom_call.1} parent=1 // pred_region
      %s147 = ssub.s32 256, 256
      %148 = vsyncadd [#allocation13], %s147
      %s149 = sshll.u32 [#allocation14], 4
      %s150 = int_to_ptr.vmem [resolvable:$true] %s149
      %155 = dma.hbm_to_vmem [thread:$0]  %s21, 256, %s150, [#allocation13], 128, 128, 8
    $region45: #{tpu_custom_call.1} parent=1 // pred_fallthru
      _
    // Predicated region
    $region46: #{tpu_custom_call.1} parent=1 // pred_check
      _
    $region47: #{tpu_custom_call.1} parent=1 // pred_check_branch
      %157 = sbr.rel (0) target = $region49
    $region48: #{tpu_custom_call.1} parent=1 // pred_region
      _
    $region49: #{tpu_custom_call.1} parent=1 // pred_fallthru
      _
    // Predicated region
    $region50: #{tpu_custom_call.1} parent=1 // pred_check
      _
    $region51: #{tpu_custom_call.1} parent=1 // pred_check_branch
      %159 = sbr.rel (0) target = $region53
    $region52: #{tpu_custom_call.1} parent=1 // pred_region
      %s161 = ssub.s32 16, 16
      %162 = vsyncadd [#allocation16], %s161
      %s164 = sshll.u32 [#allocation15], 4
      %s165 = int_to_ptr.vmem [resolvable:$true] %s164
      %167 = dma.hbm_to_vmem [thread:$0]  %s25, 16, %s165, [#allocation16]
    $region53: #{tpu_custom_call.1} parent=1 // pred_fallthru
      _
    // Predicated region
    $region54: #{tpu_custom_call.1} parent=1 // pred_check
      _
    $region55: #{tpu_custom_call.1} parent=1 // pred_check_branch
      %169 = sbr.rel (0) target = $region57
    $region56: #{tpu_custom_call.1} parent=1 // pred_region
      %s171 = ssub.s32 512, 512
      %172 = vsyncadd [#allocation16], %s171
      %s173 = sshll.u32 [#allocation17], 4
      %s174 = int_to_ptr.vmem [resolvable:$true] %s173
      %179 = dma.hbm_to_vmem [thread:$0]  %s27, 512, %s174, [#allocation16], 128, 128, 8
    $region57: #{tpu_custom_call.1} parent=1 // pred_fallthru
      _
    // Predicated region
    $region58: #{tpu_custom_call.1} parent=1 // pred_check
      _
    $region59: #{tpu_custom_call.1} parent=1 // pred_check_branch
      %181 = sbr.rel (0) target = $region61
    $region60: #{tpu_custom_call.1} parent=1 // pred_region
      %s183 = ssub.s32 16, 16
      %184 = vsyncadd [#allocation19], %s183
      %s186 = sshll.u32 [#allocation18], 4
      %s187 = int_to_ptr.vmem [resolvable:$true] %s186
      %189 = dma.hbm_to_vmem [thread:$0]  %s29, 16, %s187, [#allocation19]
    $region61: #{tpu_custom_call.1} parent=1 // pred_fallthru
      _
    // Predicated region
    $region62: #{tpu_custom_call.1} parent=1 // pred_check
      _
    $region63: #{tpu_custom_call.1} parent=1 // pred_check_branch
      %191 = sbr.rel (0) target = $region65
    $region64: #{tpu_custom_call.1} parent=1 // pred_region
      %s193 = ssub.s32 16, 16
      %194 = vsyncadd [#allocation19], %s193
      %s196 = sshll.u32 [#allocation20], 4
      %s197 = int_to_ptr.vmem [resolvable:$true] %s196
      %199 = dma.hbm_to_vmem [thread:$0]  %s31, 16, %s197, [#allocation19]
    $region65: #{tpu_custom_call.1} parent=1 // pred_fallthru
      _
    // Predicated region
    $region66: #{tpu_custom_call.1} parent=1 // pred_check
      _
    $region67: #{tpu_custom_call.1} parent=1 // pred_check_branch
      %201 = sbr.rel (0) target = $region69
    $region68: #{tpu_custom_call.1} parent=1 // pred_region
      %s203 = ssub.s32 512, 512
      %204 = vsyncadd [#allocation22], %s203
      %s205 = sshll.u32 [#allocation21], 4
      %s206 = int_to_ptr.vmem [resolvable:$true] %s205
      %211 = dma.hbm_to_vmem [thread:$0]  %s33, 512, %s206, [#allocation22], 128, 128, 8
    $region69: #{tpu_custom_call.1} parent=1 // pred_fallthru
      _
    // Predicated region
    $region70: #{tpu_custom_call.1} parent=1 // pred_check
      _
    $region71: #{tpu_custom_call.1} parent=1 // pred_check_branch
      %213 = sbr.rel (0) target = $region73
    $region72: #{tpu_custom_call.1} parent=1 // pred_region
      _
    $region73: #{tpu_custom_call.1} parent=1 // pred_fallthru
      _
    // Predicated region
    $region74: #{tpu_custom_call.1} parent=1 // pred_check
      _
    $region75: #{tpu_custom_call.1} parent=1 // pred_check_branch
      %215 = sbr.rel (0) target = $region77
    $region76: #{tpu_custom_call.1} parent=1 // pred_region
      _
    $region77: #{tpu_custom_call.1} parent=1 // pred_fallthru
      _
    // Predicated region
    $region78: #{tpu_custom_call.1} parent=1 // pred_check
      _
    $region79: #{tpu_custom_call.1} parent=1 // pred_check_branch
      %217 = sbr.rel (0) target = $region81
    $region80: #{tpu_custom_call.1} parent=1 // pred_region
      _
    $region81: #{tpu_custom_call.1} parent=1 // pred_fallthru
      _
    // Predicated region
    $region82: #{tpu_custom_call.1} parent=1 // pred_check
      _
    $region83: #{tpu_custom_call.1} parent=1 // pred_check_branch
      %219 = sbr.rel (0) target = $region85
    $region84: #{tpu_custom_call.1} parent=1 // pred_region
      _
    $region85: #{tpu_custom_call.1} parent=1 // pred_fallthru
      _
    // Predicated region
    $region86: #{tpu_custom_call.1} parent=1 // pred_check
      _
    $region87: #{tpu_custom_call.1} parent=1 // pred_check_branch
      %221 = sbr.rel (0) target = $region89
    $region88: #{tpu_custom_call.1} parent=1 // pred_region
      %s223 = ssub.s32 256, 256
      %224 = vsyncadd [#allocation22], %s223
      %s225 = sshll.u32 [#allocation23], 4
      %s226 = int_to_ptr.vmem [resolvable:$true] %s225
      %231 = dma.hbm_to_vmem [thread:$0]  %s43, 256, %s226, [#allocation22], 128, 128, 8
    $region89: #{tpu_custom_call.1} parent=1 // pred_fallthru
      _
    // Predicated region
    $region90: #{tpu_custom_call.1} parent=1 // pred_check
      _
    $region91: #{tpu_custom_call.1} parent=1 // pred_check_branch
      %233 = sbr.rel (0) target = $region93
    $region92: #{tpu_custom_call.1} parent=1 // pred_region
      %s235 = ssub.s32 16, 16
      %236 = vsyncadd [#allocation25], %s235
      %s238 = sshll.u32 [#allocation24], 4
      %s239 = int_to_ptr.vmem [resolvable:$true] %s238
      %241 = dma.hbm_to_vmem [thread:$0]  %s45, 16, %s239, [#allocation25]
    $region93: #{tpu_custom_call.1} parent=1 // pred_fallthru
      _
    // Predicated region
    $region94: #{tpu_custom_call.1} parent=1 // pred_check
      _
    $region95: #{tpu_custom_call.1} parent=1 // pred_check_branch
      %243 = sbr.rel (0) target = $region97
    $region96: #{tpu_custom_call.1} parent=1 // pred_region
      _
    $region97: #{tpu_custom_call.1} parent=1 // pred_fallthru
      _
    // Predicated region
    $region98: #{tpu_custom_call.1} parent=1 // pred_check
      _
    $region99: #{tpu_custom_call.1} parent=1 // pred_check_branch
      %245 = sbr.rel (0) target = $region101
    $region100: #{tpu_custom_call.1} parent=1 // pred_region
      %s247 = ssub.s32 16, 16
      %248 = vsyncadd [#allocation25], %s247
      %s250 = sshll.u32 [#allocation26], 4
      %s251 = int_to_ptr.vmem [resolvable:$true] %s250
      %253 = dma.hbm_to_vmem [thread:$0]  %s49, 16, %s251, [#allocation25]
    $region101: #{tpu_custom_call.1} parent=1 // pred_fallthru
      _
    // Predicated region
    $region102: #{tpu_custom_call.1} parent=1 // pred_check
      _
    $region103: #{tpu_custom_call.1} parent=1 // pred_check_branch
      %255 = sbr.rel (0) target = $region105
    $region104: #{tpu_custom_call.1} parent=1 // pred_region
      %s257 = ssub.s32 256, 256
      %258 = vsyncadd [#allocation28], %s257
      %s259 = sshll.u32 [#allocation27], 4
      %s260 = int_to_ptr.vmem [resolvable:$true] %s259
      %265 = dma.hbm_to_vmem [thread:$0]  %s51, 256, %s260, [#allocation28], 128, 128, 8
    $region105: #{tpu_custom_call.1} parent=1 // pred_fallthru
      _
    // Predicated region
    $region106: #{tpu_custom_call.1} parent=1 // pred_check
      _
    $region107: #{tpu_custom_call.1} parent=1 // pred_check_branch
      %267 = sbr.rel (0) target = $region109
    $region108: #{tpu_custom_call.1} parent=1 // pred_region
      %s269 = ssub.s32 16, 16
      %270 = vsyncadd [#allocation28], %s269
      %s272 = sshll.u32 [#allocation29], 4
      %s273 = int_to_ptr.vmem [resolvable:$true] %s272
      %275 = dma.hbm_to_vmem [thread:$0]  %s53, 16, %s273, [#allocation28]
    $region109: #{tpu_custom_call.1} parent=1 // pred_fallthru
      _
    // Predicated region
    $region110: #{tpu_custom_call.1} parent=1 // pred_check
      _
    $region111: #{tpu_custom_call.1} parent=1 // pred_check_branch
      %277 = sbr.rel (0) target = $region113
    $region112: #{tpu_custom_call.1} parent=1 // pred_region
      _
    $region113: #{tpu_custom_call.1} parent=1 // pred_fallthru
      _
    // Predicated region
    $region114: #{tpu_custom_call.1} parent=1 // pred_check
      _
    $region115: #{tpu_custom_call.1} parent=1 // pred_check_branch
      %279 = sbr.rel (0) target = $region117
    $region116: #{tpu_custom_call.1} parent=1 // pred_region
      _
    $region117: #{tpu_custom_call.1} parent=1 // pred_fallthru
      _
    // Predicated region
    $region118: #{tpu_custom_call.1} parent=1 // pred_check
      _
    $region119: #{tpu_custom_call.1} parent=1 // pred_check_branch
      %281 = sbr.rel (0) target = $region121
    $region120: #{tpu_custom_call.1} parent=1 // pred_region
      %282 = dma.done [#allocation4], 256
    $region121: #{tpu_custom_call.1} parent=1 // pred_fallthru
      _
    // Predicated region
    $region122: #{tpu_custom_call.1} parent=1 // pred_check
      _
    $region123: #{tpu_custom_call.1} parent=1 // pred_check_branch
      %284 = sbr.rel (0) target = $region125
    $region124: #{tpu_custom_call.1} parent=1 // pred_region
      %285 = dma.done [#allocation7], 16
    $region125: #{tpu_custom_call.1} parent=1 // pred_fallthru
      _
    // Predicated region
    $region126: #{tpu_custom_call.1} parent=1 // pred_check
      _
    $region127: #{tpu_custom_call.1} parent=1 // pred_check_branch
      %287 = sbr.rel (0) target = $region129
    $region128: #{tpu_custom_call.1} parent=1 // pred_region
      %288 = dma.done [#allocation7], 16
    $region129: #{tpu_custom_call.1} parent=1 // pred_fallthru
      _
    // Predicated region
    $region130: #{tpu_custom_call.1} parent=1 // pred_check
      _
    $region131: #{tpu_custom_call.1} parent=1 // pred_check_branch
      %290 = sbr.rel (0) target = $region133
    $region132: #{tpu_custom_call.1} parent=1 // pred_region
      %291 = dma.done [#allocation10], 16
    $region133: #{tpu_custom_call.1} parent=1 // pred_fallthru
      _
    // Predicated region
    $region134: #{tpu_custom_call.1} parent=1 // pred_check
      _
    $region135: #{tpu_custom_call.1} parent=1 // pred_check_branch
      %293 = sbr.rel (0) target = $region137
    $region136: #{tpu_custom_call.1} parent=1 // pred_region
      %294 = dma.done [#allocation10], 16
    $region137: #{tpu_custom_call.1} parent=1 // pred_fallthru
      _
    // Predicated region
    $region138: #{tpu_custom_call.1} parent=1 // pred_check
      _
    $region139: #{tpu_custom_call.1} parent=1 // pred_check_branch
      %296 = sbr.rel (0) target = $region141
    $region140: #{tpu_custom_call.1} parent=1 // pred_region
      %297 = dma.done [#allocation13], 16
    $region141: #{tpu_custom_call.1} parent=1 // pred_fallthru
      _
    // Predicated region
    $region142: #{tpu_custom_call.1} parent=1 // pred_check
      _
    $region143: #{tpu_custom_call.1} parent=1 // pred_check_branch
      %299 = sbr.rel (0) target = $region145
    $region144: #{tpu_custom_call.1} parent=1 // pred_region
      %300 = dma.done [#allocation13], 256
    $region145: #{tpu_custom_call.1} parent=1 // pred_fallthru
      _
    // Predicated region
    $region146: #{tpu_custom_call.1} parent=1 // pred_check
      _
    $region147: #{tpu_custom_call.1} parent=1 // pred_check_branch
      %302 = sbr.rel (0) target = $region149
    $region148: #{tpu_custom_call.1} parent=1 // pred_region
      %303 = dma.done [#allocation16], 16
    $region149: #{tpu_custom_call.1} parent=1 // pred_fallthru
      _
    // Predicated region
    $region150: #{tpu_custom_call.1} parent=1 // pred_check
      _
    $region151: #{tpu_custom_call.1} parent=1 // pred_check_branch
      %305 = sbr.rel (0) target = $region153
    $region152: #{tpu_custom_call.1} parent=1 // pred_region
      %306 = dma.done [#allocation16], 512
    $region153: #{tpu_custom_call.1} parent=1 // pred_fallthru
      _
    // Predicated region
    $region154: #{tpu_custom_call.1} parent=1 // pred_check
      _
    $region155: #{tpu_custom_call.1} parent=1 // pred_check_branch
      %308 = sbr.rel (0) target = $region157
    $region156: #{tpu_custom_call.1} parent=1 // pred_region
      %309 = dma.done [#allocation19], 16
    $region157: #{tpu_custom_call.1} parent=1 // pred_fallthru
      _
    // Predicated region
    $region158: #{tpu_custom_call.1} parent=1 // pred_check
      _
    $region159: #{tpu_custom_call.1} parent=1 // pred_check_branch
      %311 = sbr.rel (0) target = $region161
    $region160: #{tpu_custom_call.1} parent=1 // pred_region
      %312 = dma.done [#allocation19], 16
    $region161: #{tpu_custom_call.1} parent=1 // pred_fallthru
      _
    // Predicated region
    $region162: #{tpu_custom_call.1} parent=1 // pred_check
      _
    $region163: #{tpu_custom_call.1} parent=1 // pred_check_branch
      %314 = sbr.rel (0) target = $region165
    $region164: #{tpu_custom_call.1} parent=1 // pred_region
      %315 = dma.done [#allocation22], 512
    $region165: #{tpu_custom_call.1} parent=1 // pred_fallthru
      _
    // Predicated region
    $region166: #{tpu_custom_call.1} parent=1 // pred_check
      _
    $region167: #{tpu_custom_call.1} parent=1 // pred_check_branch
      %317 = sbr.rel (0) target = $region169
    $region168: #{tpu_custom_call.1} parent=1 // pred_region
      %318 = dma.done [#allocation22], 256
    $region169: #{tpu_custom_call.1} parent=1 // pred_fallthru
      _
    // Predicated region
    $region170: #{tpu_custom_call.1} parent=1 // pred_check
      _
    $region171: #{tpu_custom_call.1} parent=1 // pred_check_branch
      %320 = sbr.rel (0) target = $region173
    $region172: #{tpu_custom_call.1} parent=1 // pred_region
      %321 = dma.done [#allocation25], 16
    $region173: #{tpu_custom_call.1} parent=1 // pred_fallthru
      _
    // Predicated region
    $region174: #{tpu_custom_call.1} parent=1 // pred_check
      _
    $region175: #{tpu_custom_call.1} parent=1 // pred_check_branch
      %323 = sbr.rel (0) target = $region177
    $region176: #{tpu_custom_call.1} parent=1 // pred_region
      %324 = dma.done [#allocation25], 16
    $region177: #{tpu_custom_call.1} parent=1 // pred_fallthru
      _
    // Predicated region
    $region178: #{tpu_custom_call.1} parent=1 // pred_check
      _
    $region179: #{tpu_custom_call.1} parent=1 // pred_check_branch
      %326 = sbr.rel (0) target = $region181
    $region180: #{tpu_custom_call.1} parent=1 // pred_region
      %327 = dma.done [#allocation28], 256
    $region181: #{tpu_custom_call.1} parent=1 // pred_fallthru
      _
    // Predicated region
    $region182: #{tpu_custom_call.1} parent=1 // pred_check
      _
    $region183: #{tpu_custom_call.1} parent=1 // pred_check_branch
      %329 = sbr.rel (0) target = $region185
    $region184: #{tpu_custom_call.1} parent=1 // pred_region
      %330 = dma.done [#allocation28], 16
    $region185: #{tpu_custom_call.1} parent=1 // pred_fallthru
      _
    %v331 = vld [vmem:[#allocation3] sm:$0xff]
    %v332 = vld [vmem:[#allocation3 + $0x8] sm:$0xff]
    %v333 = vld [vmem:[%s3] sm:$0xff]
    %v334 = vld [vmem:[%s3 + $0x8] sm:$0xff]
    %v335 = vld [vmem:[%s3 + $0x10] sm:$0xff]
    %v336 = vld [vmem:[%s3 + $0x18] sm:$0xff]
    %v337 = vld [vmem:[#allocation6] sm:$0x1]
    %v339 = vlaneseq
    %v340 = vshrl.u32 %v339, 7
    %v341 = vsub.s32 0, %v340
    %v342 = vrot.slane %v337, %v341
    %vm344 = vcmask 261120
    %v346 = vsel %vm344, %v331, 0
    %v349 = vsel %vm344, %v332, 0
    %351 = vmatprep.subr.mxu0 0.0
    %352 = vmatpush1.msra.mxu0 %v333
    %353 = vmatprep.subr.mxu0 0.0
    %354 = vmatpush1.msra.mxu0 %v334
    %355 = vmatprep.subr.mxu0 0.0
    %356 = vmatpush1.msra.mxu0 %v335
    %357 = vmatprep.subr.mxu0 0.0
    %358 = vmatpush1.msra.mxu0 %v336
    %359 = vmatprep.subr.mxu0 0.0
    %360 = vmatpush1.msra.mxu0 0.0
    %361 = vmatprep.subr.mxu0 0.0
    %362 = vmatpush1.msra.mxu0 0.0
    %363 = vmatprep.subr.mxu0 0.0
    %364 = vmatpush1.msra.mxu0 0.0
    %365 = vmatprep.subr.mxu0 0.0
    %366 = vmatpush1.msra.mxu0 0.0
    %367 = vmatprep.subr.mxu0 0.0
    %368 = vmatpush1.msra.mxu0 0.0
    %369 = vmatprep.subr.mxu0 0.0
    %370 = vmatpush1.msra.mxu0 0.0
    %371 = vmatprep.subr.mxu0 0.0
    %372 = vmatpush1.msra.mxu0 0.0
    %373 = vmatprep.subr.mxu0 0.0
    %374 = vmatpush1.msra.mxu0 0.0
    %375 = vmatprep.subr.mxu0 0.0
    %376 = vmatpush1.msra.mxu0 0.0
    %377 = vmatprep.subr.mxu0 0.0
    %378 = vmatpush1.msra.mxu0 0.0
    %379 = vmatprep.subr.mxu0 0.0
    %380 = vmatpush1.msra.mxu0 0.0
    %381 = vmatprep.subr.mxu0 0.0
    %382 = vmatpush1.msra.mxu0 0.0
    %383 = vmatprep.subr.mxu0 0.0
    %384 = vmatpush1.msra.mxu0 0.0
    %385 = vmatprep.subr.mxu0 0.0
    %386 = vmatpush1.msra.mxu0 0.0
    %387 = vmatprep.subr.mxu0 0.0
    %388 = vmatpush1.msra.mxu0 0.0
    %389 = vmatprep.subr.mxu0 0.0
    %390 = vmatpush1.msra.mxu0 0.0
    %391 = vmatprep.subr.mxu0 0.0
    %392 = vmatpush1.msra.mxu0 0.0
    %393 = vmatprep.subr.mxu0 0.0
    %394 = vmatpush1.msra.mxu0 0.0
    %395 = vmatprep.subr.mxu0 0.0
    %396 = vmatpush1.msra.mxu0 0.0
    %397 = vmatprep.subr.mxu0 0.0
    %398 = vmatpush1.msra.mxu0 0.0
    %399 = vmatprep.subr.mxu0 0.0
    %400 = vmatpush1.msra.mxu0 0.0
    %401 = vmatprep.subr.mxu0 0.0
    %402 = vmatpush1.msra.mxu0 0.0
    %403 = vmatprep.subr.mxu0 0.0
    %404 = vmatpush1.msra.mxu0 0.0
    %405 = vmatprep.subr.mxu0 0.0
    %406 = vmatpush1.msra.mxu0 0.0
    %407 = vmatprep.subr.mxu0 0.0
    %408 = vmatpush1.msra.mxu0 0.0
    %409 = vmatprep.subr.mxu0 0.0
    %410 = vmatpush1.msra.mxu0 0.0
    %411 = vmatprep.subr.mxu0 0.0
    %412 = vmatpush1.msra.mxu0 0.0
    %413 = vmatprep.subr.mxu0 0.0
    %414 = vmatpush1.msra.mxu0 0.0
    %415 = vmatprep.mubr.f32.mxu0 0.0
    %416 = vmatmul.mubr.f32.gmra.mrb[0].mxu0 %v346
    %v417 = vpop.f32.mrb[0].mxu0
    %v418 = vadd.f32 %v342, %v417
    %v419 = vpop.f32.mrb[0].mxu0
    %420 = vmatprep.mubr.f32.mxu0 0.0
    %421 = vmatmul.mubr.f32.gmra.mrb[0].mxu0 %v349
    %v422 = vpop.f32.mrb[0].mxu0
    %v423 = vadd.f32 %v342, %v422
    %v424 = vpop.f32.mrb[0].mxu0
    %425 = vdwg.mxu0
    %v426 = vmax.f32 %v418, 0.0
    %v427 = vmax.f32 %v423, 0.0
    %v428 = vld [vmem:[%s7] sm:$0xff]
    %v429 = vld [vmem:[%s7 + $0x8] sm:$0xff]
    %v430 = vld [vmem:[%s7 + $0x10] sm:$0xff]
    %v431 = vld [vmem:[%s7 + $0x18] sm:$0xff]
    %v432 = vld [vmem:[#allocation8] sm:$0x1]
    %v434 = vlaneseq
    %v435 = vshrl.u32 %v434, 7
    %v436 = vsub.s32 0, %v435
    %v437 = vrot.slane %v432, %v436
    %v440 = vsel %vm344, %v426, 0
    %v443 = vsel %vm344, %v427, 0
    %445 = vmatprep.subr.mxu0 0.0
    %446 = vmatpush1.msra.mxu0 %v428
    %447 = vmatprep.subr.mxu0 0.0
    %448 = vmatpush1.msra.mxu0 %v429
    %449 = vmatprep.subr.mxu0 0.0
    %450 = vmatpush1.msra.mxu0 %v430
    %451 = vmatprep.subr.mxu0 0.0
    %452 = vmatpush1.msra.mxu0 %v431
    %453 = vmatprep.subr.mxu0 0.0
    %454 = vmatpush1.msra.mxu0 0.0
    %455 = vmatprep.subr.mxu0 0.0
    %456 = vmatpush1.msra.mxu0 0.0
    %457 = vmatprep.subr.mxu0 0.0
    %458 = vmatpush1.msra.mxu0 0.0
    %459 = vmatprep.subr.mxu0 0.0
    %460 = vmatpush1.msra.mxu0 0.0
    %461 = vmatprep.subr.mxu0 0.0
    %462 = vmatpush1.msra.mxu0 0.0
    %463 = vmatprep.subr.mxu0 0.0
    %464 = vmatpush1.msra.mxu0 0.0
    %465 = vmatprep.subr.mxu0 0.0
    %466 = vmatpush1.msra.mxu0 0.0
    %467 = vmatprep.subr.mxu0 0.0
    %468 = vmatpush1.msra.mxu0 0.0
    %469 = vmatprep.subr.mxu0 0.0
    %470 = vmatpush1.msra.mxu0 0.0
    %471 = vmatprep.subr.mxu0 0.0
    %472 = vmatpush1.msra.mxu0 0.0
    %473 = vmatprep.subr.mxu0 0.0
    %474 = vmatpush1.msra.mxu0 0.0
    %475 = vmatprep.subr.mxu0 0.0
    %476 = vmatpush1.msra.mxu0 0.0
    %477 = vmatprep.subr.mxu0 0.0
    %478 = vmatpush1.msra.mxu0 0.0
    %479 = vmatprep.subr.mxu0 0.0
    %480 = vmatpush1.msra.mxu0 0.0
    %481 = vmatprep.subr.mxu0 0.0
    %482 = vmatpush1.msra.mxu0 0.0
    %483 = vmatprep.subr.mxu0 0.0
    %484 = vmatpush1.msra.mxu0 0.0
    %485 = vmatprep.subr.mxu0 0.0
    %486 = vmatpush1.msra.mxu0 0.0
    %487 = vmatprep.subr.mxu0 0.0
    %488 = vmatpush1.msra.mxu0 0.0
    %489 = vmatprep.subr.mxu0 0.0
    %490 = vmatpush1.msra.mxu0 0.0
    %491 = vmatprep.subr.mxu0 0.0
    %492 = vmatpush1.msra.mxu0 0.0
    %493 = vmatprep.subr.mxu0 0.0
    %494 = vmatpush1.msra.mxu0 0.0
    %495 = vmatprep.subr.mxu0 0.0
    %496 = vmatpush1.msra.mxu0 0.0
    %497 = vmatprep.subr.mxu0 0.0
    %498 = vmatpush1.msra.mxu0 0.0
    %499 = vmatprep.subr.mxu0 0.0
    %500 = vmatpush1.msra.mxu0 0.0
    %501 = vmatprep.subr.mxu0 0.0
    %502 = vmatpush1.msra.mxu0 0.0
    %503 = vmatprep.subr.mxu0 0.0
    %504 = vmatpush1.msra.mxu0 0.0
    %505 = vmatprep.subr.mxu0 0.0
    %506 = vmatpush1.msra.mxu0 0.0
    %507 = vmatprep.subr.mxu0 0.0
    %508 = vmatpush1.msra.mxu0 0.0
    %509 = vmatprep.mubr.f32.mxu0 0.0
    %510 = vmatmul.mubr.f32.gmra.mrb[0].mxu0 %v440
    %v511 = vpop.f32.mrb[0].mxu0
    %v512 = vadd.f32 %v437, %v511
    %v513 = vpop.f32.mrb[0].mxu0
    %514 = vmatprep.mubr.f32.mxu0 0.0
    %515 = vmatmul.mubr.f32.gmra.mrb[0].mxu0 %v443
    %v516 = vpop.f32.mrb[0].mxu0
    %v517 = vadd.f32 %v437, %v516
    %v518 = vpop.f32.mrb[0].mxu0
    %519 = vdwg.mxu0
    %v520 = vld [vmem:[#allocation9] sm:$0x1]
    %v522 = vlaneseq
    %v523 = vshrl.u32 %v522, 7
    %v524 = vsub.s32 0, %v523
    %v525 = vrot.slane %v520, %v524
    %v527 = vmul.f32 %v512, %v525
    %v528 = vmul.f32 %v517, %v525
    %v529 = vld [vmem:[%s13] sm:$0xff]
    %v530 = vld [vmem:[%s13 + $0x8] sm:$0xff]
    %v531 = vld [vmem:[%s13 + $0x10] sm:$0xff]
    %v532 = vld [vmem:[%s13 + $0x18] sm:$0xff]
    %v534 = vsel %vm344, %v527, 0
    %v537 = vsel %vm344, %v528, 0
    %539 = vmatprep.subr.mxu0 0.0
    %540 = vmatpush1.msra.mxu0 %v529
    %541 = vmatprep.subr.mxu0 0.0
    %542 = vmatpush1.msra.mxu0 %v530
    %543 = vmatprep.subr.mxu0 0.0
    %544 = vmatpush1.msra.mxu0 %v531
    %545 = vmatprep.subr.mxu0 0.0
    %546 = vmatpush1.msra.mxu0 %v532
    %547 = vmatprep.subr.mxu0 0.0
    %548 = vmatpush1.msra.mxu0 0.0
    %549 = vmatprep.subr.mxu0 0.0
    %550 = vmatpush1.msra.mxu0 0.0
    %551 = vmatprep.subr.mxu0 0.0
    %552 = vmatpush1.msra.mxu0 0.0
    %553 = vmatprep.subr.mxu0 0.0
    %554 = vmatpush1.msra.mxu0 0.0
    %555 = vmatprep.subr.mxu0 0.0
    %556 = vmatpush1.msra.mxu0 0.0
    %557 = vmatprep.subr.mxu0 0.0
    %558 = vmatpush1.msra.mxu0 0.0
    %559 = vmatprep.subr.mxu0 0.0
    %560 = vmatpush1.msra.mxu0 0.0
    %561 = vmatprep.subr.mxu0 0.0
    %562 = vmatpush1.msra.mxu0 0.0
    %563 = vmatprep.subr.mxu0 0.0
    %564 = vmatpush1.msra.mxu0 0.0
    %565 = vmatprep.subr.mxu0 0.0
    %566 = vmatpush1.msra.mxu0 0.0
    %567 = vmatprep.subr.mxu0 0.0
    %568 = vmatpush1.msra.mxu0 0.0
    %569 = vmatprep.subr.mxu0 0.0
    %570 = vmatpush1.msra.mxu0 0.0
    %571 = vmatprep.subr.mxu0 0.0
    %572 = vmatpush1.msra.mxu0 0.0
    %573 = vmatprep.subr.mxu0 0.0
    %574 = vmatpush1.msra.mxu0 0.0
    %575 = vmatprep.subr.mxu0 0.0
    %576 = vmatpush1.msra.mxu0 0.0
    %577 = vmatprep.subr.mxu0 0.0
    %578 = vmatpush1.msra.mxu0 0.0
    %579 = vmatprep.subr.mxu0 0.0
    %580 = vmatpush1.msra.mxu0 0.0
    %581 = vmatprep.subr.mxu0 0.0
    %582 = vmatpush1.msra.mxu0 0.0
    %583 = vmatprep.subr.mxu0 0.0
    %584 = vmatpush1.msra.mxu0 0.0
    %585 = vmatprep.subr.mxu0 0.0
    %586 = vmatpush1.msra.mxu0 0.0
    %587 = vmatprep.subr.mxu0 0.0
    %588 = vmatpush1.msra.mxu0 0.0
    %589 = vmatprep.subr.mxu0 0.0
    %590 = vmatpush1.msra.mxu0 0.0
    %591 = vmatprep.subr.mxu0 0.0
    %592 = vmatpush1.msra.mxu0 0.0
    %593 = vmatprep.subr.mxu0 0.0
    %594 = vmatpush1.msra.mxu0 0.0
    %595 = vmatprep.subr.mxu0 0.0
    %596 = vmatpush1.msra.mxu0 0.0
    %597 = vmatprep.subr.mxu0 0.0
    %598 = vmatpush1.msra.mxu0 0.0
    %599 = vmatprep.subr.mxu0 0.0
    %600 = vmatpush1.msra.mxu0 0.0
    %601 = vmatprep.subr.mxu0 0.0
    %602 = vmatpush1.msra.mxu0 0.0
    %603 = vmatprep.mubr.f32.mxu0 0.0
    %604 = vmatmul.mubr.f32.gmra.mrb[0].mxu0 %v534
    %v605 = vpop.f32.mrb[0].mxu0
    %v606 = vadd.f32 0.0, %v605
    %v607 = vpop.f32.mrb[0].mxu0
    %608 = vmatprep.mubr.f32.mxu0 0.0
    %609 = vmatmul.mubr.f32.gmra.mrb[0].mxu0 %v537
    %v610 = vpop.f32.mrb[0].mxu0
    %v611 = vadd.f32 0.0, %v610
    %v612 = vpop.f32.mrb[0].mxu0
    %613 = vdwg.mxu0
    %v614 = vmul.f32 %v606, 0.5
    %v615 = vmul.f32 %v611, 0.5
    %v616 = vmul.f32 %v606, 0.70710677
    %v617 = vmul.f32 %v611, 0.70710677
    %vm618 = vcmp.ge.f32.partialorder %v616, 0.0
    %vm619 = vcmp.ge.f32.partialorder %v617, 0.0
    %v620 = vsel %vm618, 1.0, -1.0
    %v621 = vsel %vm619, 1.0, -1.0
    %v622 = vand.u32 2147483647, %v616
    %v623 = vand.u32 2147483647, %v617
    %v624 = vmul.f32 %v622, 0.3275911
    %v625 = vmul.f32 %v623, 0.3275911
    %v626 = vadd.f32 %v624, 1.0
    %v627 = vadd.f32 %v625, 1.0
    %v628 = vrcp.pop %v626
    %v629 = vmul.f32 1.0, %v628
    %v630 = vrcp.pop %v627
    %v631 = vmul.f32 1.0, %v630
    %v632 = vmul.f32 %v629, 1.0614054
    %v633 = vmul.f32 %v631, 1.0614054
    %v634 = vadd.f32 %v632, -1.4531521
    %v635 = vadd.f32 %v633, -1.4531521
    %v636 = vmul.f32 %v634, %v629
    %v637 = vmul.f32 %v635, %v631
    %v638 = vadd.f32 %v636, 1.4214138
    %v639 = vadd.f32 %v637, 1.4214138
    %v640 = vmul.f32 %v638, %v629
    %v641 = vmul.f32 %v639, %v631
    %v642 = vadd.f32 %v640, -0.28449672
    %v643 = vadd.f32 %v641, -0.28449672
    %v644 = vmul.f32 %v642, %v629
    %v645 = vmul.f32 %v643, %v631
    %v646 = vadd.f32 %v644, 0.2548296
    %v647 = vadd.f32 %v645, 0.2548296
    %v648 = vmul.f32 %v646, %v629
    %v649 = vmul.f32 %v647, %v631
    %v650 = vsub.f32 0.0, %v622
    %v651 = vsub.f32 0.0, %v623
    %v652 = vmul.f32 %v650, %v622
    %v653 = vmul.f32 %v651, %v623
    %v654 = vmul.f32 %v652, 1.442695
    %v655 = vpow.pop %v654
    %v656 = vmul.f32 %v653, 1.442695
    %v657 = vpow.pop %v656
    %v658 = vmul.f32 %v648, %v655
    %v659 = vmul.f32 %v649, %v657
    %v660 = vsub.f32 1.0, %v658
    %v661 = vsub.f32 1.0, %v659
    %v662 = vmul.f32 %v620, %v660
    %v663 = vmul.f32 %v621, %v661
    %v664 = vadd.f32 %v662, 1.0
    %v665 = vadd.f32 %v663, 1.0
    %v666 = vmul.f32 %v614, %v664
    %v667 = vmul.f32 %v615, %v665
    %v668 = vld [vmem:[%s15] sm:$0xff]
    %v669 = vld [vmem:[%s15 + $0x8] sm:$0xff]
    %v670 = vld [vmem:[%s15 + $0x10] sm:$0xff]
    %v671 = vld [vmem:[%s15 + $0x18] sm:$0xff]
    %v672 = vld [vmem:[#allocation11] sm:$0x1]
    %v674 = vlaneseq
    %v675 = vshrl.u32 %v674, 7
    %v676 = vsub.s32 0, %v675
    %v677 = vrot.slane %v672, %v676
    %v680 = vsel %vm344, %v666, 0
    %v683 = vsel %vm344, %v667, 0
    %685 = vmatprep.subr.mxu0 0.0
    %686 = vmatpush1.msra.mxu0 %v668
    %687 = vmatprep.subr.mxu0 0.0
    %688 = vmatpush1.msra.mxu0 %v669
    %689 = vmatprep.subr.mxu0 0.0
    %690 = vmatpush1.msra.mxu0 %v670
    %691 = vmatprep.subr.mxu0 0.0
    %692 = vmatpush1.msra.mxu0 %v671
    %693 = vmatprep.subr.mxu0 0.0
    %694 = vmatpush1.msra.mxu0 0.0
    %695 = vmatprep.subr.mxu0 0.0
    %696 = vmatpush1.msra.mxu0 0.0
    %697 = vmatprep.subr.mxu0 0.0
    %698 = vmatpush1.msra.mxu0 0.0
    %699 = vmatprep.subr.mxu0 0.0
    %700 = vmatpush1.msra.mxu0 0.0
    %701 = vmatprep.subr.mxu0 0.0
    %702 = vmatpush1.msra.mxu0 0.0
    %703 = vmatprep.subr.mxu0 0.0
    %704 = vmatpush1.msra.mxu0 0.0
    %705 = vmatprep.subr.mxu0 0.0
    %706 = vmatpush1.msra.mxu0 0.0
    %707 = vmatprep.subr.mxu0 0.0
    %708 = vmatpush1.msra.mxu0 0.0
    %709 = vmatprep.subr.mxu0 0.0
    %710 = vmatpush1.msra.mxu0 0.0
    %711 = vmatprep.subr.mxu0 0.0
    %712 = vmatpush1.msra.mxu0 0.0
    %713 = vmatprep.subr.mxu0 0.0
    %714 = vmatpush1.msra.mxu0 0.0
    %715 = vmatprep.subr.mxu0 0.0
    %716 = vmatpush1.msra.mxu0 0.0
    %717 = vmatprep.subr.mxu0 0.0
    %718 = vmatpush1.msra.mxu0 0.0
    %719 = vmatprep.subr.mxu0 0.0
    %720 = vmatpush1.msra.mxu0 0.0
    %721 = vmatprep.subr.mxu0 0.0
    %722 = vmatpush1.msra.mxu0 0.0
    %723 = vmatprep.subr.mxu0 0.0
    %724 = vmatpush1.msra.mxu0 0.0
    %725 = vmatprep.subr.mxu0 0.0
    %726 = vmatpush1.msra.mxu0 0.0
    %727 = vmatprep.subr.mxu0 0.0
    %728 = vmatpush1.msra.mxu0 0.0
    %729 = vmatprep.subr.mxu0 0.0
    %730 = vmatpush1.msra.mxu0 0.0
    %731 = vmatprep.subr.mxu0 0.0
    %732 = vmatpush1.msra.mxu0 0.0
    %733 = vmatprep.subr.mxu0 0.0
    %734 = vmatpush1.msra.mxu0 0.0
    %735 = vmatprep.subr.mxu0 0.0
    %736 = vmatpush1.msra.mxu0 0.0
    %737 = vmatprep.subr.mxu0 0.0
    %738 = vmatpush1.msra.mxu0 0.0
    %739 = vmatprep.subr.mxu0 0.0
    %740 = vmatpush1.msra.mxu0 0.0
    %741 = vmatprep.subr.mxu0 0.0
    %742 = vmatpush1.msra.mxu0 0.0
    %743 = vmatprep.subr.mxu0 0.0
    %744 = vmatpush1.msra.mxu0 0.0
    %745 = vmatprep.subr.mxu0 0.0
    %746 = vmatpush1.msra.mxu0 0.0
    %747 = vmatprep.subr.mxu0 0.0
    %748 = vmatpush1.msra.mxu0 0.0
    %749 = vmatprep.mubr.f32.mxu0 0.0
    %750 = vmatmul.mubr.f32.gmra.mrb[0].mxu0 %v680
    %v751 = vpop.f32.mrb[0].mxu0
    %v752 = vadd.f32 %v677, %v751
    %v753 = vpop.f32.mrb[0].mxu0
    %754 = vmatprep.mubr.f32.mxu0 0.0
    %755 = vmatmul.mubr.f32.gmra.mrb[0].mxu0 %v683
    %v756 = vpop.f32.mrb[0].mxu0
    %v757 = vadd.f32 %v677, %v756
    %v758 = vpop.f32.mrb[0].mxu0
    %759 = vdwg.mxu0
    %v760 = vmax.f32 %v752, 0.0
    %v761 = vmax.f32 %v757, 0.0
    %v762 = vld [vmem:[#allocation12] sm:$0x1]
    %v764 = vlaneseq
    %v765 = vshrl.u32 %v764, 7
    %v766 = vsub.s32 0, %v765
    %v767 = vrot.slane %v762, %v766
    %v769 = vmul.f32 %v760, %v767
    %v770 = vmul.f32 %v761, %v767
    %v771 = vld [vmem:[#allocation14] sm:$0xff]
    %v772 = vld [vmem:[#allocation14 + $0x8] sm:$0xff]
    %vm773 = vcmask 130048
    %v775 = vsel %vm773, %v769, 0
    %v778 = vsel %vm773, %v770, 0
    %780 = vmatprep.subr.mxu0 0.0
    %781 = vmatpush1.msra.mxu0 %v771
    %782 = vmatprep.subr.mxu0 0.0
    %783 = vmatpush1.msra.mxu0 %v772
    %784 = vmatprep.subr.mxu0 0.0
    %785 = vmatpush1.msra.mxu0 0.0
    %786 = vmatprep.subr.mxu0 0.0
    %787 = vmatpush1.msra.mxu0 0.0
    %788 = vmatprep.subr.mxu0 0.0
    %789 = vmatpush1.msra.mxu0 0.0
    %790 = vmatprep.subr.mxu0 0.0
    %791 = vmatpush1.msra.mxu0 0.0
    %792 = vmatprep.subr.mxu0 0.0
    %793 = vmatpush1.msra.mxu0 0.0
    %794 = vmatprep.subr.mxu0 0.0
    %795 = vmatpush1.msra.mxu0 0.0
    %796 = vmatprep.subr.mxu0 0.0
    %797 = vmatpush1.msra.mxu0 0.0
    %798 = vmatprep.subr.mxu0 0.0
    %799 = vmatpush1.msra.mxu0 0.0
    %800 = vmatprep.subr.mxu0 0.0
    %801 = vmatpush1.msra.mxu0 0.0
    %802 = vmatprep.subr.mxu0 0.0
    %803 = vmatpush1.msra.mxu0 0.0
    %804 = vmatprep.subr.mxu0 0.0
    %805 = vmatpush1.msra.mxu0 0.0
    %806 = vmatprep.subr.mxu0 0.0
    %807 = vmatpush1.msra.mxu0 0.0
    %808 = vmatprep.subr.mxu0 0.0
    %809 = vmatpush1.msra.mxu0 0.0
    %810 = vmatprep.subr.mxu0 0.0
    %811 = vmatpush1.msra.mxu0 0.0
    %812 = vmatprep.subr.mxu0 0.0
    %813 = vmatpush1.msra.mxu0 0.0
    %814 = vmatprep.subr.mxu0 0.0
    %815 = vmatpush1.msra.mxu0 0.0
    %816 = vmatprep.subr.mxu0 0.0
    %817 = vmatpush1.msra.mxu0 0.0
    %818 = vmatprep.subr.mxu0 0.0
    %819 = vmatpush1.msra.mxu0 0.0
    %820 = vmatprep.subr.mxu0 0.0
    %821 = vmatpush1.msra.mxu0 0.0
    %822 = vmatprep.subr.mxu0 0.0
    %823 = vmatpush1.msra.mxu0 0.0
    %824 = vmatprep.subr.mxu0 0.0
    %825 = vmatpush1.msra.mxu0 0.0
    %826 = vmatprep.subr.mxu0 0.0
    %827 = vmatpush1.msra.mxu0 0.0
    %828 = vmatprep.subr.mxu0 0.0
    %829 = vmatpush1.msra.mxu0 0.0
    %830 = vmatprep.subr.mxu0 0.0
    %831 = vmatpush1.msra.mxu0 0.0
    %832 = vmatprep.subr.mxu0 0.0
    %833 = vmatpush1.msra.mxu0 0.0
    %834 = vmatprep.subr.mxu0 0.0
    %835 = vmatpush1.msra.mxu0 0.0
    %836 = vmatprep.subr.mxu0 0.0
    %837 = vmatpush1.msra.mxu0 0.0
    %838 = vmatprep.subr.mxu0 0.0
    %839 = vmatpush1.msra.mxu0 0.0
    %840 = vmatprep.subr.mxu0 0.0
    %841 = vmatpush1.msra.mxu0 0.0
    %842 = vmatprep.subr.mxu0 0.0
    %843 = vmatpush1.msra.mxu0 0.0
    %844 = vmatprep.mubr.f32.mxu0 0.0
    %845 = vmatmul.mubr.f32.gmra.mrb[0].mxu0 %v775
    %v846 = vpop.f32.mrb[0].mxu0
    %v847 = vadd.f32 0.0, %v846
    %v848 = vpop.f32.mrb[0].mxu0
    %849 = vmatprep.mubr.f32.mxu0 0.0
    %850 = vmatmul.mubr.f32.gmra.mrb[0].mxu0 %v778
    %v851 = vpop.f32.mrb[0].mxu0
    %v852 = vadd.f32 0.0, %v851
    %v853 = vpop.f32.mrb[0].mxu0
    %854 = vdwg.mxu0
    %v855 = vmul.f32 %v847, 0.5
    %v856 = vmul.f32 %v852, 0.5
    %v857 = vmul.f32 %v847, 0.70710677
    %v858 = vmul.f32 %v852, 0.70710677
    %vm859 = vcmp.ge.f32.partialorder %v857, 0.0
    %vm860 = vcmp.ge.f32.partialorder %v858, 0.0
    %v861 = vsel %vm859, 1.0, -1.0
    %v862 = vsel %vm860, 1.0, -1.0
    %v863 = vand.u32 2147483647, %v857
    %v864 = vand.u32 2147483647, %v858
    %v865 = vmul.f32 %v863, 0.3275911
    %v866 = vmul.f32 %v864, 0.3275911
    %v867 = vadd.f32 %v865, 1.0
    %v868 = vadd.f32 %v866, 1.0
    %v869 = vrcp.pop %v867
    %v870 = vmul.f32 1.0, %v869
    %v871 = vrcp.pop %v868
    %v872 = vmul.f32 1.0, %v871
    %v873 = vmul.f32 %v870, 1.0614054
    %v874 = vmul.f32 %v872, 1.0614054
    %v875 = vadd.f32 %v873, -1.4531521
    %v876 = vadd.f32 %v874, -1.4531521
    %v877 = vmul.f32 %v875, %v870
    %v878 = vmul.f32 %v876, %v872
    %v879 = vadd.f32 %v877, 1.4214138
    %v880 = vadd.f32 %v878, 1.4214138
    %v881 = vmul.f32 %v879, %v870
    %v882 = vmul.f32 %v880, %v872
    %v883 = vadd.f32 %v881, -0.28449672
    %v884 = vadd.f32 %v882, -0.28449672
    %v885 = vmul.f32 %v883, %v870
    %v886 = vmul.f32 %v884, %v872
    %v887 = vadd.f32 %v885, 0.2548296
    %v888 = vadd.f32 %v886, 0.2548296
    %v889 = vmul.f32 %v887, %v870
    %v890 = vmul.f32 %v888, %v872
    %v891 = vsub.f32 0.0, %v863
    %v892 = vsub.f32 0.0, %v864
    %v893 = vmul.f32 %v891, %v863
    %v894 = vmul.f32 %v892, %v864
    %v895 = vmul.f32 %v893, 1.442695
    %v896 = vpow.pop %v895
    %v897 = vmul.f32 %v894, 1.442695
    %v898 = vpow.pop %v897
    %v899 = vmul.f32 %v889, %v896
    %v900 = vmul.f32 %v890, %v898
    %v901 = vsub.f32 1.0, %v899
    %v902 = vsub.f32 1.0, %v900
    %v903 = vmul.f32 %v861, %v901
    %v904 = vmul.f32 %v862, %v902
    %v905 = vadd.f32 %v903, 1.0
    %v906 = vadd.f32 %v904, 1.0
    %v907 = vmul.f32 %v855, %v905
    %v908 = vmul.f32 %v856, %v906
    %v909 = vlaneseq
    %v910 = vshrl.u32 %v909, 7
    %v911 = vlaneseq
    %v912 = vand.u32 %v911, 127
    %v913 = vmul.u32 %v910, 2
    %vm914 = vcmp.eq.s32.totalorder %v912, %v913
    %v915 = vsel %vm914, 1.0, 0.0
    %v917 = vsel %vm773, %v915, 0
    %919 = vmatprep.subr.mxu0 0.0
    %920 = vmatpush1.msra.mxu0 %v907
    %921 = vmatprep.subr.mxu0 0.0
    %922 = vmatpush1.msra.mxu0 %v908
    %923 = vmatprep.subr.mxu0 0.0
    %924 = vmatpush1.msra.mxu0 0.0
    %925 = vmatprep.subr.mxu0 0.0
    %926 = vmatpush1.msra.mxu0 0.0
    %927 = vmatprep.subr.mxu0 0.0
    %928 = vmatpush1.msra.mxu0 0.0
    %929 = vmatprep.subr.mxu0 0.0
    %930 = vmatpush1.msra.mxu0 0.0
    %931 = vmatprep.subr.mxu0 0.0
    %932 = vmatpush1.msra.mxu0 0.0
    %933 = vmatprep.subr.mxu0 0.0
    %934 = vmatpush1.msra.mxu0 0.0
    %935 = vmatprep.subr.mxu0 0.0
    %936 = vmatpush1.msra.mxu0 0.0
    %937 = vmatprep.subr.mxu0 0.0
    %938 = vmatpush1.msra.mxu0 0.0
    %939 = vmatprep.subr.mxu0 0.0
    %940 = vmatpush1.msra.mxu0 0.0
    %941 = vmatprep.subr.mxu0 0.0
    %942 = vmatpush1.msra.mxu0 0.0
    %943 = vmatprep.subr.mxu0 0.0
    %944 = vmatpush1.msra.mxu0 0.0
    %945 = vmatprep.subr.mxu0 0.0
    %946 = vmatpush1.msra.mxu0 0.0
    %947 = vmatprep.subr.mxu0 0.0
    %948 = vmatpush1.msra.mxu0 0.0
    %949 = vmatprep.subr.mxu0 0.0
    %950 = vmatpush1.msra.mxu0 0.0
    %951 = vmatprep.subr.mxu0 0.0
    %952 = vmatpush1.msra.mxu0 0.0
    %953 = vmatprep.subr.mxu0 0.0
    %954 = vmatpush1.msra.mxu0 0.0
    %955 = vmatprep.subr.mxu0 0.0
    %956 = vmatpush1.msra.mxu0 0.0
    %957 = vmatprep.subr.mxu0 0.0
    %958 = vmatpush1.msra.mxu0 0.0
    %959 = vmatprep.subr.mxu0 0.0
    %960 = vmatpush1.msra.mxu0 0.0
    %961 = vmatprep.subr.mxu0 0.0
    %962 = vmatpush1.msra.mxu0 0.0
    %963 = vmatprep.subr.mxu0 0.0
    %964 = vmatpush1.msra.mxu0 0.0
    %965 = vmatprep.subr.mxu0 0.0
    %966 = vmatpush1.msra.mxu0 0.0
    %967 = vmatprep.subr.mxu0 0.0
    %968 = vmatpush1.msra.mxu0 0.0
    %969 = vmatprep.subr.mxu0 0.0
    %970 = vmatpush1.msra.mxu0 0.0
    %971 = vmatprep.subr.mxu0 0.0
    %972 = vmatpush1.msra.mxu0 0.0
    %973 = vmatprep.subr.mxu0 0.0
    %974 = vmatpush1.msra.mxu0 0.0
    %975 = vmatprep.subr.mxu0 0.0
    %976 = vmatpush1.msra.mxu0 0.0
    %977 = vmatprep.subr.mxu0 0.0
    %978 = vmatpush1.msra.mxu0 0.0
    %979 = vmatprep.subr.mxu0 0.0
    %980 = vmatpush1.msra.mxu0 0.0
    %981 = vmatprep.subr.mxu0 0.0
    %982 = vmatpush1.msra.mxu0 0.0
    %983 = vmatprep.mubr.f32.mxu0 0.0
    %984 = vmatmul.mubr.f32.gmra.mrb[0].mxu0 %v917
    %v985 = vpop.f32.mrb[0].mxu0
    %v986 = vadd.f32 0.0, %v985
    %v987 = vpop.f32.mrb[0].mxu0
    %988 = vdwg.mxu0
    %v989 = vld [vmem:[%s23] sm:$0xff]
    %v990 = vld [vmem:[%s23 + $0x8] sm:$0xff]
    %v991 = vadd.s32 %v913, 1
    %vm992 = vcmp.eq.s32.totalorder %v912, %v991
    %v993 = vsel %vm992, 1.0, 0.0
    %v995 = vsel %vm773, %v993, 0
    %997 = vmatprep.subr.mxu0 0.0
    %998 = vmatpush1.msra.mxu0 %v907
    %999 = vmatprep.subr.mxu0 0.0
    %1000 = vmatpush1.msra.mxu0 %v908
    %1001 = vmatprep.subr.mxu0 0.0
    %1002 = vmatpush1.msra.mxu0 0.0
    %1003 = vmatprep.subr.mxu0 0.0
    %1004 = vmatpush1.msra.mxu0 0.0
    %1005 = vmatprep.subr.mxu0 0.0
    %1006 = vmatpush1.msra.mxu0 0.0
    %1007 = vmatprep.subr.mxu0 0.0
    %1008 = vmatpush1.msra.mxu0 0.0
    %1009 = vmatprep.subr.mxu0 0.0
    %1010 = vmatpush1.msra.mxu0 0.0
    %1011 = vmatprep.subr.mxu0 0.0
    %1012 = vmatpush1.msra.mxu0 0.0
    %1013 = vmatprep.subr.mxu0 0.0
    %1014 = vmatpush1.msra.mxu0 0.0
    %1015 = vmatprep.subr.mxu0 0.0
    %1016 = vmatpush1.msra.mxu0 0.0
    %1017 = vmatprep.subr.mxu0 0.0
    %1018 = vmatpush1.msra.mxu0 0.0
    %1019 = vmatprep.subr.mxu0 0.0
    %1020 = vmatpush1.msra.mxu0 0.0
    %1021 = vmatprep.subr.mxu0 0.0
    %1022 = vmatpush1.msra.mxu0 0.0
    %1023 = vmatprep.subr.mxu0 0.0
    %1024 = vmatpush1.msra.mxu0 0.0
    %1025 = vmatprep.subr.mxu0 0.0
    %1026 = vmatpush1.msra.mxu0 0.0
    %1027 = vmatprep.subr.mxu0 0.0
    %1028 = vmatpush1.msra.mxu0 0.0
    %1029 = vmatprep.subr.mxu0 0.0
    %1030 = vmatpush1.msra.mxu0 0.0
    %1031 = vmatprep.subr.mxu0 0.0
    %1032 = vmatpush1.msra.mxu0 0.0
    %1033 = vmatprep.subr.mxu0 0.0
    %1034 = vmatpush1.msra.mxu0 0.0
    %1035 = vmatprep.subr.mxu0 0.0
    %1036 = vmatpush1.msra.mxu0 0.0
    %1037 = vmatprep.subr.mxu0 0.0
    %1038 = vmatpush1.msra.mxu0 0.0
    %1039 = vmatprep.subr.mxu0 0.0
    %1040 = vmatpush1.msra.mxu0 0.0
    %1041 = vmatprep.subr.mxu0 0.0
    %1042 = vmatpush1.msra.mxu0 0.0
    %1043 = vmatprep.subr.mxu0 0.0
    %1044 = vmatpush1.msra.mxu0 0.0
    %1045 = vmatprep.subr.mxu0 0.0
    %1046 = vmatpush1.msra.mxu0 0.0
    %1047 = vmatprep.subr.mxu0 0.0
    %1048 = vmatpush1.msra.mxu0 0.0
    %1049 = vmatprep.subr.mxu0 0.0
    %1050 = vmatpush1.msra.mxu0 0.0
    %1051 = vmatprep.subr.mxu0 0.0
    %1052 = vmatpush1.msra.mxu0 0.0
    %1053 = vmatprep.subr.mxu0 0.0
    %1054 = vmatpush1.msra.mxu0 0.0
    %1055 = vmatprep.subr.mxu0 0.0
    %1056 = vmatpush1.msra.mxu0 0.0
    %1057 = vmatprep.subr.mxu0 0.0
    %1058 = vmatpush1.msra.mxu0 0.0
    %1059 = vmatprep.subr.mxu0 0.0
    %1060 = vmatpush1.msra.mxu0 0.0
    %1061 = vmatprep.mubr.f32.mxu0 0.0
    %1062 = vmatmul.mubr.f32.gmra.mrb[0].mxu0 %v995
    %v1063 = vpop.f32.mrb[0].mxu0
    %v1064 = vadd.f32 0.0, %v1063
    %v1065 = vpop.f32.mrb[0].mxu0
    %1066 = vdwg.mxu0
    %v1067 = vld [vmem:[%s23 + $0x10] sm:$0xff]
    %v1068 = vld [vmem:[%s23 + $0x18] sm:$0xff]
    %v1070 = vsel %vm773, %v1064, 0
    %1072 = vmatprep.subr.mxu0 0.0
    %1073 = vmatpush1.msra.mxu0 %v1067
    %1074 = vmatprep.subr.mxu0 0.0
    %1075 = vmatpush1.msra.mxu0 %v1068
    %1076 = vmatprep.subr.mxu0 0.0
    %1077 = vmatpush1.msra.mxu0 0.0
    %1078 = vmatprep.subr.mxu0 0.0
    %1079 = vmatpush1.msra.mxu0 0.0
    %1080 = vmatprep.subr.mxu0 0.0
    %1081 = vmatpush1.msra.mxu0 0.0
    %1082 = vmatprep.subr.mxu0 0.0
    %1083 = vmatpush1.msra.mxu0 0.0
    %1084 = vmatprep.subr.mxu0 0.0
    %1085 = vmatpush1.msra.mxu0 0.0
    %1086 = vmatprep.subr.mxu0 0.0
    %1087 = vmatpush1.msra.mxu0 0.0
    %1088 = vmatprep.subr.mxu0 0.0
    %1089 = vmatpush1.msra.mxu0 0.0
    %1090 = vmatprep.subr.mxu0 0.0
    %1091 = vmatpush1.msra.mxu0 0.0
    %1092 = vmatprep.subr.mxu0 0.0
    %1093 = vmatpush1.msra.mxu0 0.0
    %1094 = vmatprep.subr.mxu0 0.0
    %1095 = vmatpush1.msra.mxu0 0.0
    %1096 = vmatprep.subr.mxu0 0.0
    %1097 = vmatpush1.msra.mxu0 0.0
    %1098 = vmatprep.subr.mxu0 0.0
    %1099 = vmatpush1.msra.mxu0 0.0
    %1100 = vmatprep.subr.mxu0 0.0
    %1101 = vmatpush1.msra.mxu0 0.0
    %1102 = vmatprep.subr.mxu0 0.0
    %1103 = vmatpush1.msra.mxu0 0.0
    %1104 = vmatprep.subr.mxu0 0.0
    %1105 = vmatpush1.msra.mxu0 0.0
    %1106 = vmatprep.subr.mxu0 0.0
    %1107 = vmatpush1.msra.mxu0 0.0
    %1108 = vmatprep.subr.mxu0 0.0
    %1109 = vmatpush1.msra.mxu0 0.0
    %1110 = vmatprep.subr.mxu0 0.0
    %1111 = vmatpush1.msra.mxu0 0.0
    %1112 = vmatprep.subr.mxu0 0.0
    %1113 = vmatpush1.msra.mxu0 0.0
    %1114 = vmatprep.subr.mxu0 0.0
    %1115 = vmatpush1.msra.mxu0 0.0
    %1116 = vmatprep.subr.mxu0 0.0
    %1117 = vmatpush1.msra.mxu0 0.0
    %1118 = vmatprep.subr.mxu0 0.0
    %1119 = vmatpush1.msra.mxu0 0.0
    %1120 = vmatprep.subr.mxu0 0.0
    %1121 = vmatpush1.msra.mxu0 0.0
    %1122 = vmatprep.subr.mxu0 0.0
    %1123 = vmatpush1.msra.mxu0 0.0
    %1124 = vmatprep.subr.mxu0 0.0
    %1125 = vmatpush1.msra.mxu0 0.0
    %1126 = vmatprep.subr.mxu0 0.0
    %1127 = vmatpush1.msra.mxu0 0.0
    %1128 = vmatprep.subr.mxu0 0.0
    %1129 = vmatpush1.msra.mxu0 0.0
    %1130 = vmatprep.subr.mxu0 0.0
    %1131 = vmatpush1.msra.mxu0 0.0
    %1132 = vmatprep.subr.mxu0 0.0
    %1133 = vmatpush1.msra.mxu0 0.0
    %1134 = vmatprep.subr.mxu0 0.0
    %1135 = vmatpush1.msra.mxu0 0.0
    %1136 = vmatprep.mubr.f32.mxu0 0.0
    %1137 = vmatmul.mubr.f32.gmra.mrb[0].mxu0 %v1070
    %v1138 = vpop.f32.mrb[0].mxu0
    %v1139 = vadd.f32 0.0, %v1138
    %v1140 = vpop.f32.mrb[0].mxu0
    %1141 = vdwg.mxu0
    %v1143 = vsel %vm773, %v986, 0
    %1145 = vmatprep.subr.mxu0 0.0
    %1146 = vmatpush1.msra.mxu0 %v989
    %1147 = vmatprep.subr.mxu0 0.0
    %1148 = vmatpush1.msra.mxu0 %v990
    %1149 = vmatprep.subr.mxu0 0.0
    %1150 = vmatpush1.msra.mxu0 0.0
    %1151 = vmatprep.subr.mxu0 0.0
    %1152 = vmatpush1.msra.mxu0 0.0
    %1153 = vmatprep.subr.mxu0 0.0
    %1154 = vmatpush1.msra.mxu0 0.0
    %1155 = vmatprep.subr.mxu0 0.0
    %1156 = vmatpush1.msra.mxu0 0.0
    %1157 = vmatprep.subr.mxu0 0.0
    %1158 = vmatpush1.msra.mxu0 0.0
    %1159 = vmatprep.subr.mxu0 0.0
    %1160 = vmatpush1.msra.mxu0 0.0
    %1161 = vmatprep.subr.mxu0 0.0
    %1162 = vmatpush1.msra.mxu0 0.0
    %1163 = vmatprep.subr.mxu0 0.0
    %1164 = vmatpush1.msra.mxu0 0.0
    %1165 = vmatprep.subr.mxu0 0.0
    %1166 = vmatpush1.msra.mxu0 0.0
    %1167 = vmatprep.subr.mxu0 0.0
    %1168 = vmatpush1.msra.mxu0 0.0
    %1169 = vmatprep.subr.mxu0 0.0
    %1170 = vmatpush1.msra.mxu0 0.0
    %1171 = vmatprep.subr.mxu0 0.0
    %1172 = vmatpush1.msra.mxu0 0.0
    %1173 = vmatprep.subr.mxu0 0.0
    %1174 = vmatpush1.msra.mxu0 0.0
    %1175 = vmatprep.subr.mxu0 0.0
    %1176 = vmatpush1.msra.mxu0 0.0
    %1177 = vmatprep.subr.mxu0 0.0
    %1178 = vmatpush1.msra.mxu0 0.0
    %1179 = vmatprep.subr.mxu0 0.0
    %1180 = vmatpush1.msra.mxu0 0.0
    %1181 = vmatprep.subr.mxu0 0.0
    %1182 = vmatpush1.msra.mxu0 0.0
    %1183 = vmatprep.subr.mxu0 0.0
    %1184 = vmatpush1.msra.mxu0 0.0
    %1185 = vmatprep.subr.mxu0 0.0
    %1186 = vmatpush1.msra.mxu0 0.0
    %1187 = vmatprep.subr.mxu0 0.0
    %1188 = vmatpush1.msra.mxu0 0.0
    %1189 = vmatprep.subr.mxu0 0.0
    %1190 = vmatpush1.msra.mxu0 0.0
    %1191 = vmatprep.subr.mxu0 0.0
    %1192 = vmatpush1.msra.mxu0 0.0
    %1193 = vmatprep.subr.mxu0 0.0
    %1194 = vmatpush1.msra.mxu0 0.0
    %1195 = vmatprep.subr.mxu0 0.0
    %1196 = vmatpush1.msra.mxu0 0.0
    %1197 = vmatprep.subr.mxu0 0.0
    %1198 = vmatpush1.msra.mxu0 0.0
    %1199 = vmatprep.subr.mxu0 0.0
    %1200 = vmatpush1.msra.mxu0 0.0
    %1201 = vmatprep.subr.mxu0 0.0
    %1202 = vmatpush1.msra.mxu0 0.0
    %1203 = vmatprep.subr.mxu0 0.0
    %1204 = vmatpush1.msra.mxu0 0.0
    %1205 = vmatprep.subr.mxu0 0.0
    %1206 = vmatpush1.msra.mxu0 0.0
    %1207 = vmatprep.subr.mxu0 0.0
    %1208 = vmatpush1.msra.mxu0 0.0
    %1209 = vmatprep.mubr.f32.mxu0 0.0
    %1210 = vmatmul.mubr.f32.gmra.mrb[0].mxu0 %v1143
    %v1211 = vpop.f32.mrb[0].mxu0
    %v1212 = vadd.f32 %v1139, %v1211
    %v1213 = vpop.f32.mrb[0].mxu0
    %1214 = vdwg.mxu0
    %v1215 = vld [vmem:[#allocation15] sm:$0x1]
    %v1217 = vlaneseq
    %v1218 = vshrl.u32 %v1217, 7
    %v1219 = vsub.s32 0, %v1218
    %v1220 = vrot.slane %v1215, %v1219
    %v1222 = vadd.f32 %v1212, %v1220
    %v1223 = vmax.f32 %v1222, 0.0
    %v1224 = vld [vmem:[#allocation17] sm:$0xff]
    %v1225 = vld [vmem:[#allocation17 + $0x8] sm:$0xff]
    %v1226 = vld [vmem:[#allocation17 + $0x10] sm:$0xff]
    %v1227 = vld [vmem:[#allocation17 + $0x18] sm:$0xff]
    %v1228 = vld [vmem:[#allocation18] sm:$0x1]
    %v1230 = vlaneseq
    %v1231 = vshrl.u32 %v1230, 7
    %v1232 = vsub.s32 0, %v1231
    %v1233 = vrot.slane %v1228, %v1232
    %v1236 = vsel %vm344, %v1223, 0
    %1238 = vmatprep.subr.mxu0 0.0
    %1239 = vmatpush1.msra.mxu0 %v1224
    %1240 = vmatprep.subr.mxu0 0.0
    %1241 = vmatpush1.msra.mxu0 %v1225
    %1242 = vmatprep.subr.mxu0 0.0
    %1243 = vmatpush1.msra.mxu0 %v1226
    %1244 = vmatprep.subr.mxu0 0.0
    %1245 = vmatpush1.msra.mxu0 %v1227
    %1246 = vmatprep.subr.mxu0 0.0
    %1247 = vmatpush1.msra.mxu0 0.0
    %1248 = vmatprep.subr.mxu0 0.0
    %1249 = vmatpush1.msra.mxu0 0.0
    %1250 = vmatprep.subr.mxu0 0.0
    %1251 = vmatpush1.msra.mxu0 0.0
    %1252 = vmatprep.subr.mxu0 0.0
    %1253 = vmatpush1.msra.mxu0 0.0
    %1254 = vmatprep.subr.mxu0 0.0
    %1255 = vmatpush1.msra.mxu0 0.0
    %1256 = vmatprep.subr.mxu0 0.0
    %1257 = vmatpush1.msra.mxu0 0.0
    %1258 = vmatprep.subr.mxu0 0.0
    %1259 = vmatpush1.msra.mxu0 0.0
    %1260 = vmatprep.subr.mxu0 0.0
    %1261 = vmatpush1.msra.mxu0 0.0
    %1262 = vmatprep.subr.mxu0 0.0
    %1263 = vmatpush1.msra.mxu0 0.0
    %1264 = vmatprep.subr.mxu0 0.0
    %1265 = vmatpush1.msra.mxu0 0.0
    %1266 = vmatprep.subr.mxu0 0.0
    %1267 = vmatpush1.msra.mxu0 0.0
    %1268 = vmatprep.subr.mxu0 0.0
    %1269 = vmatpush1.msra.mxu0 0.0
    %1270 = vmatprep.subr.mxu0 0.0
    %1271 = vmatpush1.msra.mxu0 0.0
    %1272 = vmatprep.subr.mxu0 0.0
    %1273 = vmatpush1.msra.mxu0 0.0
    %1274 = vmatprep.subr.mxu0 0.0
    %1275 = vmatpush1.msra.mxu0 0.0
    %1276 = vmatprep.subr.mxu0 0.0
    %1277 = vmatpush1.msra.mxu0 0.0
    %1278 = vmatprep.subr.mxu0 0.0
    %1279 = vmatpush1.msra.mxu0 0.0
    %1280 = vmatprep.subr.mxu0 0.0
    %1281 = vmatpush1.msra.mxu0 0.0
    %1282 = vmatprep.subr.mxu0 0.0
    %1283 = vmatpush1.msra.mxu0 0.0
    %1284 = vmatprep.subr.mxu0 0.0
    %1285 = vmatpush1.msra.mxu0 0.0
    %1286 = vmatprep.subr.mxu0 0.0
    %1287 = vmatpush1.msra.mxu0 0.0
    %1288 = vmatprep.subr.mxu0 0.0
    %1289 = vmatpush1.msra.mxu0 0.0
    %1290 = vmatprep.subr.mxu0 0.0
    %1291 = vmatpush1.msra.mxu0 0.0
    %1292 = vmatprep.subr.mxu0 0.0
    %1293 = vmatpush1.msra.mxu0 0.0
    %1294 = vmatprep.subr.mxu0 0.0
    %1295 = vmatpush1.msra.mxu0 0.0
    %1296 = vmatprep.subr.mxu0 0.0
    %1297 = vmatpush1.msra.mxu0 0.0
    %1298 = vmatprep.subr.mxu0 0.0
    %1299 = vmatpush1.msra.mxu0 0.0
    %1300 = vmatprep.subr.mxu0 0.0
    %1301 = vmatpush1.msra.mxu0 0.0
    %1302 = vmatprep.mubr.f32.mxu0 0.0
    %1303 = vmatmul.mubr.f32.gmra.mrb[0].mxu0 %v1236
    %v1304 = vpop.f32.mrb[0].mxu0
    %v1305 = vadd.f32 %v1233, %v1304
    %v1306 = vpop.f32.mrb[0].mxu0
    %1307 = vdwg.mxu0
    %v1308 = vld [vmem:[#allocation20] sm:$0x1]
    %v1310 = vlaneseq
    %v1311 = vshrl.u32 %v1310, 7
    %v1312 = vsub.s32 0, %v1311
    %v1313 = vrot.slane %v1308, %v1312
    %v1315 = vmul.f32 %v1305, %v1313
    %v1316 = vld [vmem:[#allocation21] sm:$0xff]
    %v1317 = vld [vmem:[#allocation21 + $0x8] sm:$0xff]
    %v1318 = vld [vmem:[#allocation21 + $0x10] sm:$0xff]
    %v1319 = vld [vmem:[#allocation21 + $0x18] sm:$0xff]
    %v1321 = vsel %vm344, %v1315, 0
    %1323 = vmatprep.subr.mxu0 0.0
    %1324 = vmatpush1.msra.mxu0 %v1316
    %1325 = vmatprep.subr.mxu0 0.0
    %1326 = vmatpush1.msra.mxu0 %v1317
    %1327 = vmatprep.subr.mxu0 0.0
    %1328 = vmatpush1.msra.mxu0 %v1318
    %1329 = vmatprep.subr.mxu0 0.0
    %1330 = vmatpush1.msra.mxu0 %v1319
    %1331 = vmatprep.subr.mxu0 0.0
    %1332 = vmatpush1.msra.mxu0 0.0
    %1333 = vmatprep.subr.mxu0 0.0
    %1334 = vmatpush1.msra.mxu0 0.0
    %1335 = vmatprep.subr.mxu0 0.0
    %1336 = vmatpush1.msra.mxu0 0.0
    %1337 = vmatprep.subr.mxu0 0.0
    %1338 = vmatpush1.msra.mxu0 0.0
    %1339 = vmatprep.subr.mxu0 0.0
    %1340 = vmatpush1.msra.mxu0 0.0
    %1341 = vmatprep.subr.mxu0 0.0
    %1342 = vmatpush1.msra.mxu0 0.0
    %1343 = vmatprep.subr.mxu0 0.0
    %1344 = vmatpush1.msra.mxu0 0.0
    %1345 = vmatprep.subr.mxu0 0.0
    %1346 = vmatpush1.msra.mxu0 0.0
    %1347 = vmatprep.subr.mxu0 0.0
    %1348 = vmatpush1.msra.mxu0 0.0
    %1349 = vmatprep.subr.mxu0 0.0
    %1350 = vmatpush1.msra.mxu0 0.0
    %1351 = vmatprep.subr.mxu0 0.0
    %1352 = vmatpush1.msra.mxu0 0.0
    %1353 = vmatprep.subr.mxu0 0.0
    %1354 = vmatpush1.msra.mxu0 0.0
    %1355 = vmatprep.subr.mxu0 0.0
    %1356 = vmatpush1.msra.mxu0 0.0
    %1357 = vmatprep.subr.mxu0 0.0
    %1358 = vmatpush1.msra.mxu0 0.0
    %1359 = vmatprep.subr.mxu0 0.0
    %1360 = vmatpush1.msra.mxu0 0.0
    %1361 = vmatprep.subr.mxu0 0.0
    %1362 = vmatpush1.msra.mxu0 0.0
    %1363 = vmatprep.subr.mxu0 0.0
    %1364 = vmatpush1.msra.mxu0 0.0
    %1365 = vmatprep.subr.mxu0 0.0
    %1366 = vmatpush1.msra.mxu0 0.0
    %1367 = vmatprep.subr.mxu0 0.0
    %1368 = vmatpush1.msra.mxu0 0.0
    %1369 = vmatprep.subr.mxu0 0.0
    %1370 = vmatpush1.msra.mxu0 0.0
    %1371 = vmatprep.subr.mxu0 0.0
    %1372 = vmatpush1.msra.mxu0 0.0
    %1373 = vmatprep.subr.mxu0 0.0
    %1374 = vmatpush1.msra.mxu0 0.0
    %1375 = vmatprep.subr.mxu0 0.0
    %1376 = vmatpush1.msra.mxu0 0.0
    %1377 = vmatprep.subr.mxu0 0.0
    %1378 = vmatpush1.msra.mxu0 0.0
    %1379 = vmatprep.subr.mxu0 0.0
    %1380 = vmatpush1.msra.mxu0 0.0
    %1381 = vmatprep.subr.mxu0 0.0
    %1382 = vmatpush1.msra.mxu0 0.0
    %1383 = vmatprep.subr.mxu0 0.0
    %1384 = vmatpush1.msra.mxu0 0.0
    %1385 = vmatprep.subr.mxu0 0.0
    %1386 = vmatpush1.msra.mxu0 0.0
    %1387 = vmatprep.mubr.f32.mxu0 0.0
    %1388 = vmatmul.mubr.f32.gmra.mrb[0].mxu0 %v1321
    %v1389 = vpop.f32.mrb[0].mxu0
    %v1390 = vadd.f32 0.0, %v1389
    %v1391 = vpop.f32.mrb[0].mxu0
    %1392 = vdwg.mxu0
    %v1393 = vmul.f32 %v1390, 0.5
    %v1394 = vmul.f32 %v1390, 0.70710677
    %vm1395 = vcmp.ge.f32.partialorder %v1394, 0.0
    %v1396 = vsel %vm1395, 1.0, -1.0
    %v1397 = vand.u32 2147483647, %v1394
    %v1398 = vmul.f32 %v1397, 0.3275911
    %v1399 = vadd.f32 %v1398, 1.0
    %v1400 = vrcp.pop %v1399
    %v1401 = vmul.f32 1.0, %v1400
    %v1402 = vmul.f32 %v1401, 1.0614054
    %v1403 = vadd.f32 %v1402, -1.4531521
    %v1404 = vmul.f32 %v1403, %v1401
    %v1405 = vadd.f32 %v1404, 1.4214138
    %v1406 = vmul.f32 %v1405, %v1401
    %v1407 = vadd.f32 %v1406, -0.28449672
    %v1408 = vmul.f32 %v1407, %v1401
    %v1409 = vadd.f32 %v1408, 0.2548296
    %v1410 = vmul.f32 %v1409, %v1401
    %v1411 = vsub.f32 0.0, %v1397
    %v1412 = vmul.f32 %v1411, %v1397
    %v1413 = vmul.f32 %v1412, 1.442695
    %v1414 = vpow.pop %v1413
    %v1415 = vmul.f32 %v1410, %v1414
    %v1416 = vsub.f32 1.0, %v1415
    %v1417 = vmul.f32 %v1396, %v1416
    %v1418 = vadd.f32 %v1417, 1.0
    %v1419 = vmul.f32 %v1393, %v1418
    %v1420 = vld [vmem:[%s35] sm:$0xff]
    %v1421 = vld [vmem:[%s35 + $0x8] sm:$0xff]
    %v1422 = vld [vmem:[%s35 + $0x10] sm:$0xff]
    %v1423 = vld [vmem:[%s35 + $0x18] sm:$0xff]
    %v1424 = vld [vmem:[%s37] sm:$0x1]
    %v1426 = vlaneseq
    %v1427 = vshrl.u32 %v1426, 7
    %v1428 = vsub.s32 0, %v1427
    %v1429 = vrot.slane %v1424, %v1428
    %v1432 = vsel %vm344, %v1419, 0
    %1434 = vmatprep.subr.mxu0 0.0
    %1435 = vmatpush1.msra.mxu0 %v1420
    %1436 = vmatprep.subr.mxu0 0.0
    %1437 = vmatpush1.msra.mxu0 %v1421
    %1438 = vmatprep.subr.mxu0 0.0
    %1439 = vmatpush1.msra.mxu0 %v1422
    %1440 = vmatprep.subr.mxu0 0.0
    %1441 = vmatpush1.msra.mxu0 %v1423
    %1442 = vmatprep.subr.mxu0 0.0
    %1443 = vmatpush1.msra.mxu0 0.0
    %1444 = vmatprep.subr.mxu0 0.0
    %1445 = vmatpush1.msra.mxu0 0.0
    %1446 = vmatprep.subr.mxu0 0.0
    %1447 = vmatpush1.msra.mxu0 0.0
    %1448 = vmatprep.subr.mxu0 0.0
    %1449 = vmatpush1.msra.mxu0 0.0
    %1450 = vmatprep.subr.mxu0 0.0
    %1451 = vmatpush1.msra.mxu0 0.0
    %1452 = vmatprep.subr.mxu0 0.0
    %1453 = vmatpush1.msra.mxu0 0.0
    %1454 = vmatprep.subr.mxu0 0.0
    %1455 = vmatpush1.msra.mxu0 0.0
    %1456 = vmatprep.subr.mxu0 0.0
    %1457 = vmatpush1.msra.mxu0 0.0
    %1458 = vmatprep.subr.mxu0 0.0
    %1459 = vmatpush1.msra.mxu0 0.0
    %1460 = vmatprep.subr.mxu0 0.0
    %1461 = vmatpush1.msra.mxu0 0.0
    %1462 = vmatprep.subr.mxu0 0.0
    %1463 = vmatpush1.msra.mxu0 0.0
    %1464 = vmatprep.subr.mxu0 0.0
    %1465 = vmatpush1.msra.mxu0 0.0
    %1466 = vmatprep.subr.mxu0 0.0
    %1467 = vmatpush1.msra.mxu0 0.0
    %1468 = vmatprep.subr.mxu0 0.0
    %1469 = vmatpush1.msra.mxu0 0.0
    %1470 = vmatprep.subr.mxu0 0.0
    %1471 = vmatpush1.msra.mxu0 0.0
    %1472 = vmatprep.subr.mxu0 0.0
    %1473 = vmatpush1.msra.mxu0 0.0
    %1474 = vmatprep.subr.mxu0 0.0
    %1475 = vmatpush1.msra.mxu0 0.0
    %1476 = vmatprep.subr.mxu0 0.0
    %1477 = vmatpush1.msra.mxu0 0.0
    %1478 = vmatprep.subr.mxu0 0.0
    %1479 = vmatpush1.msra.mxu0 0.0
    %1480 = vmatprep.subr.mxu0 0.0
    %1481 = vmatpush1.msra.mxu0 0.0
    %1482 = vmatprep.subr.mxu0 0.0
    %1483 = vmatpush1.msra.mxu0 0.0
    %1484 = vmatprep.subr.mxu0 0.0
    %1485 = vmatpush1.msra.mxu0 0.0
    %1486 = vmatprep.subr.mxu0 0.0
    %1487 = vmatpush1.msra.mxu0 0.0
    %1488 = vmatprep.subr.mxu0 0.0
    %1489 = vmatpush1.msra.mxu0 0.0
    %1490 = vmatprep.subr.mxu0 0.0
    %1491 = vmatpush1.msra.mxu0 0.0
    %1492 = vmatprep.subr.mxu0 0.0
    %1493 = vmatpush1.msra.mxu0 0.0
    %1494 = vmatprep.subr.mxu0 0.0
    %1495 = vmatpush1.msra.mxu0 0.0
    %1496 = vmatprep.subr.mxu0 0.0
    %1497 = vmatpush1.msra.mxu0 0.0
    %1498 = vmatprep.mubr.f32.mxu0 0.0
    %1499 = vmatmul.mubr.f32.gmra.mrb[0].mxu0 %v1432
    %v1500 = vpop.f32.mrb[0].mxu0
    %v1501 = vadd.f32 %v1429, %v1500
    %v1502 = vpop.f32.mrb[0].mxu0
    %1503 = vdwg.mxu0
    %v1504 = vmax.f32 %v1501, 0.0
    %v1505 = vld [vmem:[%s39] sm:$0x1]
    %v1507 = vlaneseq
    %v1508 = vshrl.u32 %v1507, 7
    %v1509 = vsub.s32 0, %v1508
    %v1510 = vrot.slane %v1505, %v1509
    %v1512 = vmul.f32 %v1504, %v1510
    %v1513 = vld [vmem:[%s41] sm:$0xff]
    %v1514 = vld [vmem:[%s41 + $0x8] sm:$0xff]
    %v1516 = vsel %vm773, %v1512, 0
    %1518 = vmatprep.subr.mxu0 0.0
    %1519 = vmatpush1.msra.mxu0 %v1513
    %1520 = vmatprep.subr.mxu0 0.0
    %1521 = vmatpush1.msra.mxu0 %v1514
    %1522 = vmatprep.subr.mxu0 0.0
    %1523 = vmatpush1.msra.mxu0 0.0
    %1524 = vmatprep.subr.mxu0 0.0
    %1525 = vmatpush1.msra.mxu0 0.0
    %1526 = vmatprep.subr.mxu0 0.0
    %1527 = vmatpush1.msra.mxu0 0.0
    %1528 = vmatprep.subr.mxu0 0.0
    %1529 = vmatpush1.msra.mxu0 0.0
    %1530 = vmatprep.subr.mxu0 0.0
    %1531 = vmatpush1.msra.mxu0 0.0
    %1532 = vmatprep.subr.mxu0 0.0
    %1533 = vmatpush1.msra.mxu0 0.0
    %1534 = vmatprep.subr.mxu0 0.0
    %1535 = vmatpush1.msra.mxu0 0.0
    %1536 = vmatprep.subr.mxu0 0.0
    %1537 = vmatpush1.msra.mxu0 0.0
    %1538 = vmatprep.subr.mxu0 0.0
    %1539 = vmatpush1.msra.mxu0 0.0
    %1540 = vmatprep.subr.mxu0 0.0
    %1541 = vmatpush1.msra.mxu0 0.0
    %1542 = vmatprep.subr.mxu0 0.0
    %1543 = vmatpush1.msra.mxu0 0.0
    %1544 = vmatprep.subr.mxu0 0.0
    %1545 = vmatpush1.msra.mxu0 0.0
    %1546 = vmatprep.subr.mxu0 0.0
    %1547 = vmatpush1.msra.mxu0 0.0
    %1548 = vmatprep.subr.mxu0 0.0
    %1549 = vmatpush1.msra.mxu0 0.0
    %1550 = vmatprep.subr.mxu0 0.0
    %1551 = vmatpush1.msra.mxu0 0.0
    %1552 = vmatprep.subr.mxu0 0.0
    %1553 = vmatpush1.msra.mxu0 0.0
    %1554 = vmatprep.subr.mxu0 0.0
    %1555 = vmatpush1.msra.mxu0 0.0
    %1556 = vmatprep.subr.mxu0 0.0
    %1557 = vmatpush1.msra.mxu0 0.0
    %1558 = vmatprep.subr.mxu0 0.0
    %1559 = vmatpush1.msra.mxu0 0.0
    %1560 = vmatprep.subr.mxu0 0.0
    %1561 = vmatpush1.msra.mxu0 0.0
    %1562 = vmatprep.subr.mxu0 0.0
    %1563 = vmatpush1.msra.mxu0 0.0
    %1564 = vmatprep.subr.mxu0 0.0
    %1565 = vmatpush1.msra.mxu0 0.0
    %1566 = vmatprep.subr.mxu0 0.0
    %1567 = vmatpush1.msra.mxu0 0.0
    %1568 = vmatprep.subr.mxu0 0.0
    %1569 = vmatpush1.msra.mxu0 0.0
    %1570 = vmatprep.subr.mxu0 0.0
    %1571 = vmatpush1.msra.mxu0 0.0
    %1572 = vmatprep.subr.mxu0 0.0
    %1573 = vmatpush1.msra.mxu0 0.0
    %1574 = vmatprep.subr.mxu0 0.0
    %1575 = vmatpush1.msra.mxu0 0.0
    %1576 = vmatprep.subr.mxu0 0.0
    %1577 = vmatpush1.msra.mxu0 0.0
    %1578 = vmatprep.subr.mxu0 0.0
    %1579 = vmatpush1.msra.mxu0 0.0
    %1580 = vmatprep.subr.mxu0 0.0
    %1581 = vmatpush1.msra.mxu0 0.0
    %1582 = vmatprep.mubr.f32.mxu0 0.0
    %1583 = vmatmul.mubr.f32.gmra.mrb[0].mxu0 %v1516
    %v1584 = vpop.f32.mrb[0].mxu0
    %v1585 = vadd.f32 0.0, %v1584
    %v1586 = vpop.f32.mrb[0].mxu0
    %1587 = vdwg.mxu0
    %v1588 = vmul.f32 %v1585, 0.5
    %v1589 = vmul.f32 %v1585, 0.70710677
    %vm1590 = vcmp.ge.f32.partialorder %v1589, 0.0
    %v1591 = vsel %vm1590, 1.0, -1.0
    %v1592 = vand.u32 2147483647, %v1589
    %v1593 = vmul.f32 %v1592, 0.3275911
    %v1594 = vadd.f32 %v1593, 1.0
    %v1595 = vrcp.pop %v1594
    %v1596 = vmul.f32 1.0, %v1595
    %v1597 = vmul.f32 %v1596, 1.0614054
    %v1598 = vadd.f32 %v1597, -1.4531521
    %v1599 = vmul.f32 %v1598, %v1596
    %v1600 = vadd.f32 %v1599, 1.4214138
    %v1601 = vmul.f32 %v1600, %v1596
    %v1602 = vadd.f32 %v1601, -0.28449672
    %v1603 = vmul.f32 %v1602, %v1596
    %v1604 = vadd.f32 %v1603, 0.2548296
    %v1605 = vmul.f32 %v1604, %v1596
    %v1606 = vsub.f32 0.0, %v1592
    %v1607 = vmul.f32 %v1606, %v1592
    %v1608 = vmul.f32 %v1607, 1.442695
    %v1609 = vpow.pop %v1608
    %v1610 = vmul.f32 %v1605, %v1609
    %v1611 = vsub.f32 1.0, %v1610
    %v1612 = vmul.f32 %v1591, %v1611
    %v1613 = vadd.f32 %v1612, 1.0
    %v1614 = vmul.f32 %v1588, %v1613
    %v1615 = vld [vmem:[#allocation23] sm:$0xff]
    %v1616 = vld [vmem:[#allocation23 + $0x8] sm:$0xff]
    %v1617 = vld [vmem:[#allocation24] sm:$0x1]
    %v1619 = vlaneseq
    %v1620 = vshrl.u32 %v1619, 7
    %v1621 = vsub.s32 0, %v1620
    %v1622 = vrot.slane %v1617, %v1621
    %v1625 = vsel %vm773, %v1614, 0
    %1627 = vmatprep.subr.mxu0 0.0
    %1628 = vmatpush1.msra.mxu0 %v1615
    %1629 = vmatprep.subr.mxu0 0.0
    %1630 = vmatpush1.msra.mxu0 %v1616
    %1631 = vmatprep.subr.mxu0 0.0
    %1632 = vmatpush1.msra.mxu0 0.0
    %1633 = vmatprep.subr.mxu0 0.0
    %1634 = vmatpush1.msra.mxu0 0.0
    %1635 = vmatprep.subr.mxu0 0.0
    %1636 = vmatpush1.msra.mxu0 0.0
    %1637 = vmatprep.subr.mxu0 0.0
    %1638 = vmatpush1.msra.mxu0 0.0
    %1639 = vmatprep.subr.mxu0 0.0
    %1640 = vmatpush1.msra.mxu0 0.0
    %1641 = vmatprep.subr.mxu0 0.0
    %1642 = vmatpush1.msra.mxu0 0.0
    %1643 = vmatprep.subr.mxu0 0.0
    %1644 = vmatpush1.msra.mxu0 0.0
    %1645 = vmatprep.subr.mxu0 0.0
    %1646 = vmatpush1.msra.mxu0 0.0
    %1647 = vmatprep.subr.mxu0 0.0
    %1648 = vmatpush1.msra.mxu0 0.0
    %1649 = vmatprep.subr.mxu0 0.0
    %1650 = vmatpush1.msra.mxu0 0.0
    %1651 = vmatprep.subr.mxu0 0.0
    %1652 = vmatpush1.msra.mxu0 0.0
    %1653 = vmatprep.subr.mxu0 0.0
    %1654 = vmatpush1.msra.mxu0 0.0
    %1655 = vmatprep.subr.mxu0 0.0
    %1656 = vmatpush1.msra.mxu0 0.0
    %1657 = vmatprep.subr.mxu0 0.0
    %1658 = vmatpush1.msra.mxu0 0.0
    %1659 = vmatprep.subr.mxu0 0.0
    %1660 = vmatpush1.msra.mxu0 0.0
    %1661 = vmatprep.subr.mxu0 0.0
    %1662 = vmatpush1.msra.mxu0 0.0
    %1663 = vmatprep.subr.mxu0 0.0
    %1664 = vmatpush1.msra.mxu0 0.0
    %1665 = vmatprep.subr.mxu0 0.0
    %1666 = vmatpush1.msra.mxu0 0.0
    %1667 = vmatprep.subr.mxu0 0.0
    %1668 = vmatpush1.msra.mxu0 0.0
    %1669 = vmatprep.subr.mxu0 0.0
    %1670 = vmatpush1.msra.mxu0 0.0
    %1671 = vmatprep.subr.mxu0 0.0
    %1672 = vmatpush1.msra.mxu0 0.0
    %1673 = vmatprep.subr.mxu0 0.0
    %1674 = vmatpush1.msra.mxu0 0.0
    %1675 = vmatprep.subr.mxu0 0.0
    %1676 = vmatpush1.msra.mxu0 0.0
    %1677 = vmatprep.subr.mxu0 0.0
    %1678 = vmatpush1.msra.mxu0 0.0
    %1679 = vmatprep.subr.mxu0 0.0
    %1680 = vmatpush1.msra.mxu0 0.0
    %1681 = vmatprep.subr.mxu0 0.0
    %1682 = vmatpush1.msra.mxu0 0.0
    %1683 = vmatprep.subr.mxu0 0.0
    %1684 = vmatpush1.msra.mxu0 0.0
    %1685 = vmatprep.subr.mxu0 0.0
    %1686 = vmatpush1.msra.mxu0 0.0
    %1687 = vmatprep.subr.mxu0 0.0
    %1688 = vmatpush1.msra.mxu0 0.0
    %1689 = vmatprep.subr.mxu0 0.0
    %1690 = vmatpush1.msra.mxu0 0.0
    %1691 = vmatprep.mubr.f32.mxu0 0.0
    %1692 = vmatmul.mubr.f32.gmra.mrb[0].mxu0 %v1625
    %v1693 = vpop.f32.mrb[0].mxu0
    %v1694 = vadd.f32 %v1622, %v1693
    %v1695 = vpop.f32.mrb[0].mxu0
    %1696 = vdwg.mxu0
    %v1697 = vld [vmem:[%s47] sm:$0xff]
    %v1698 = vld [vmem:[%s47 + $0x8] sm:$0xff]
    %v1699 = vld [vmem:[#allocation26] sm:$0x1]
    %v1701 = vlaneseq
    %v1702 = vshrl.u32 %v1701, 7
    %v1703 = vsub.s32 0, %v1702
    %v1704 = vrot.slane %v1699, %v1703
    %1706 = vmatprep.subr.mxu0 0.0
    %1707 = vmatpush1.msra.mxu0 %v1697
    %1708 = vmatprep.subr.mxu0 0.0
    %1709 = vmatpush1.msra.mxu0 %v1698
    %1710 = vmatprep.subr.mxu0 0.0
    %1711 = vmatpush1.msra.mxu0 0.0
    %1712 = vmatprep.subr.mxu0 0.0
    %1713 = vmatpush1.msra.mxu0 0.0
    %1714 = vmatprep.subr.mxu0 0.0
    %1715 = vmatpush1.msra.mxu0 0.0
    %1716 = vmatprep.subr.mxu0 0.0
    %1717 = vmatpush1.msra.mxu0 0.0
    %1718 = vmatprep.subr.mxu0 0.0
    %1719 = vmatpush1.msra.mxu0 0.0
    %1720 = vmatprep.subr.mxu0 0.0
    %1721 = vmatpush1.msra.mxu0 0.0
    %1722 = vmatprep.subr.mxu0 0.0
    %1723 = vmatpush1.msra.mxu0 0.0
    %1724 = vmatprep.subr.mxu0 0.0
    %1725 = vmatpush1.msra.mxu0 0.0
    %1726 = vmatprep.subr.mxu0 0.0
    %1727 = vmatpush1.msra.mxu0 0.0
    %1728 = vmatprep.subr.mxu0 0.0
    %1729 = vmatpush1.msra.mxu0 0.0
    %1730 = vmatprep.subr.mxu0 0.0
    %1731 = vmatpush1.msra.mxu0 0.0
    %1732 = vmatprep.subr.mxu0 0.0
    %1733 = vmatpush1.msra.mxu0 0.0
    %1734 = vmatprep.subr.mxu0 0.0
    %1735 = vmatpush1.msra.mxu0 0.0
    %1736 = vmatprep.subr.mxu0 0.0
    %1737 = vmatpush1.msra.mxu0 0.0
    %1738 = vmatprep.subr.mxu0 0.0
    %1739 = vmatpush1.msra.mxu0 0.0
    %1740 = vmatprep.subr.mxu0 0.0
    %1741 = vmatpush1.msra.mxu0 0.0
    %1742 = vmatprep.subr.mxu0 0.0
    %1743 = vmatpush1.msra.mxu0 0.0
    %1744 = vmatprep.subr.mxu0 0.0
    %1745 = vmatpush1.msra.mxu0 0.0
    %1746 = vmatprep.subr.mxu0 0.0
    %1747 = vmatpush1.msra.mxu0 0.0
    %1748 = vmatprep.subr.mxu0 0.0
    %1749 = vmatpush1.msra.mxu0 0.0
    %1750 = vmatprep.subr.mxu0 0.0
    %1751 = vmatpush1.msra.mxu0 0.0
    %1752 = vmatprep.subr.mxu0 0.0
    %1753 = vmatpush1.msra.mxu0 0.0
    %1754 = vmatprep.subr.mxu0 0.0
    %1755 = vmatpush1.msra.mxu0 0.0
    %1756 = vmatprep.subr.mxu0 0.0
    %1757 = vmatpush1.msra.mxu0 0.0
    %1758 = vmatprep.subr.mxu0 0.0
    %1759 = vmatpush1.msra.mxu0 0.0
    %1760 = vmatprep.subr.mxu0 0.0
    %1761 = vmatpush1.msra.mxu0 0.0
    %1762 = vmatprep.subr.mxu0 0.0
    %1763 = vmatpush1.msra.mxu0 0.0
    %1764 = vmatprep.subr.mxu0 0.0
    %1765 = vmatpush1.msra.mxu0 0.0
    %1766 = vmatprep.subr.mxu0 0.0
    %1767 = vmatpush1.msra.mxu0 0.0
    %1768 = vmatprep.subr.mxu0 0.0
    %1769 = vmatpush1.msra.mxu0 0.0
    %1770 = vmatprep.mubr.f32.mxu0 0.0
    %1771 = vmatmul.mubr.f32.gmra.mrb[0].mxu0 %v1625
    %v1772 = vpop.f32.mrb[0].mxu0
    %v1773 = vadd.f32 %v1704, %v1772
    %v1774 = vpop.f32.mrb[0].mxu0
    %1775 = vdwg.mxu0
    %v1776 = vld [vmem:[#allocation27] sm:$0xff]
    %v1777 = vld [vmem:[#allocation27 + $0x8] sm:$0xff]
    %v1778 = vld [vmem:[#allocation29] sm:$0x1]
    %v1780 = vlaneseq
    %v1781 = vshrl.u32 %v1780, 7
    %v1782 = vsub.s32 0, %v1781
    %v1783 = vrot.slane %v1778, %v1782
    %1785 = vmatprep.subr.mxu0 0.0
    %1786 = vmatpush1.msra.mxu0 %v1776
    %1787 = vmatprep.subr.mxu0 0.0
    %1788 = vmatpush1.msra.mxu0 %v1777
    %1789 = vmatprep.subr.mxu0 0.0
    %1790 = vmatpush1.msra.mxu0 0.0
    %1791 = vmatprep.subr.mxu0 0.0
    %1792 = vmatpush1.msra.mxu0 0.0
    %1793 = vmatprep.subr.mxu0 0.0
    %1794 = vmatpush1.msra.mxu0 0.0
    %1795 = vmatprep.subr.mxu0 0.0
    %1796 = vmatpush1.msra.mxu0 0.0
    %1797 = vmatprep.subr.mxu0 0.0
    %1798 = vmatpush1.msra.mxu0 0.0
    %1799 = vmatprep.subr.mxu0 0.0
    %1800 = vmatpush1.msra.mxu0 0.0
    %1801 = vmatprep.subr.mxu0 0.0
    %1802 = vmatpush1.msra.mxu0 0.0
    %1803 = vmatprep.subr.mxu0 0.0
    %1804 = vmatpush1.msra.mxu0 0.0
    %1805 = vmatprep.subr.mxu0 0.0
    %1806 = vmatpush1.msra.mxu0 0.0
    %1807 = vmatprep.subr.mxu0 0.0
    %1808 = vmatpush1.msra.mxu0 0.0
    %1809 = vmatprep.subr.mxu0 0.0
    %1810 = vmatpush1.msra.mxu0 0.0
    %1811 = vmatprep.subr.mxu0 0.0
    %1812 = vmatpush1.msra.mxu0 0.0
    %1813 = vmatprep.subr.mxu0 0.0
    %1814 = vmatpush1.msra.mxu0 0.0
    %1815 = vmatprep.subr.mxu0 0.0
    %1816 = vmatpush1.msra.mxu0 0.0
    %1817 = vmatprep.subr.mxu0 0.0
    %1818 = vmatpush1.msra.mxu0 0.0
    %1819 = vmatprep.subr.mxu0 0.0
    %1820 = vmatpush1.msra.mxu0 0.0
    %1821 = vmatprep.subr.mxu0 0.0
    %1822 = vmatpush1.msra.mxu0 0.0
    %1823 = vmatprep.subr.mxu0 0.0
    %1824 = vmatpush1.msra.mxu0 0.0
    %1825 = vmatprep.subr.mxu0 0.0
    %1826 = vmatpush1.msra.mxu0 0.0
    %1827 = vmatprep.subr.mxu0 0.0
    %1828 = vmatpush1.msra.mxu0 0.0
    %1829 = vmatprep.subr.mxu0 0.0
    %1830 = vmatpush1.msra.mxu0 0.0
    %1831 = vmatprep.subr.mxu0 0.0
    %1832 = vmatpush1.msra.mxu0 0.0
    %1833 = vmatprep.subr.mxu0 0.0
    %1834 = vmatpush1.msra.mxu0 0.0
    %1835 = vmatprep.subr.mxu0 0.0
    %1836 = vmatpush1.msra.mxu0 0.0
    %1837 = vmatprep.subr.mxu0 0.0
    %1838 = vmatpush1.msra.mxu0 0.0
    %1839 = vmatprep.subr.mxu0 0.0
    %1840 = vmatpush1.msra.mxu0 0.0
    %1841 = vmatprep.subr.mxu0 0.0
    %1842 = vmatpush1.msra.mxu0 0.0
    %1843 = vmatprep.subr.mxu0 0.0
    %1844 = vmatpush1.msra.mxu0 0.0
    %1845 = vmatprep.subr.mxu0 0.0
    %1846 = vmatpush1.msra.mxu0 0.0
    %1847 = vmatprep.subr.mxu0 0.0
    %1848 = vmatpush1.msra.mxu0 0.0
    %1849 = vmatprep.mubr.f32.mxu0 0.0
    %1850 = vmatmul.mubr.f32.gmra.mrb[0].mxu0 %v1625
    %v1851 = vpop.f32.mrb[0].mxu0
    %v1852 = vadd.f32 %v1783, %v1851
    %v1853 = vpop.f32.mrb[0].mxu0
    %1854 = vdwg.mxu0
    %v1855 = vadd.s32 %v910, 8
    %vm1856 = vcmp.eq.s32.totalorder %v910, %v912
    %vm1857 = vcmp.eq.s32.totalorder %v1855, %v912
    %v1858 = vsel %vm1856, 1.0, 0.0
    %v1859 = vsel %vm1857, 1.0, 0.0
    %v1861 = vsel %vm773, %v1694, 0
    %1863 = vmatprep.subr.mxu0 0.0
    %1864 = vmatpush1.msra.mxu0 %v1858
    %1865 = vmatprep.subr.mxu0 0.0
    %1866 = vmatpush1.msra.mxu0 %v1859
    %1867 = vmatprep.subr.mxu0 0.0
    %1868 = vmatpush1.msra.mxu0 0.0
    %1869 = vmatprep.subr.mxu0 0.0
    %1870 = vmatpush1.msra.mxu0 0.0
    %1871 = vmatprep.subr.mxu0 0.0
    %1872 = vmatpush1.msra.mxu0 0.0
    %1873 = vmatprep.subr.mxu0 0.0
    %1874 = vmatpush1.msra.mxu0 0.0
    %1875 = vmatprep.subr.mxu0 0.0
    %1876 = vmatpush1.msra.mxu0 0.0
    %1877 = vmatprep.subr.mxu0 0.0
    %1878 = vmatpush1.msra.mxu0 0.0
    %1879 = vmatprep.subr.mxu0 0.0
    %1880 = vmatpush1.msra.mxu0 0.0
    %1881 = vmatprep.subr.mxu0 0.0
    %1882 = vmatpush1.msra.mxu0 0.0
    %1883 = vmatprep.subr.mxu0 0.0
    %1884 = vmatpush1.msra.mxu0 0.0
    %1885 = vmatprep.subr.mxu0 0.0
    %1886 = vmatpush1.msra.mxu0 0.0
    %1887 = vmatprep.subr.mxu0 0.0
    %1888 = vmatpush1.msra.mxu0 0.0
    %1889 = vmatprep.subr.mxu0 0.0
    %1890 = vmatpush1.msra.mxu0 0.0
    %1891 = vmatprep.subr.mxu0 0.0
    %1892 = vmatpush1.msra.mxu0 0.0
    %1893 = vmatprep.subr.mxu0 0.0
    %1894 = vmatpush1.msra.mxu0 0.0
    %1895 = vmatprep.subr.mxu0 0.0
    %1896 = vmatpush1.msra.mxu0 0.0
    %1897 = vmatprep.subr.mxu0 0.0
    %1898 = vmatpush1.msra.mxu0 0.0
    %1899 = vmatprep.subr.mxu0 0.0
    %1900 = vmatpush1.msra.mxu0 0.0
    %1901 = vmatprep.subr.mxu0 0.0
    %1902 = vmatpush1.msra.mxu0 0.0
    %1903 = vmatprep.subr.mxu0 0.0
    %1904 = vmatpush1.msra.mxu0 0.0
    %1905 = vmatprep.subr.mxu0 0.0
    %1906 = vmatpush1.msra.mxu0 0.0
    %1907 = vmatprep.subr.mxu0 0.0
    %1908 = vmatpush1.msra.mxu0 0.0
    %1909 = vmatprep.subr.mxu0 0.0
    %1910 = vmatpush1.msra.mxu0 0.0
    %1911 = vmatprep.subr.mxu0 0.0
    %1912 = vmatpush1.msra.mxu0 0.0
    %1913 = vmatprep.subr.mxu0 0.0
    %1914 = vmatpush1.msra.mxu0 0.0
    %1915 = vmatprep.subr.mxu0 0.0
    %1916 = vmatpush1.msra.mxu0 0.0
    %1917 = vmatprep.subr.mxu0 0.0
    %1918 = vmatpush1.msra.mxu0 0.0
    %1919 = vmatprep.subr.mxu0 0.0
    %1920 = vmatpush1.msra.mxu0 0.0
    %1921 = vmatprep.subr.mxu0 0.0
    %1922 = vmatpush1.msra.mxu0 0.0
    %1923 = vmatprep.subr.mxu0 0.0
    %1924 = vmatpush1.msra.mxu0 0.0
    %1925 = vmatprep.subr.mxu0 0.0
    %1926 = vmatpush1.msra.mxu0 0.0
    %1927 = vmatprep.mubr.f32.mxu0 0.0
    %1928 = vmatmul.mubr.f32.gmra.mrb[0].mxu0 %v1861
    %v1929 = vpop.f32.mrb[0].mxu0
    %v1930 = vadd.f32 0.0, %v1929
    %v1931 = vpop.f32.mrb[0].mxu0
    %1932 = vdwg.mxu0
    %vm1933 = vcmask 31744
    %1934 = vst.msk [vmem:[#allocation2] sm:$0xff] %vm1933, %v1930
    %v1936 = vsel %vm773, %v1773, 0
    %1938 = vmatprep.subr.mxu0 0.0
    %1939 = vmatpush1.msra.mxu0 %v1858
    %1940 = vmatprep.subr.mxu0 0.0
    %1941 = vmatpush1.msra.mxu0 %v1859
    %1942 = vmatprep.subr.mxu0 0.0
    %1943 = vmatpush1.msra.mxu0 0.0
    %1944 = vmatprep.subr.mxu0 0.0
    %1945 = vmatpush1.msra.mxu0 0.0
    %1946 = vmatprep.subr.mxu0 0.0
    %1947 = vmatpush1.msra.mxu0 0.0
    %1948 = vmatprep.subr.mxu0 0.0
    %1949 = vmatpush1.msra.mxu0 0.0
    %1950 = vmatprep.subr.mxu0 0.0
    %1951 = vmatpush1.msra.mxu0 0.0
    %1952 = vmatprep.subr.mxu0 0.0
    %1953 = vmatpush1.msra.mxu0 0.0
    %1954 = vmatprep.subr.mxu0 0.0
    %1955 = vmatpush1.msra.mxu0 0.0
    %1956 = vmatprep.subr.mxu0 0.0
    %1957 = vmatpush1.msra.mxu0 0.0
    %1958 = vmatprep.subr.mxu0 0.0
    %1959 = vmatpush1.msra.mxu0 0.0
    %1960 = vmatprep.subr.mxu0 0.0
    %1961 = vmatpush1.msra.mxu0 0.0
    %1962 = vmatprep.subr.mxu0 0.0
    %1963 = vmatpush1.msra.mxu0 0.0
    %1964 = vmatprep.subr.mxu0 0.0
    %1965 = vmatpush1.msra.mxu0 0.0
    %1966 = vmatprep.subr.mxu0 0.0
    %1967 = vmatpush1.msra.mxu0 0.0
    %1968 = vmatprep.subr.mxu0 0.0
    %1969 = vmatpush1.msra.mxu0 0.0
    %1970 = vmatprep.subr.mxu0 0.0
    %1971 = vmatpush1.msra.mxu0 0.0
    %1972 = vmatprep.subr.mxu0 0.0
    %1973 = vmatpush1.msra.mxu0 0.0
    %1974 = vmatprep.subr.mxu0 0.0
    %1975 = vmatpush1.msra.mxu0 0.0
    %1976 = vmatprep.subr.mxu0 0.0
    %1977 = vmatpush1.msra.mxu0 0.0
    %1978 = vmatprep.subr.mxu0 0.0
    %1979 = vmatpush1.msra.mxu0 0.0
    %1980 = vmatprep.subr.mxu0 0.0
    %1981 = vmatpush1.msra.mxu0 0.0
    %1982 = vmatprep.subr.mxu0 0.0
    %1983 = vmatpush1.msra.mxu0 0.0
    %1984 = vmatprep.subr.mxu0 0.0
    %1985 = vmatpush1.msra.mxu0 0.0
    %1986 = vmatprep.subr.mxu0 0.0
    %1987 = vmatpush1.msra.mxu0 0.0
    %1988 = vmatprep.subr.mxu0 0.0
    %1989 = vmatpush1.msra.mxu0 0.0
    %1990 = vmatprep.subr.mxu0 0.0
    %1991 = vmatpush1.msra.mxu0 0.0
    %1992 = vmatprep.subr.mxu0 0.0
    %1993 = vmatpush1.msra.mxu0 0.0
    %1994 = vmatprep.subr.mxu0 0.0
    %1995 = vmatpush1.msra.mxu0 0.0
    %1996 = vmatprep.subr.mxu0 0.0
    %1997 = vmatpush1.msra.mxu0 0.0
    %1998 = vmatprep.subr.mxu0 0.0
    %1999 = vmatpush1.msra.mxu0 0.0
    %2000 = vmatprep.subr.mxu0 0.0
    %2001 = vmatpush1.msra.mxu0 0.0
    %2002 = vmatprep.mubr.f32.mxu0 0.0
    %2003 = vmatmul.mubr.f32.gmra.mrb[0].mxu0 %v1936
    %v2004 = vpop.f32.mrb[0].mxu0
    %v2005 = vadd.f32 0.0, %v2004
    %v2006 = vpop.f32.mrb[0].mxu0
    %2007 = vdwg.mxu0
    %s2008 = scalar_lea.vmem [#allocation2], 32
    %2009 = vst.msk [vmem:[%s2008] sm:$0xff] %vm1933, %v2005
    %v2011 = vsel %vm773, %v1852, 0
    %2013 = vmatprep.subr.mxu0 0.0
    %2014 = vmatpush1.msra.mxu0 %v1858
    %2015 = vmatprep.subr.mxu0 0.0
    %2016 = vmatpush1.msra.mxu0 %v1859
    %2017 = vmatprep.subr.mxu0 0.0
    %2018 = vmatpush1.msra.mxu0 0.0
    %2019 = vmatprep.subr.mxu0 0.0
    %2020 = vmatpush1.msra.mxu0 0.0
    %2021 = vmatprep.subr.mxu0 0.0
    %2022 = vmatpush1.msra.mxu0 0.0
    %2023 = vmatprep.subr.mxu0 0.0
    %2024 = vmatpush1.msra.mxu0 0.0
    %2025 = vmatprep.subr.mxu0 0.0
    %2026 = vmatpush1.msra.mxu0 0.0
    %2027 = vmatprep.subr.mxu0 0.0
    %2028 = vmatpush1.msra.mxu0 0.0
    %2029 = vmatprep.subr.mxu0 0.0
    %2030 = vmatpush1.msra.mxu0 0.0
    %2031 = vmatprep.subr.mxu0 0.0
    %2032 = vmatpush1.msra.mxu0 0.0
    %2033 = vmatprep.subr.mxu0 0.0
    %2034 = vmatpush1.msra.mxu0 0.0
    %2035 = vmatprep.subr.mxu0 0.0
    %2036 = vmatpush1.msra.mxu0 0.0
    %2037 = vmatprep.subr.mxu0 0.0
    %2038 = vmatpush1.msra.mxu0 0.0
    %2039 = vmatprep.subr.mxu0 0.0
    %2040 = vmatpush1.msra.mxu0 0.0
    %2041 = vmatprep.subr.mxu0 0.0
    %2042 = vmatpush1.msra.mxu0 0.0
    %2043 = vmatprep.subr.mxu0 0.0
    %2044 = vmatpush1.msra.mxu0 0.0
    %2045 = vmatprep.subr.mxu0 0.0
    %2046 = vmatpush1.msra.mxu0 0.0
    %2047 = vmatprep.subr.mxu0 0.0
    %2048 = vmatpush1.msra.mxu0 0.0
    %2049 = vmatprep.subr.mxu0 0.0
    %2050 = vmatpush1.msra.mxu0 0.0
    %2051 = vmatprep.subr.mxu0 0.0
    %2052 = vmatpush1.msra.mxu0 0.0
    %2053 = vmatprep.subr.mxu0 0.0
    %2054 = vmatpush1.msra.mxu0 0.0
    %2055 = vmatprep.subr.mxu0 0.0
    %2056 = vmatpush1.msra.mxu0 0.0
    %2057 = vmatprep.subr.mxu0 0.0
    %2058 = vmatpush1.msra.mxu0 0.0
    %2059 = vmatprep.subr.mxu0 0.0
    %2060 = vmatpush1.msra.mxu0 0.0
    %2061 = vmatprep.subr.mxu0 0.0
    %2062 = vmatpush1.msra.mxu0 0.0
    %2063 = vmatprep.subr.mxu0 0.0
    %2064 = vmatpush1.msra.mxu0 0.0
    %2065 = vmatprep.subr.mxu0 0.0
    %2066 = vmatpush1.msra.mxu0 0.0
    %2067 = vmatprep.subr.mxu0 0.0
    %2068 = vmatpush1.msra.mxu0 0.0
    %2069 = vmatprep.subr.mxu0 0.0
    %2070 = vmatpush1.msra.mxu0 0.0
    %2071 = vmatprep.subr.mxu0 0.0
    %2072 = vmatpush1.msra.mxu0 0.0
    %2073 = vmatprep.subr.mxu0 0.0
    %2074 = vmatpush1.msra.mxu0 0.0
    %2075 = vmatprep.subr.mxu0 0.0
    %2076 = vmatpush1.msra.mxu0 0.0
    %2077 = vmatprep.mubr.f32.mxu0 0.0
    %2078 = vmatmul.mubr.f32.gmra.mrb[0].mxu0 %v2011
    %v2079 = vpop.f32.mrb[0].mxu0
    %v2080 = vadd.f32 0.0, %v2079
    %v2081 = vpop.f32.mrb[0].mxu0
    %2082 = vdwg.mxu0
    %s2083 = scalar_lea.vmem [#allocation2], 64
    %2084 = vst.msk [vmem:[%s2083] sm:$0xff] %vm1933, %v2080
    %v2085 = vadd.s32 %v912, 4
    %vm2086 = vcmp.eq.s32.totalorder %v910, %v2085
    %vm2087 = vcmp.eq.s32.totalorder %v1855, %v2085
    %v2088 = vsel %vm2086, 1.0, 0.0
    %v2089 = vsel %vm2087, 1.0, 0.0
    %2090 = vmatprep.subr.mxu0 0.0
    %2091 = vmatpush1.msra.mxu0 %v2088
    %2092 = vmatprep.subr.mxu0 0.0
    %2093 = vmatpush1.msra.mxu0 %v2089
    %2094 = vmatprep.subr.mxu0 0.0
    %2095 = vmatpush1.msra.mxu0 0.0
    %2096 = vmatprep.subr.mxu0 0.0
    %2097 = vmatpush1.msra.mxu0 0.0
    %2098 = vmatprep.subr.mxu0 0.0
    %2099 = vmatpush1.msra.mxu0 0.0
    %2100 = vmatprep.subr.mxu0 0.0
    %2101 = vmatpush1.msra.mxu0 0.0
    %2102 = vmatprep.subr.mxu0 0.0
    %2103 = vmatpush1.msra.mxu0 0.0
    %2104 = vmatprep.subr.mxu0 0.0
    %2105 = vmatpush1.msra.mxu0 0.0
    %2106 = vmatprep.subr.mxu0 0.0
    %2107 = vmatpush1.msra.mxu0 0.0
    %2108 = vmatprep.subr.mxu0 0.0
    %2109 = vmatpush1.msra.mxu0 0.0
    %2110 = vmatprep.subr.mxu0 0.0
    %2111 = vmatpush1.msra.mxu0 0.0
    %2112 = vmatprep.subr.mxu0 0.0
    %2113 = vmatpush1.msra.mxu0 0.0
    %2114 = vmatprep.subr.mxu0 0.0
    %2115 = vmatpush1.msra.mxu0 0.0
    %2116 = vmatprep.subr.mxu0 0.0
    %2117 = vmatpush1.msra.mxu0 0.0
    %2118 = vmatprep.subr.mxu0 0.0
    %2119 = vmatpush1.msra.mxu0 0.0
    %2120 = vmatprep.subr.mxu0 0.0
    %2121 = vmatpush1.msra.mxu0 0.0
    %2122 = vmatprep.subr.mxu0 0.0
    %2123 = vmatpush1.msra.mxu0 0.0
    %2124 = vmatprep.subr.mxu0 0.0
    %2125 = vmatpush1.msra.mxu0 0.0
    %2126 = vmatprep.subr.mxu0 0.0
    %2127 = vmatpush1.msra.mxu0 0.0
    %2128 = vmatprep.subr.mxu0 0.0
    %2129 = vmatpush1.msra.mxu0 0.0
    %2130 = vmatprep.subr.mxu0 0.0
    %2131 = vmatpush1.msra.mxu0 0.0
    %2132 = vmatprep.subr.mxu0 0.0
    %2133 = vmatpush1.msra.mxu0 0.0
    %2134 = vmatprep.subr.mxu0 0.0
    %2135 = vmatpush1.msra.mxu0 0.0
    %2136 = vmatprep.subr.mxu0 0.0
    %2137 = vmatpush1.msra.mxu0 0.0
    %2138 = vmatprep.subr.mxu0 0.0
    %2139 = vmatpush1.msra.mxu0 0.0
    %2140 = vmatprep.subr.mxu0 0.0
    %2141 = vmatpush1.msra.mxu0 0.0
    %2142 = vmatprep.subr.mxu0 0.0
    %2143 = vmatpush1.msra.mxu0 0.0
    %2144 = vmatprep.subr.mxu0 0.0
    %2145 = vmatpush1.msra.mxu0 0.0
    %2146 = vmatprep.subr.mxu0 0.0
    %2147 = vmatpush1.msra.mxu0 0.0
    %2148 = vmatprep.subr.mxu0 0.0
    %2149 = vmatpush1.msra.mxu0 0.0
    %2150 = vmatprep.subr.mxu0 0.0
    %2151 = vmatpush1.msra.mxu0 0.0
    %2152 = vmatprep.subr.mxu0 0.0
    %2153 = vmatpush1.msra.mxu0 0.0
    %2154 = vmatprep.mubr.f32.mxu0 0.0
    %2155 = vmatmul.mubr.f32.gmra.mrb[0].mxu0 %v1861
    %v2156 = vpop.f32.mrb[0].mxu0
    %v2157 = vadd.f32 0.0, %v2156
    %v2158 = vpop.f32.mrb[0].mxu0
    %2159 = vdwg.mxu0
    %2160 = vst.msk [vmem:[#allocation2 + $0x8] sm:$0xff] %vm1933, %v2157
    %2161 = vmatprep.subr.mxu0 0.0
    %2162 = vmatpush1.msra.mxu0 %v2088
    %2163 = vmatprep.subr.mxu0 0.0
    %2164 = vmatpush1.msra.mxu0 %v2089
    %2165 = vmatprep.subr.mxu0 0.0
    %2166 = vmatpush1.msra.mxu0 0.0
    %2167 = vmatprep.subr.mxu0 0.0
    %2168 = vmatpush1.msra.mxu0 0.0
    %2169 = vmatprep.subr.mxu0 0.0
    %2170 = vmatpush1.msra.mxu0 0.0
    %2171 = vmatprep.subr.mxu0 0.0
    %2172 = vmatpush1.msra.mxu0 0.0
    %2173 = vmatprep.subr.mxu0 0.0
    %2174 = vmatpush1.msra.mxu0 0.0
    %2175 = vmatprep.subr.mxu0 0.0
    %2176 = vmatpush1.msra.mxu0 0.0
    %2177 = vmatprep.subr.mxu0 0.0
    %2178 = vmatpush1.msra.mxu0 0.0
    %2179 = vmatprep.subr.mxu0 0.0
    %2180 = vmatpush1.msra.mxu0 0.0
    %2181 = vmatprep.subr.mxu0 0.0
    %2182 = vmatpush1.msra.mxu0 0.0
    %2183 = vmatprep.subr.mxu0 0.0
    %2184 = vmatpush1.msra.mxu0 0.0
    %2185 = vmatprep.subr.mxu0 0.0
    %2186 = vmatpush1.msra.mxu0 0.0
    %2187 = vmatprep.subr.mxu0 0.0
    %2188 = vmatpush1.msra.mxu0 0.0
    %2189 = vmatprep.subr.mxu0 0.0
    %2190 = vmatpush1.msra.mxu0 0.0
    %2191 = vmatprep.subr.mxu0 0.0
    %2192 = vmatpush1.msra.mxu0 0.0
    %2193 = vmatprep.subr.mxu0 0.0
    %2194 = vmatpush1.msra.mxu0 0.0
    %2195 = vmatprep.subr.mxu0 0.0
    %2196 = vmatpush1.msra.mxu0 0.0
    %2197 = vmatprep.subr.mxu0 0.0
    %2198 = vmatpush1.msra.mxu0 0.0
    %2199 = vmatprep.subr.mxu0 0.0
    %2200 = vmatpush1.msra.mxu0 0.0
    %2201 = vmatprep.subr.mxu0 0.0
    %2202 = vmatpush1.msra.mxu0 0.0
    %2203 = vmatprep.subr.mxu0 0.0
    %2204 = vmatpush1.msra.mxu0 0.0
    %2205 = vmatprep.subr.mxu0 0.0
    %2206 = vmatpush1.msra.mxu0 0.0
    %2207 = vmatprep.subr.mxu0 0.0
    %2208 = vmatpush1.msra.mxu0 0.0
    %2209 = vmatprep.subr.mxu0 0.0
    %2210 = vmatpush1.msra.mxu0 0.0
    %2211 = vmatprep.subr.mxu0 0.0
    %2212 = vmatpush1.msra.mxu0 0.0
    %2213 = vmatprep.subr.mxu0 0.0
    %2214 = vmatpush1.msra.mxu0 0.0
    %2215 = vmatprep.subr.mxu0 0.0
    %2216 = vmatpush1.msra.mxu0 0.0
    %2217 = vmatprep.subr.mxu0 0.0
    %2218 = vmatpush1.msra.mxu0 0.0
    %2219 = vmatprep.subr.mxu0 0.0
    %2220 = vmatpush1.msra.mxu0 0.0
    %2221 = vmatprep.subr.mxu0 0.0
    %2222 = vmatpush1.msra.mxu0 0.0
    %2223 = vmatprep.subr.mxu0 0.0
    %2224 = vmatpush1.msra.mxu0 0.0
    %2225 = vmatprep.mubr.f32.mxu0 0.0
    %2226 = vmatmul.mubr.f32.gmra.mrb[0].mxu0 %v1936
    %v2227 = vpop.f32.mrb[0].mxu0
    %v2228 = vadd.f32 0.0, %v2227
    %v2229 = vpop.f32.mrb[0].mxu0
    %2230 = vdwg.mxu0
    %2231 = vst.msk [vmem:[%s2008 + $0x8] sm:$0xff] %vm1933, %v2228
    %2232 = vmatprep.subr.mxu0 0.0
    %2233 = vmatpush1.msra.mxu0 %v2088
    %2234 = vmatprep.subr.mxu0 0.0
    %2235 = vmatpush1.msra.mxu0 %v2089
    %2236 = vmatprep.subr.mxu0 0.0
    %2237 = vmatpush1.msra.mxu0 0.0
    %2238 = vmatprep.subr.mxu0 0.0
    %2239 = vmatpush1.msra.mxu0 0.0
    %2240 = vmatprep.subr.mxu0 0.0
    %2241 = vmatpush1.msra.mxu0 0.0
    %2242 = vmatprep.subr.mxu0 0.0
    %2243 = vmatpush1.msra.mxu0 0.0
    %2244 = vmatprep.subr.mxu0 0.0
    %2245 = vmatpush1.msra.mxu0 0.0
    %2246 = vmatprep.subr.mxu0 0.0
    %2247 = vmatpush1.msra.mxu0 0.0
    %2248 = vmatprep.subr.mxu0 0.0
    %2249 = vmatpush1.msra.mxu0 0.0
    %2250 = vmatprep.subr.mxu0 0.0
    %2251 = vmatpush1.msra.mxu0 0.0
    %2252 = vmatprep.subr.mxu0 0.0
    %2253 = vmatpush1.msra.mxu0 0.0
    %2254 = vmatprep.subr.mxu0 0.0
    %2255 = vmatpush1.msra.mxu0 0.0
    %2256 = vmatprep.subr.mxu0 0.0
    %2257 = vmatpush1.msra.mxu0 0.0
    %2258 = vmatprep.subr.mxu0 0.0
    %2259 = vmatpush1.msra.mxu0 0.0
    %2260 = vmatprep.subr.mxu0 0.0
    %2261 = vmatpush1.msra.mxu0 0.0
    %2262 = vmatprep.subr.mxu0 0.0
    %2263 = vmatpush1.msra.mxu0 0.0
    %2264 = vmatprep.subr.mxu0 0.0
    %2265 = vmatpush1.msra.mxu0 0.0
    %2266 = vmatprep.subr.mxu0 0.0
    %2267 = vmatpush1.msra.mxu0 0.0
    %2268 = vmatprep.subr.mxu0 0.0
    %2269 = vmatpush1.msra.mxu0 0.0
    %2270 = vmatprep.subr.mxu0 0.0
    %2271 = vmatpush1.msra.mxu0 0.0
    %2272 = vmatprep.subr.mxu0 0.0
    %2273 = vmatpush1.msra.mxu0 0.0
    %2274 = vmatprep.subr.mxu0 0.0
    %2275 = vmatpush1.msra.mxu0 0.0
    %2276 = vmatprep.subr.mxu0 0.0
    %2277 = vmatpush1.msra.mxu0 0.0
    %2278 = vmatprep.subr.mxu0 0.0
    %2279 = vmatpush1.msra.mxu0 0.0
    %2280 = vmatprep.subr.mxu0 0.0
    %2281 = vmatpush1.msra.mxu0 0.0
    %2282 = vmatprep.subr.mxu0 0.0
    %2283 = vmatpush1.msra.mxu0 0.0
    %2284 = vmatprep.subr.mxu0 0.0
    %2285 = vmatpush1.msra.mxu0 0.0
    %2286 = vmatprep.subr.mxu0 0.0
    %2287 = vmatpush1.msra.mxu0 0.0
    %2288 = vmatprep.subr.mxu0 0.0
    %2289 = vmatpush1.msra.mxu0 0.0
    %2290 = vmatprep.subr.mxu0 0.0
    %2291 = vmatpush1.msra.mxu0 0.0
    %2292 = vmatprep.subr.mxu0 0.0
    %2293 = vmatpush1.msra.mxu0 0.0
    %2294 = vmatprep.subr.mxu0 0.0
    %2295 = vmatpush1.msra.mxu0 0.0
    %2296 = vmatprep.mubr.f32.mxu0 0.0
    %2297 = vmatmul.mubr.f32.gmra.mrb[0].mxu0 %v2011
    %v2298 = vpop.f32.mrb[0].mxu0
    %v2299 = vadd.f32 0.0, %v2298
    %v2300 = vpop.f32.mrb[0].mxu0
    %2301 = vdwg.mxu0
    %2302 = vst.msk [vmem:[%s2083 + $0x8] sm:$0xff] %vm1933, %v2299
    %v2303 = vadd.s32 %v912, 8
    %vm2304 = vcmp.eq.s32.totalorder %v910, %v2303
    %vm2305 = vcmp.eq.s32.totalorder %v1855, %v2303
    %v2306 = vsel %vm2304, 1.0, 0.0
    %v2307 = vsel %vm2305, 1.0, 0.0
    %2308 = vmatprep.subr.mxu0 0.0
    %2309 = vmatpush1.msra.mxu0 %v2306
    %2310 = vmatprep.subr.mxu0 0.0
    %2311 = vmatpush1.msra.mxu0 %v2307
    %2312 = vmatprep.subr.mxu0 0.0
    %2313 = vmatpush1.msra.mxu0 0.0
    %2314 = vmatprep.subr.mxu0 0.0
    %2315 = vmatpush1.msra.mxu0 0.0
    %2316 = vmatprep.subr.mxu0 0.0
    %2317 = vmatpush1.msra.mxu0 0.0
    %2318 = vmatprep.subr.mxu0 0.0
    %2319 = vmatpush1.msra.mxu0 0.0
    %2320 = vmatprep.subr.mxu0 0.0
    %2321 = vmatpush1.msra.mxu0 0.0
    %2322 = vmatprep.subr.mxu0 0.0
    %2323 = vmatpush1.msra.mxu0 0.0
    %2324 = vmatprep.subr.mxu0 0.0
    %2325 = vmatpush1.msra.mxu0 0.0
    %2326 = vmatprep.subr.mxu0 0.0
    %2327 = vmatpush1.msra.mxu0 0.0
    %2328 = vmatprep.subr.mxu0 0.0
    %2329 = vmatpush1.msra.mxu0 0.0
    %2330 = vmatprep.subr.mxu0 0.0
    %2331 = vmatpush1.msra.mxu0 0.0
    %2332 = vmatprep.subr.mxu0 0.0
    %2333 = vmatpush1.msra.mxu0 0.0
    %2334 = vmatprep.subr.mxu0 0.0
    %2335 = vmatpush1.msra.mxu0 0.0
    %2336 = vmatprep.subr.mxu0 0.0
    %2337 = vmatpush1.msra.mxu0 0.0
    %2338 = vmatprep.subr.mxu0 0.0
    %2339 = vmatpush1.msra.mxu0 0.0
    %2340 = vmatprep.subr.mxu0 0.0
    %2341 = vmatpush1.msra.mxu0 0.0
    %2342 = vmatprep.subr.mxu0 0.0
    %2343 = vmatpush1.msra.mxu0 0.0
    %2344 = vmatprep.subr.mxu0 0.0
    %2345 = vmatpush1.msra.mxu0 0.0
    %2346 = vmatprep.subr.mxu0 0.0
    %2347 = vmatpush1.msra.mxu0 0.0
    %2348 = vmatprep.subr.mxu0 0.0
    %2349 = vmatpush1.msra.mxu0 0.0
    %2350 = vmatprep.subr.mxu0 0.0
    %2351 = vmatpush1.msra.mxu0 0.0
    %2352 = vmatprep.subr.mxu0 0.0
    %2353 = vmatpush1.msra.mxu0 0.0
    %2354 = vmatprep.subr.mxu0 0.0
    %2355 = vmatpush1.msra.mxu0 0.0
    %2356 = vmatprep.subr.mxu0 0.0
    %2357 = vmatpush1.msra.mxu0 0.0
    %2358 = vmatprep.subr.mxu0 0.0
    %2359 = vmatpush1.msra.mxu0 0.0
    %2360 = vmatprep.subr.mxu0 0.0
    %2361 = vmatpush1.msra.mxu0 0.0
    %2362 = vmatprep.subr.mxu0 0.0
    %2363 = vmatpush1.msra.mxu0 0.0
    %2364 = vmatprep.subr.mxu0 0.0
    %2365 = vmatpush1.msra.mxu0 0.0
    %2366 = vmatprep.subr.mxu0 0.0
    %2367 = vmatpush1.msra.mxu0 0.0
    %2368 = vmatprep.subr.mxu0 0.0
    %2369 = vmatpush1.msra.mxu0 0.0
    %2370 = vmatprep.subr.mxu0 0.0
    %2371 = vmatpush1.msra.mxu0 0.0
    %2372 = vmatprep.mubr.f32.mxu0 0.0
    %2373 = vmatmul.mubr.f32.gmra.mrb[0].mxu0 %v1861
    %v2374 = vpop.f32.mrb[0].mxu0
    %v2375 = vadd.f32 0.0, %v2374
    %v2376 = vpop.f32.mrb[0].mxu0
    %2377 = vdwg.mxu0
    %2378 = vst.msk [vmem:[#allocation2 + $0x10] sm:$0xff] %vm1933, %v2375
    %2379 = vmatprep.subr.mxu0 0.0
    %2380 = vmatpush1.msra.mxu0 %v2306
    %2381 = vmatprep.subr.mxu0 0.0
    %2382 = vmatpush1.msra.mxu0 %v2307
    %2383 = vmatprep.subr.mxu0 0.0
    %2384 = vmatpush1.msra.mxu0 0.0
    %2385 = vmatprep.subr.mxu0 0.0
    %2386 = vmatpush1.msra.mxu0 0.0
    %2387 = vmatprep.subr.mxu0 0.0
    %2388 = vmatpush1.msra.mxu0 0.0
    %2389 = vmatprep.subr.mxu0 0.0
    %2390 = vmatpush1.msra.mxu0 0.0
    %2391 = vmatprep.subr.mxu0 0.0
    %2392 = vmatpush1.msra.mxu0 0.0
    %2393 = vmatprep.subr.mxu0 0.0
    %2394 = vmatpush1.msra.mxu0 0.0
    %2395 = vmatprep.subr.mxu0 0.0
    %2396 = vmatpush1.msra.mxu0 0.0
    %2397 = vmatprep.subr.mxu0 0.0
    %2398 = vmatpush1.msra.mxu0 0.0
    %2399 = vmatprep.subr.mxu0 0.0
    %2400 = vmatpush1.msra.mxu0 0.0
    %2401 = vmatprep.subr.mxu0 0.0
    %2402 = vmatpush1.msra.mxu0 0.0
    %2403 = vmatprep.subr.mxu0 0.0
    %2404 = vmatpush1.msra.mxu0 0.0
    %2405 = vmatprep.subr.mxu0 0.0
    %2406 = vmatpush1.msra.mxu0 0.0
    %2407 = vmatprep.subr.mxu0 0.0
    %2408 = vmatpush1.msra.mxu0 0.0
    %2409 = vmatprep.subr.mxu0 0.0
    %2410 = vmatpush1.msra.mxu0 0.0
    %2411 = vmatprep.subr.mxu0 0.0
    %2412 = vmatpush1.msra.mxu0 0.0
    %2413 = vmatprep.subr.mxu0 0.0
    %2414 = vmatpush1.msra.mxu0 0.0
    %2415 = vmatprep.subr.mxu0 0.0
    %2416 = vmatpush1.msra.mxu0 0.0
    %2417 = vmatprep.subr.mxu0 0.0
    %2418 = vmatpush1.msra.mxu0 0.0
    %2419 = vmatprep.subr.mxu0 0.0
    %2420 = vmatpush1.msra.mxu0 0.0
    %2421 = vmatprep.subr.mxu0 0.0
    %2422 = vmatpush1.msra.mxu0 0.0
    %2423 = vmatprep.subr.mxu0 0.0
    %2424 = vmatpush1.msra.mxu0 0.0
    %2425 = vmatprep.subr.mxu0 0.0
    %2426 = vmatpush1.msra.mxu0 0.0
    %2427 = vmatprep.subr.mxu0 0.0
    %2428 = vmatpush1.msra.mxu0 0.0
    %2429 = vmatprep.subr.mxu0 0.0
    %2430 = vmatpush1.msra.mxu0 0.0
    %2431 = vmatprep.subr.mxu0 0.0
    %2432 = vmatpush1.msra.mxu0 0.0
    %2433 = vmatprep.subr.mxu0 0.0
    %2434 = vmatpush1.msra.mxu0 0.0
    %2435 = vmatprep.subr.mxu0 0.0
    %2436 = vmatpush1.msra.mxu0 0.0
    %2437 = vmatprep.subr.mxu0 0.0
    %2438 = vmatpush1.msra.mxu0 0.0
    %2439 = vmatprep.subr.mxu0 0.0
    %2440 = vmatpush1.msra.mxu0 0.0
    %2441 = vmatprep.subr.mxu0 0.0
    %2442 = vmatpush1.msra.mxu0 0.0
    %2443 = vmatprep.mubr.f32.mxu0 0.0
    %2444 = vmatmul.mubr.f32.gmra.mrb[0].mxu0 %v1936
    %v2445 = vpop.f32.mrb[0].mxu0
    %v2446 = vadd.f32 0.0, %v2445
    %v2447 = vpop.f32.mrb[0].mxu0
    %2448 = vdwg.mxu0
    %2449 = vst.msk [vmem:[%s2008 + $0x10] sm:$0xff] %vm1933, %v2446
    %2450 = vmatprep.subr.mxu0 0.0
    %2451 = vmatpush1.msra.mxu0 %v2306
    %2452 = vmatprep.subr.mxu0 0.0
    %2453 = vmatpush1.msra.mxu0 %v2307
    %2454 = vmatprep.subr.mxu0 0.0
    %2455 = vmatpush1.msra.mxu0 0.0
    %2456 = vmatprep.subr.mxu0 0.0
    %2457 = vmatpush1.msra.mxu0 0.0
    %2458 = vmatprep.subr.mxu0 0.0
    %2459 = vmatpush1.msra.mxu0 0.0
    %2460 = vmatprep.subr.mxu0 0.0
    %2461 = vmatpush1.msra.mxu0 0.0
    %2462 = vmatprep.subr.mxu0 0.0
    %2463 = vmatpush1.msra.mxu0 0.0
    %2464 = vmatprep.subr.mxu0 0.0
    %2465 = vmatpush1.msra.mxu0 0.0
    %2466 = vmatprep.subr.mxu0 0.0
    %2467 = vmatpush1.msra.mxu0 0.0
    %2468 = vmatprep.subr.mxu0 0.0
    %2469 = vmatpush1.msra.mxu0 0.0
    %2470 = vmatprep.subr.mxu0 0.0
    %2471 = vmatpush1.msra.mxu0 0.0
    %2472 = vmatprep.subr.mxu0 0.0
    %2473 = vmatpush1.msra.mxu0 0.0
    %2474 = vmatprep.subr.mxu0 0.0
    %2475 = vmatpush1.msra.mxu0 0.0
    %2476 = vmatprep.subr.mxu0 0.0
    %2477 = vmatpush1.msra.mxu0 0.0
    %2478 = vmatprep.subr.mxu0 0.0
    %2479 = vmatpush1.msra.mxu0 0.0
    %2480 = vmatprep.subr.mxu0 0.0
    %2481 = vmatpush1.msra.mxu0 0.0
    %2482 = vmatprep.subr.mxu0 0.0
    %2483 = vmatpush1.msra.mxu0 0.0
    %2484 = vmatprep.subr.mxu0 0.0
    %2485 = vmatpush1.msra.mxu0 0.0
    %2486 = vmatprep.subr.mxu0 0.0
    %2487 = vmatpush1.msra.mxu0 0.0
    %2488 = vmatprep.subr.mxu0 0.0
    %2489 = vmatpush1.msra.mxu0 0.0
    %2490 = vmatprep.subr.mxu0 0.0
    %2491 = vmatpush1.msra.mxu0 0.0
    %2492 = vmatprep.subr.mxu0 0.0
    %2493 = vmatpush1.msra.mxu0 0.0
    %2494 = vmatprep.subr.mxu0 0.0
    %2495 = vmatpush1.msra.mxu0 0.0
    %2496 = vmatprep.subr.mxu0 0.0
    %2497 = vmatpush1.msra.mxu0 0.0
    %2498 = vmatprep.subr.mxu0 0.0
    %2499 = vmatpush1.msra.mxu0 0.0
    %2500 = vmatprep.subr.mxu0 0.0
    %2501 = vmatpush1.msra.mxu0 0.0
    %2502 = vmatprep.subr.mxu0 0.0
    %2503 = vmatpush1.msra.mxu0 0.0
    %2504 = vmatprep.subr.mxu0 0.0
    %2505 = vmatpush1.msra.mxu0 0.0
    %2506 = vmatprep.subr.mxu0 0.0
    %2507 = vmatpush1.msra.mxu0 0.0
    %2508 = vmatprep.subr.mxu0 0.0
    %2509 = vmatpush1.msra.mxu0 0.0
    %2510 = vmatprep.subr.mxu0 0.0
    %2511 = vmatpush1.msra.mxu0 0.0
    %2512 = vmatprep.subr.mxu0 0.0
    %2513 = vmatpush1.msra.mxu0 0.0
    %2514 = vmatprep.mubr.f32.mxu0 0.0
    %2515 = vmatmul.mubr.f32.gmra.mrb[0].mxu0 %v2011
    %v2516 = vpop.f32.mrb[0].mxu0
    %v2517 = vadd.f32 0.0, %v2516
    %v2518 = vpop.f32.mrb[0].mxu0
    %2519 = vdwg.mxu0
    %2520 = vst.msk [vmem:[%s2083 + $0x10] sm:$0xff] %vm1933, %v2517
    %v2521 = vadd.s32 %v912, 12
    %vm2522 = vcmp.eq.s32.totalorder %v910, %v2521
    %vm2523 = vcmp.eq.s32.totalorder %v1855, %v2521
    %v2524 = vsel %vm2522, 1.0, 0.0
    %v2525 = vsel %vm2523, 1.0, 0.0
    %2526 = vmatprep.subr.mxu0 0.0
    %2527 = vmatpush1.msra.mxu0 %v2524
    %2528 = vmatprep.subr.mxu0 0.0
    %2529 = vmatpush1.msra.mxu0 %v2525
    %2530 = vmatprep.subr.mxu0 0.0
    %2531 = vmatpush1.msra.mxu0 0.0
    %2532 = vmatprep.subr.mxu0 0.0
    %2533 = vmatpush1.msra.mxu0 0.0
    %2534 = vmatprep.subr.mxu0 0.0
    %2535 = vmatpush1.msra.mxu0 0.0
    %2536 = vmatprep.subr.mxu0 0.0
    %2537 = vmatpush1.msra.mxu0 0.0
    %2538 = vmatprep.subr.mxu0 0.0
    %2539 = vmatpush1.msra.mxu0 0.0
    %2540 = vmatprep.subr.mxu0 0.0
    %2541 = vmatpush1.msra.mxu0 0.0
    %2542 = vmatprep.subr.mxu0 0.0
    %2543 = vmatpush1.msra.mxu0 0.0
    %2544 = vmatprep.subr.mxu0 0.0
    %2545 = vmatpush1.msra.mxu0 0.0
    %2546 = vmatprep.subr.mxu0 0.0
    %2547 = vmatpush1.msra.mxu0 0.0
    %2548 = vmatprep.subr.mxu0 0.0
    %2549 = vmatpush1.msra.mxu0 0.0
    %2550 = vmatprep.subr.mxu0 0.0
    %2551 = vmatpush1.msra.mxu0 0.0
    %2552 = vmatprep.subr.mxu0 0.0
    %2553 = vmatpush1.msra.mxu0 0.0
    %2554 = vmatprep.subr.mxu0 0.0
    %2555 = vmatpush1.msra.mxu0 0.0
    %2556 = vmatprep.subr.mxu0 0.0
    %2557 = vmatpush1.msra.mxu0 0.0
    %2558 = vmatprep.subr.mxu0 0.0
    %2559 = vmatpush1.msra.mxu0 0.0
    %2560 = vmatprep.subr.mxu0 0.0
    %2561 = vmatpush1.msra.mxu0 0.0
    %2562 = vmatprep.subr.mxu0 0.0
    %2563 = vmatpush1.msra.mxu0 0.0
    %2564 = vmatprep.subr.mxu0 0.0
    %2565 = vmatpush1.msra.mxu0 0.0
    %2566 = vmatprep.subr.mxu0 0.0
    %2567 = vmatpush1.msra.mxu0 0.0
    %2568 = vmatprep.subr.mxu0 0.0
    %2569 = vmatpush1.msra.mxu0 0.0
    %2570 = vmatprep.subr.mxu0 0.0
    %2571 = vmatpush1.msra.mxu0 0.0
    %2572 = vmatprep.subr.mxu0 0.0
    %2573 = vmatpush1.msra.mxu0 0.0
    %2574 = vmatprep.subr.mxu0 0.0
    %2575 = vmatpush1.msra.mxu0 0.0
    %2576 = vmatprep.subr.mxu0 0.0
    %2577 = vmatpush1.msra.mxu0 0.0
    %2578 = vmatprep.subr.mxu0 0.0
    %2579 = vmatpush1.msra.mxu0 0.0
    %2580 = vmatprep.subr.mxu0 0.0
    %2581 = vmatpush1.msra.mxu0 0.0
    %2582 = vmatprep.subr.mxu0 0.0
    %2583 = vmatpush1.msra.mxu0 0.0
    %2584 = vmatprep.subr.mxu0 0.0
    %2585 = vmatpush1.msra.mxu0 0.0
    %2586 = vmatprep.subr.mxu0 0.0
    %2587 = vmatpush1.msra.mxu0 0.0
    %2588 = vmatprep.subr.mxu0 0.0
    %2589 = vmatpush1.msra.mxu0 0.0
    %2590 = vmatprep.mubr.f32.mxu0 0.0
    %2591 = vmatmul.mubr.f32.gmra.mrb[0].mxu0 %v1861
    %v2592 = vpop.f32.mrb[0].mxu0
    %v2593 = vadd.f32 0.0, %v2592
    %v2594 = vpop.f32.mrb[0].mxu0
    %2595 = vdwg.mxu0
    %2596 = vst.msk [vmem:[#allocation2 + $0x18] sm:$0xff] %vm1933, %v2593
    %2597 = vmatprep.subr.mxu0 0.0
    %2598 = vmatpush1.msra.mxu0 %v2524
    %2599 = vmatprep.subr.mxu0 0.0
    %2600 = vmatpush1.msra.mxu0 %v2525
    %2601 = vmatprep.subr.mxu0 0.0
    %2602 = vmatpush1.msra.mxu0 0.0
    %2603 = vmatprep.subr.mxu0 0.0
    %2604 = vmatpush1.msra.mxu0 0.0
    %2605 = vmatprep.subr.mxu0 0.0
    %2606 = vmatpush1.msra.mxu0 0.0
    %2607 = vmatprep.subr.mxu0 0.0
    %2608 = vmatpush1.msra.mxu0 0.0
    %2609 = vmatprep.subr.mxu0 0.0
    %2610 = vmatpush1.msra.mxu0 0.0
    %2611 = vmatprep.subr.mxu0 0.0
    %2612 = vmatpush1.msra.mxu0 0.0
    %2613 = vmatprep.subr.mxu0 0.0
    %2614 = vmatpush1.msra.mxu0 0.0
    %2615 = vmatprep.subr.mxu0 0.0
    %2616 = vmatpush1.msra.mxu0 0.0
    %2617 = vmatprep.subr.mxu0 0.0
    %2618 = vmatpush1.msra.mxu0 0.0
    %2619 = vmatprep.subr.mxu0 0.0
    %2620 = vmatpush1.msra.mxu0 0.0
    %2621 = vmatprep.subr.mxu0 0.0
    %2622 = vmatpush1.msra.mxu0 0.0
    %2623 = vmatprep.subr.mxu0 0.0
    %2624 = vmatpush1.msra.mxu0 0.0
    %2625 = vmatprep.subr.mxu0 0.0
    %2626 = vmatpush1.msra.mxu0 0.0
    %2627 = vmatprep.subr.mxu0 0.0
    %2628 = vmatpush1.msra.mxu0 0.0
    %2629 = vmatprep.subr.mxu0 0.0
    %2630 = vmatpush1.msra.mxu0 0.0
    %2631 = vmatprep.subr.mxu0 0.0
    %2632 = vmatpush1.msra.mxu0 0.0
    %2633 = vmatprep.subr.mxu0 0.0
    %2634 = vmatpush1.msra.mxu0 0.0
    %2635 = vmatprep.subr.mxu0 0.0
    %2636 = vmatpush1.msra.mxu0 0.0
    %2637 = vmatprep.subr.mxu0 0.0
    %2638 = vmatpush1.msra.mxu0 0.0
    %2639 = vmatprep.subr.mxu0 0.0
    %2640 = vmatpush1.msra.mxu0 0.0
    %2641 = vmatprep.subr.mxu0 0.0
    %2642 = vmatpush1.msra.mxu0 0.0
    %2643 = vmatprep.subr.mxu0 0.0
    %2644 = vmatpush1.msra.mxu0 0.0
    %2645 = vmatprep.subr.mxu0 0.0
    %2646 = vmatpush1.msra.mxu0 0.0
    %2647 = vmatprep.subr.mxu0 0.0
    %2648 = vmatpush1.msra.mxu0 0.0
    %2649 = vmatprep.subr.mxu0 0.0
    %2650 = vmatpush1.msra.mxu0 0.0
    %2651 = vmatprep.subr.mxu0 0.0
    %2652 = vmatpush1.msra.mxu0 0.0
    %2653 = vmatprep.subr.mxu0 0.0
    %2654 = vmatpush1.msra.mxu0 0.0
    %2655 = vmatprep.subr.mxu0 0.0
    %2656 = vmatpush1.msra.mxu0 0.0
    %2657 = vmatprep.subr.mxu0 0.0
    %2658 = vmatpush1.msra.mxu0 0.0
    %2659 = vmatprep.subr.mxu0 0.0
    %2660 = vmatpush1.msra.mxu0 0.0
    %2661 = vmatprep.mubr.f32.mxu0 0.0
    %2662 = vmatmul.mubr.f32.gmra.mrb[0].mxu0 %v1936
    %v2663 = vpop.f32.mrb[0].mxu0
    %v2664 = vadd.f32 0.0, %v2663
    %v2665 = vpop.f32.mrb[0].mxu0
    %2666 = vdwg.mxu0
    %2667 = vst.msk [vmem:[%s2008 + $0x18] sm:$0xff] %vm1933, %v2664
    %2668 = vmatprep.subr.mxu0 0.0
    %2669 = vmatpush1.msra.mxu0 %v2524
    %2670 = vmatprep.subr.mxu0 0.0
    %2671 = vmatpush1.msra.mxu0 %v2525
    %2672 = vmatprep.subr.mxu0 0.0
    %2673 = vmatpush1.msra.mxu0 0.0
    %2674 = vmatprep.subr.mxu0 0.0
    %2675 = vmatpush1.msra.mxu0 0.0
    %2676 = vmatprep.subr.mxu0 0.0
    %2677 = vmatpush1.msra.mxu0 0.0
    %2678 = vmatprep.subr.mxu0 0.0
    %2679 = vmatpush1.msra.mxu0 0.0
    %2680 = vmatprep.subr.mxu0 0.0
    %2681 = vmatpush1.msra.mxu0 0.0
    %2682 = vmatprep.subr.mxu0 0.0
    %2683 = vmatpush1.msra.mxu0 0.0
    %2684 = vmatprep.subr.mxu0 0.0
    %2685 = vmatpush1.msra.mxu0 0.0
    %2686 = vmatprep.subr.mxu0 0.0
    %2687 = vmatpush1.msra.mxu0 0.0
    %2688 = vmatprep.subr.mxu0 0.0
    %2689 = vmatpush1.msra.mxu0 0.0
    %2690 = vmatprep.subr.mxu0 0.0
    %2691 = vmatpush1.msra.mxu0 0.0
    %2692 = vmatprep.subr.mxu0 0.0
    %2693 = vmatpush1.msra.mxu0 0.0
    %2694 = vmatprep.subr.mxu0 0.0
    %2695 = vmatpush1.msra.mxu0 0.0
    %2696 = vmatprep.subr.mxu0 0.0
    %2697 = vmatpush1.msra.mxu0 0.0
    %2698 = vmatprep.subr.mxu0 0.0
    %2699 = vmatpush1.msra.mxu0 0.0
    %2700 = vmatprep.subr.mxu0 0.0
    %2701 = vmatpush1.msra.mxu0 0.0
    %2702 = vmatprep.subr.mxu0 0.0
    %2703 = vmatpush1.msra.mxu0 0.0
    %2704 = vmatprep.subr.mxu0 0.0
    %2705 = vmatpush1.msra.mxu0 0.0
    %2706 = vmatprep.subr.mxu0 0.0
    %2707 = vmatpush1.msra.mxu0 0.0
    %2708 = vmatprep.subr.mxu0 0.0
    %2709 = vmatpush1.msra.mxu0 0.0
    %2710 = vmatprep.subr.mxu0 0.0
    %2711 = vmatpush1.msra.mxu0 0.0
    %2712 = vmatprep.subr.mxu0 0.0
    %2713 = vmatpush1.msra.mxu0 0.0
    %2714 = vmatprep.subr.mxu0 0.0
    %2715 = vmatpush1.msra.mxu0 0.0
    %2716 = vmatprep.subr.mxu0 0.0
    %2717 = vmatpush1.msra.mxu0 0.0
    %2718 = vmatprep.subr.mxu0 0.0
    %2719 = vmatpush1.msra.mxu0 0.0
    %2720 = vmatprep.subr.mxu0 0.0
    %2721 = vmatpush1.msra.mxu0 0.0
    %2722 = vmatprep.subr.mxu0 0.0
    %2723 = vmatpush1.msra.mxu0 0.0
    %2724 = vmatprep.subr.mxu0 0.0
    %2725 = vmatpush1.msra.mxu0 0.0
    %2726 = vmatprep.subr.mxu0 0.0
    %2727 = vmatpush1.msra.mxu0 0.0
    %2728 = vmatprep.subr.mxu0 0.0
    %2729 = vmatpush1.msra.mxu0 0.0
    %2730 = vmatprep.subr.mxu0 0.0
    %2731 = vmatpush1.msra.mxu0 0.0
    %2732 = vmatprep.mubr.f32.mxu0 0.0
    %2733 = vmatmul.mubr.f32.gmra.mrb[0].mxu0 %v2011
    %v2734 = vpop.f32.mrb[0].mxu0
    %v2735 = vadd.f32 0.0, %v2734
    %v2736 = vpop.f32.mrb[0].mxu0
    %2737 = vdwg.mxu0
    %2738 = vst.msk [vmem:[%s2083 + $0x18] sm:$0xff] %vm1933, %v2735
    %v2739 = vld [vmem:[#allocation2] sm:$0xff]
    %v2740 = vld [vmem:[#allocation2 + $0x8] sm:$0xff]
    %v2741 = vld [vmem:[#allocation2 + $0x10] sm:$0xff]
    %v2742 = vld [vmem:[#allocation2 + $0x18] sm:$0xff]
    %v2743 = vld [vmem:[%s2008] sm:$0xff]
    %v2744 = vld [vmem:[%s2008 + $0x8] sm:$0xff]
    %v2745 = vld [vmem:[%s2008 + $0x10] sm:$0xff]
    %v2746 = vld [vmem:[%s2008 + $0x18] sm:$0xff]
    %v2747 = vld [vmem:[%s2083] sm:$0xff]
    %v2748 = vld [vmem:[%s2083 + $0x8] sm:$0xff]
    %v2749 = vld [vmem:[%s2083 + $0x10] sm:$0xff]
    %v2750 = vld [vmem:[%s2083 + $0x18] sm:$0xff]
    %v2752 = vsel %vm1933, %v2739, 0
    %v2755 = vsel %vm1933, %v2740, 0
    %v2758 = vsel %vm1933, %v2741, 0
    %v2761 = vsel %vm1933, %v2742, 0
    %v2764 = vsel %vm1933, %v2743, 0
    %v2767 = vsel %vm1933, %v2744, 0
    %v2770 = vsel %vm1933, %v2745, 0
    %v2773 = vsel %vm1933, %v2746, 0
    %2775 = vmatprep.subr.mxu0 0.0
    %2776 = vmatpush1.xpose.msra.mxu0 %v2764
    %2777 = vmatprep.subr.mxu0 0.0
    %2778 = vmatpush1.xpose.msra.mxu0 %v2767
    %2779 = vmatprep.subr.mxu0 0.0
    %2780 = vmatpush1.xpose.msra.mxu0 %v2770
    %2781 = vmatprep.subr.mxu0 0.0
    %2782 = vmatpush1.xpose.msra.mxu0 %v2773
    %2783 = vmatprep.subr.mxu0 0.0
    %2784 = vmatpush1.xpose.msra.mxu0 0.0
    %2785 = vmatprep.subr.mxu0 0.0
    %2786 = vmatpush1.xpose.msra.mxu0 0.0
    %2787 = vmatprep.subr.mxu0 0.0
    %2788 = vmatpush1.xpose.msra.mxu0 0.0
    %2789 = vmatprep.subr.mxu0 0.0
    %2790 = vmatpush1.xpose.msra.mxu0 0.0
    %2791 = vmatprep.subr.mxu0 0.0
    %2792 = vmatpush1.xpose.msra.mxu0 0.0
    %2793 = vmatprep.subr.mxu0 0.0
    %2794 = vmatpush1.xpose.msra.mxu0 0.0
    %2795 = vmatprep.subr.mxu0 0.0
    %2796 = vmatpush1.xpose.msra.mxu0 0.0
    %2797 = vmatprep.subr.mxu0 0.0
    %2798 = vmatpush1.xpose.msra.mxu0 0.0
    %2799 = vmatprep.subr.mxu0 0.0
    %2800 = vmatpush1.xpose.msra.mxu0 0.0
    %2801 = vmatprep.subr.mxu0 0.0
    %2802 = vmatpush1.xpose.msra.mxu0 0.0
    %2803 = vmatprep.subr.mxu0 0.0
    %2804 = vmatpush1.xpose.msra.mxu0 0.0
    %2805 = vmatprep.subr.mxu0 0.0
    %2806 = vmatpush1.xpose.msra.mxu0 0.0
    %2807 = vmatprep.subr.mxu0 0.0
    %2808 = vmatpush1.xpose.msra.mxu0 0.0
    %2809 = vmatprep.subr.mxu0 0.0
    %2810 = vmatpush1.xpose.msra.mxu0 0.0
    %2811 = vmatprep.subr.mxu0 0.0
    %2812 = vmatpush1.xpose.msra.mxu0 0.0
    %2813 = vmatprep.subr.mxu0 0.0
    %2814 = vmatpush1.xpose.msra.mxu0 0.0
    %2815 = vmatprep.subr.mxu0 0.0
    %2816 = vmatpush1.xpose.msra.mxu0 0.0
    %2817 = vmatprep.subr.mxu0 0.0
    %2818 = vmatpush1.xpose.msra.mxu0 0.0
    %2819 = vmatprep.subr.mxu0 0.0
    %2820 = vmatpush1.xpose.msra.mxu0 0.0
    %2821 = vmatprep.subr.mxu0 0.0
    %2822 = vmatpush1.xpose.msra.mxu0 0.0
    %2823 = vmatprep.subr.mxu0 0.0
    %2824 = vmatpush1.xpose.msra.mxu0 0.0
    %2825 = vmatprep.subr.mxu0 0.0
    %2826 = vmatpush1.xpose.msra.mxu0 0.0
    %2827 = vmatprep.subr.mxu0 0.0
    %2828 = vmatpush1.xpose.msra.mxu0 0.0
    %2829 = vmatprep.subr.mxu0 0.0
    %2830 = vmatpush1.xpose.msra.mxu0 0.0
    %2831 = vmatprep.subr.mxu0 0.0
    %2832 = vmatpush1.xpose.msra.mxu0 0.0
    %2833 = vmatprep.subr.mxu0 0.0
    %2834 = vmatpush1.xpose.msra.mxu0 0.0
    %2835 = vmatprep.subr.mxu0 0.0
    %2836 = vmatpush1.xpose.msra.mxu0 0.0
    %2837 = vmatprep.subr.mxu0 0.0
    %2838 = vmatpush1.xpose.msra.mxu0 0.0
    %2839 = vmatprep.mubr.f32.mxu0 0.0
    %2840 = vmatmul.mubr.f32.gmra.mrb[0].mxu0 %v2752
    %v2841 = vpop.f32.mrb[0].mxu0
    %v2842 = vadd.f32 0.0, %v2841
    %v2843 = vpop.f32.mrb[0].mxu0
    %2844 = vmatprep.mubr.f32.mxu0 0.0
    %2845 = vmatmul.mubr.f32.gmra.mrb[0].mxu0 %v2755
    %v2846 = vpop.f32.mrb[0].mxu0
    %v2847 = vadd.f32 0.0, %v2846
    %v2848 = vpop.f32.mrb[0].mxu0
    %2849 = vmatprep.mubr.f32.mxu0 0.0
    %2850 = vmatmul.mubr.f32.gmra.mrb[0].mxu0 %v2758
    %v2851 = vpop.f32.mrb[0].mxu0
    %v2852 = vadd.f32 0.0, %v2851
    %v2853 = vpop.f32.mrb[0].mxu0
    %2854 = vmatprep.mubr.f32.mxu0 0.0
    %2855 = vmatmul.mubr.f32.gmra.mrb[0].mxu0 %v2761
    %v2856 = vpop.f32.mrb[0].mxu0
    %v2857 = vadd.f32 0.0, %v2856
    %v2858 = vpop.f32.mrb[0].mxu0
    %2859 = vdwg.mxu0
    %v2860 = vmul.f32 %v2842, 0.5
    %v2861 = vmul.f32 %v2847, 0.5
    %v2862 = vmul.f32 %v2852, 0.5
    %v2863 = vmul.f32 %v2857, 0.5
    %v2864 = vsel %vm344, %v2860, -inf
    %2865 = vmax.xlane.f32.xlu0 %v2864
    %v2866 = vpop.xlane.xlu0 %2865
    %v2867 = vsel %vm344, %v2861, -inf
    %2868 = vmax.xlane.f32.xlu0 %v2867
    %v2869 = vpop.xlane.xlu0 %2868
    %v2870 = vsel %vm344, %v2862, -inf
    %2871 = vmax.xlane.f32.xlu0 %v2870
    %v2872 = vpop.xlane.xlu0 %2871
    %v2873 = vsel %vm344, %v2863, -inf
    %2874 = vmax.xlane.f32.xlu0 %v2873
    %v2875 = vpop.xlane.xlu0 %2874
    %v2876 = vsub.f32 %v2860, %v2866
    %v2877 = vsub.f32 %v2861, %v2869
    %v2878 = vsub.f32 %v2862, %v2872
    %v2879 = vsub.f32 %v2863, %v2875
    %v2880 = vmul.f32 %v2876, 1.442695
    %v2881 = vpow.pop %v2880
    %v2882 = vmul.f32 %v2877, 1.442695
    %v2883 = vpow.pop %v2882
    %v2884 = vmul.f32 %v2878, 1.442695
    %v2885 = vpow.pop %v2884
    %v2886 = vmul.f32 %v2879, 1.442695
    %v2887 = vpow.pop %v2886
    %v2888 = vsel %vm344, %v2881, 0.0
    %2889 = vadd.xlane.f32.xlu0 %v2888
    %v2890 = vpop.xlane.xlu0 %2889
    %v2891 = vsel %vm344, %v2883, 0.0
    %2892 = vadd.xlane.f32.xlu0 %v2891
    %v2893 = vpop.xlane.xlu0 %2892
    %v2894 = vsel %vm344, %v2885, 0.0
    %2895 = vadd.xlane.f32.xlu0 %v2894
    %v2896 = vpop.xlane.xlu0 %2895
    %v2897 = vsel %vm344, %v2887, 0.0
    %2898 = vadd.xlane.f32.xlu0 %v2897
    %v2899 = vpop.xlane.xlu0 %2898
    %v2900 = vrcp.pop %v2890
    %v2901 = vmul.f32 %v2881, %v2900
    %v2902 = vrcp.pop %v2893
    %v2903 = vmul.f32 %v2883, %v2902
    %v2904 = vrcp.pop %v2896
    %v2905 = vmul.f32 %v2885, %v2904
    %v2906 = vrcp.pop %v2899
    %v2907 = vmul.f32 %v2887, %v2906
    %v2909 = vsel %vm344, %v2901, 0
    %v2912 = vsel %vm344, %v2903, 0
    %v2915 = vsel %vm344, %v2905, 0
    %v2918 = vsel %vm344, %v2907, 0
    %2920 = vmatprep.subr.mxu0 0.0
    %2921 = vmatpush1.msra.mxu0 %v2747
    %2922 = vmatprep.subr.mxu0 0.0
    %2923 = vmatpush1.msra.mxu0 %v2748
    %2924 = vmatprep.subr.mxu0 0.0
    %2925 = vmatpush1.msra.mxu0 %v2749
    %2926 = vmatprep.subr.mxu0 0.0
    %2927 = vmatpush1.msra.mxu0 %v2750
    %2928 = vmatprep.subr.mxu0 0.0
    %2929 = vmatpush1.msra.mxu0 0.0
    %2930 = vmatprep.subr.mxu0 0.0
    %2931 = vmatpush1.msra.mxu0 0.0
    %2932 = vmatprep.subr.mxu0 0.0
    %2933 = vmatpush1.msra.mxu0 0.0
    %2934 = vmatprep.subr.mxu0 0.0
    %2935 = vmatpush1.msra.mxu0 0.0
    %2936 = vmatprep.subr.mxu0 0.0
    %2937 = vmatpush1.msra.mxu0 0.0
    %2938 = vmatprep.subr.mxu0 0.0
    %2939 = vmatpush1.msra.mxu0 0.0
    %2940 = vmatprep.subr.mxu0 0.0
    %2941 = vmatpush1.msra.mxu0 0.0
    %2942 = vmatprep.subr.mxu0 0.0
    %2943 = vmatpush1.msra.mxu0 0.0
    %2944 = vmatprep.subr.mxu0 0.0
    %2945 = vmatpush1.msra.mxu0 0.0
    %2946 = vmatprep.subr.mxu0 0.0
    %2947 = vmatpush1.msra.mxu0 0.0
    %2948 = vmatprep.subr.mxu0 0.0
    %2949 = vmatpush1.msra.mxu0 0.0
    %2950 = vmatprep.subr.mxu0 0.0
    %2951 = vmatpush1.msra.mxu0 0.0
    %2952 = vmatprep.subr.mxu0 0.0
    %2953 = vmatpush1.msra.mxu0 0.0
    %2954 = vmatprep.subr.mxu0 0.0
    %2955 = vmatpush1.msra.mxu0 0.0
    %2956 = vmatprep.subr.mxu0 0.0
    %2957 = vmatpush1.msra.mxu0 0.0
    %2958 = vmatprep.subr.mxu0 0.0
    %2959 = vmatpush1.msra.mxu0 0.0
    %2960 = vmatprep.subr.mxu0 0.0
    %2961 = vmatpush1.msra.mxu0 0.0
    %2962 = vmatprep.subr.mxu0 0.0
    %2963 = vmatpush1.msra.mxu0 0.0
    %2964 = vmatprep.subr.mxu0 0.0
    %2965 = vmatpush1.msra.mxu0 0.0
    %2966 = vmatprep.subr.mxu0 0.0
    %2967 = vmatpush1.msra.mxu0 0.0
    %2968 = vmatprep.subr.mxu0 0.0
    %2969 = vmatpush1.msra.mxu0 0.0
    %2970 = vmatprep.subr.mxu0 0.0
    %2971 = vmatpush1.msra.mxu0 0.0
    %2972 = vmatprep.subr.mxu0 0.0
    %2973 = vmatpush1.msra.mxu0 0.0
    %2974 = vmatprep.subr.mxu0 0.0
    %2975 = vmatpush1.msra.mxu0 0.0
    %2976 = vmatprep.subr.mxu0 0.0
    %2977 = vmatpush1.msra.mxu0 0.0
    %2978 = vmatprep.subr.mxu0 0.0
    %2979 = vmatpush1.msra.mxu0 0.0
    %2980 = vmatprep.subr.mxu0 0.0
    %2981 = vmatpush1.msra.mxu0 0.0
    %2982 = vmatprep.subr.mxu0 0.0
    %2983 = vmatpush1.msra.mxu0 0.0
    %2984 = vmatprep.mubr.f32.mxu0 0.0
    %2985 = vmatmul.mubr.f32.gmra.mrb[0].mxu0 %v2909
    %v2986 = vpop.f32.mrb[0].mxu0
    %v2987 = vadd.f32 0.0, %v2986
    %v2988 = vpop.f32.mrb[0].mxu0
    %2989 = vmatprep.mubr.f32.mxu0 0.0
    %2990 = vmatmul.mubr.f32.gmra.mrb[0].mxu0 %v2912
    %v2991 = vpop.f32.mrb[0].mxu0
    %v2992 = vadd.f32 0.0, %v2991
    %v2993 = vpop.f32.mrb[0].mxu0
    %2994 = vmatprep.mubr.f32.mxu0 0.0
    %2995 = vmatmul.mubr.f32.gmra.mrb[0].mxu0 %v2915
    %v2996 = vpop.f32.mrb[0].mxu0
    %v2997 = vadd.f32 0.0, %v2996
    %v2998 = vpop.f32.mrb[0].mxu0
    %2999 = vmatprep.mubr.f32.mxu0 0.0
    %3000 = vmatmul.mubr.f32.gmra.mrb[0].mxu0 %v2918
    %v3001 = vpop.f32.mrb[0].mxu0
    %v3002 = vadd.f32 0.0, %v3001
    %v3003 = vpop.f32.mrb[0].mxu0
    %3004 = vdwg.mxu0
    %vm3005 = vcmp.eq.s32.totalorder %v912, %v910
    %v3006 = vsel %vm3005, 1.0, 0.0
    %v3007 = vadd.s32 %v910, 4
    %vm3008 = vcmp.eq.s32.totalorder %v912, %v3007
    %v3009 = vsel %vm3008, 1.0, 0.0
    %v3011 = vsel %vm1933, %v2992, 0
    %vm3013 = vcmask 1043456
    %v3015 = vsel %vm3013, %v3009, 0
    %3017 = vmatprep.subr.mxu0 0.0
    %3018 = vmatpush1.msra.mxu0 %v3015
    %3019 = vmatprep.subr.mxu0 0.0
    %3020 = vmatpush1.msra.mxu0 0.0
    %3021 = vmatprep.subr.mxu0 0.0
    %3022 = vmatpush1.msra.mxu0 0.0
    %3023 = vmatprep.subr.mxu0 0.0
    %3024 = vmatpush1.msra.mxu0 0.0
    %3025 = vmatprep.subr.mxu0 0.0
    %3026 = vmatpush1.msra.mxu0 0.0
    %3027 = vmatprep.subr.mxu0 0.0
    %3028 = vmatpush1.msra.mxu0 0.0
    %3029 = vmatprep.subr.mxu0 0.0
    %3030 = vmatpush1.msra.mxu0 0.0
    %3031 = vmatprep.subr.mxu0 0.0
    %3032 = vmatpush1.msra.mxu0 0.0
    %3033 = vmatprep.subr.mxu0 0.0
    %3034 = vmatpush1.msra.mxu0 0.0
    %3035 = vmatprep.subr.mxu0 0.0
    %3036 = vmatpush1.msra.mxu0 0.0
    %3037 = vmatprep.subr.mxu0 0.0
    %3038 = vmatpush1.msra.mxu0 0.0
    %3039 = vmatprep.subr.mxu0 0.0
    %3040 = vmatpush1.msra.mxu0 0.0
    %3041 = vmatprep.subr.mxu0 0.0
    %3042 = vmatpush1.msra.mxu0 0.0
    %3043 = vmatprep.subr.mxu0 0.0
    %3044 = vmatpush1.msra.mxu0 0.0
    %3045 = vmatprep.subr.mxu0 0.0
    %3046 = vmatpush1.msra.mxu0 0.0
    %3047 = vmatprep.subr.mxu0 0.0
    %3048 = vmatpush1.msra.mxu0 0.0
    %3049 = vmatprep.subr.mxu0 0.0
    %3050 = vmatpush1.msra.mxu0 0.0
    %3051 = vmatprep.subr.mxu0 0.0
    %3052 = vmatpush1.msra.mxu0 0.0
    %3053 = vmatprep.subr.mxu0 0.0
    %3054 = vmatpush1.msra.mxu0 0.0
    %3055 = vmatprep.subr.mxu0 0.0
    %3056 = vmatpush1.msra.mxu0 0.0
    %3057 = vmatprep.subr.mxu0 0.0
    %3058 = vmatpush1.msra.mxu0 0.0
    %3059 = vmatprep.subr.mxu0 0.0
    %3060 = vmatpush1.msra.mxu0 0.0
    %3061 = vmatprep.subr.mxu0 0.0
    %3062 = vmatpush1.msra.mxu0 0.0
    %3063 = vmatprep.subr.mxu0 0.0
    %3064 = vmatpush1.msra.mxu0 0.0
    %3065 = vmatprep.subr.mxu0 0.0
    %3066 = vmatpush1.msra.mxu0 0.0
    %3067 = vmatprep.subr.mxu0 0.0
    %3068 = vmatpush1.msra.mxu0 0.0
    %3069 = vmatprep.subr.mxu0 0.0
    %3070 = vmatpush1.msra.mxu0 0.0
    %3071 = vmatprep.subr.mxu0 0.0
    %3072 = vmatpush1.msra.mxu0 0.0
    %3073 = vmatprep.subr.mxu0 0.0
    %3074 = vmatpush1.msra.mxu0 0.0
    %3075 = vmatprep.subr.mxu0 0.0
    %3076 = vmatpush1.msra.mxu0 0.0
    %3077 = vmatprep.subr.mxu0 0.0
    %3078 = vmatpush1.msra.mxu0 0.0
    %3079 = vmatprep.subr.mxu0 0.0
    %3080 = vmatpush1.msra.mxu0 0.0
    %3081 = vmatprep.mubr.f32.mxu0 0.0
    %3082 = vmatmul.mubr.f32.gmra.mrb[0].mxu0 %v3011
    %v3083 = vpop.f32.mrb[0].mxu0
    %v3084 = vadd.f32 0.0, %v3083
    %v3085 = vpop.f32.mrb[0].mxu0
    %3086 = vdwg.mxu0
    %v3088 = vsel %vm1933, %v2987, 0
    %v3091 = vsel %vm3013, %v3006, 0
    %3093 = vmatprep.subr.mxu0 0.0
    %3094 = vmatpush1.msra.mxu0 %v3091
    %3095 = vmatprep.subr.mxu0 0.0
    %3096 = vmatpush1.msra.mxu0 0.0
    %3097 = vmatprep.subr.mxu0 0.0
    %3098 = vmatpush1.msra.mxu0 0.0
    %3099 = vmatprep.subr.mxu0 0.0
    %3100 = vmatpush1.msra.mxu0 0.0
    %3101 = vmatprep.subr.mxu0 0.0
    %3102 = vmatpush1.msra.mxu0 0.0
    %3103 = vmatprep.subr.mxu0 0.0
    %3104 = vmatpush1.msra.mxu0 0.0
    %3105 = vmatprep.subr.mxu0 0.0
    %3106 = vmatpush1.msra.mxu0 0.0
    %3107 = vmatprep.subr.mxu0 0.0
    %3108 = vmatpush1.msra.mxu0 0.0
    %3109 = vmatprep.subr.mxu0 0.0
    %3110 = vmatpush1.msra.mxu0 0.0
    %3111 = vmatprep.subr.mxu0 0.0
    %3112 = vmatpush1.msra.mxu0 0.0
    %3113 = vmatprep.subr.mxu0 0.0
    %3114 = vmatpush1.msra.mxu0 0.0
    %3115 = vmatprep.subr.mxu0 0.0
    %3116 = vmatpush1.msra.mxu0 0.0
    %3117 = vmatprep.subr.mxu0 0.0
    %3118 = vmatpush1.msra.mxu0 0.0
    %3119 = vmatprep.subr.mxu0 0.0
    %3120 = vmatpush1.msra.mxu0 0.0
    %3121 = vmatprep.subr.mxu0 0.0
    %3122 = vmatpush1.msra.mxu0 0.0
    %3123 = vmatprep.subr.mxu0 0.0
    %3124 = vmatpush1.msra.mxu0 0.0
    %3125 = vmatprep.subr.mxu0 0.0
    %3126 = vmatpush1.msra.mxu0 0.0
    %3127 = vmatprep.subr.mxu0 0.0
    %3128 = vmatpush1.msra.mxu0 0.0
    %3129 = vmatprep.subr.mxu0 0.0
    %3130 = vmatpush1.msra.mxu0 0.0
    %3131 = vmatprep.subr.mxu0 0.0
    %3132 = vmatpush1.msra.mxu0 0.0
    %3133 = vmatprep.subr.mxu0 0.0
    %3134 = vmatpush1.msra.mxu0 0.0
    %3135 = vmatprep.subr.mxu0 0.0
    %3136 = vmatpush1.msra.mxu0 0.0
    %3137 = vmatprep.subr.mxu0 0.0
    %3138 = vmatpush1.msra.mxu0 0.0
    %3139 = vmatprep.subr.mxu0 0.0
    %3140 = vmatpush1.msra.mxu0 0.0
    %3141 = vmatprep.subr.mxu0 0.0
    %3142 = vmatpush1.msra.mxu0 0.0
    %3143 = vmatprep.subr.mxu0 0.0
    %3144 = vmatpush1.msra.mxu0 0.0
    %3145 = vmatprep.subr.mxu0 0.0
    %3146 = vmatpush1.msra.mxu0 0.0
    %3147 = vmatprep.subr.mxu0 0.0
    %3148 = vmatpush1.msra.mxu0 0.0
    %3149 = vmatprep.subr.mxu0 0.0
    %3150 = vmatpush1.msra.mxu0 0.0
    %3151 = vmatprep.subr.mxu0 0.0
    %3152 = vmatpush1.msra.mxu0 0.0
    %3153 = vmatprep.subr.mxu0 0.0
    %3154 = vmatpush1.msra.mxu0 0.0
    %3155 = vmatprep.subr.mxu0 0.0
    %3156 = vmatpush1.msra.mxu0 0.0
    %3157 = vmatprep.mubr.f32.mxu0 0.0
    %3158 = vmatmul.mubr.f32.gmra.mrb[0].mxu0 %v3088
    %v3159 = vpop.f32.mrb[0].mxu0
    %v3160 = vadd.f32 %v3084, %v3159
    %v3161 = vpop.f32.mrb[0].mxu0
    %3162 = vdwg.mxu0
    %vm3163 = vcmp.eq.s32.totalorder %v912, %v1855
    %v3164 = vsel %vm3163, 1.0, 0.0
    %v3166 = vsel %vm1933, %v2997, 0
    %v3169 = vsel %vm3013, %v3164, 0
    %3171 = vmatprep.subr.mxu0 0.0
    %3172 = vmatpush1.msra.mxu0 %v3169
    %3173 = vmatprep.subr.mxu0 0.0
    %3174 = vmatpush1.msra.mxu0 0.0
    %3175 = vmatprep.subr.mxu0 0.0
    %3176 = vmatpush1.msra.mxu0 0.0
    %3177 = vmatprep.subr.mxu0 0.0
    %3178 = vmatpush1.msra.mxu0 0.0
    %3179 = vmatprep.subr.mxu0 0.0
    %3180 = vmatpush1.msra.mxu0 0.0
    %3181 = vmatprep.subr.mxu0 0.0
    %3182 = vmatpush1.msra.mxu0 0.0
    %3183 = vmatprep.subr.mxu0 0.0
    %3184 = vmatpush1.msra.mxu0 0.0
    %3185 = vmatprep.subr.mxu0 0.0
    %3186 = vmatpush1.msra.mxu0 0.0
    %3187 = vmatprep.subr.mxu0 0.0
    %3188 = vmatpush1.msra.mxu0 0.0
    %3189 = vmatprep.subr.mxu0 0.0
    %3190 = vmatpush1.msra.mxu0 0.0
    %3191 = vmatprep.subr.mxu0 0.0
    %3192 = vmatpush1.msra.mxu0 0.0
    %3193 = vmatprep.subr.mxu0 0.0
    %3194 = vmatpush1.msra.mxu0 0.0
    %3195 = vmatprep.subr.mxu0 0.0
    %3196 = vmatpush1.msra.mxu0 0.0
    %3197 = vmatprep.subr.mxu0 0.0
    %3198 = vmatpush1.msra.mxu0 0.0
    %3199 = vmatprep.subr.mxu0 0.0
    %3200 = vmatpush1.msra.mxu0 0.0
    %3201 = vmatprep.subr.mxu0 0.0
    %3202 = vmatpush1.msra.mxu0 0.0
    %3203 = vmatprep.subr.mxu0 0.0
    %3204 = vmatpush1.msra.mxu0 0.0
    %3205 = vmatprep.subr.mxu0 0.0
    %3206 = vmatpush1.msra.mxu0 0.0
    %3207 = vmatprep.subr.mxu0 0.0
    %3208 = vmatpush1.msra.mxu0 0.0
    %3209 = vmatprep.subr.mxu0 0.0
    %3210 = vmatpush1.msra.mxu0 0.0
    %3211 = vmatprep.subr.mxu0 0.0
    %3212 = vmatpush1.msra.mxu0 0.0
    %3213 = vmatprep.subr.mxu0 0.0
    %3214 = vmatpush1.msra.mxu0 0.0
    %3215 = vmatprep.subr.mxu0 0.0
    %3216 = vmatpush1.msra.mxu0 0.0
    %3217 = vmatprep.subr.mxu0 0.0
    %3218 = vmatpush1.msra.mxu0 0.0
    %3219 = vmatprep.subr.mxu0 0.0
    %3220 = vmatpush1.msra.mxu0 0.0
    %3221 = vmatprep.subr.mxu0 0.0
    %3222 = vmatpush1.msra.mxu0 0.0
    %3223 = vmatprep.subr.mxu0 0.0
    %3224 = vmatpush1.msra.mxu0 0.0
    %3225 = vmatprep.subr.mxu0 0.0
    %3226 = vmatpush1.msra.mxu0 0.0
    %3227 = vmatprep.subr.mxu0 0.0
    %3228 = vmatpush1.msra.mxu0 0.0
    %3229 = vmatprep.subr.mxu0 0.0
    %3230 = vmatpush1.msra.mxu0 0.0
    %3231 = vmatprep.subr.mxu0 0.0
    %3232 = vmatpush1.msra.mxu0 0.0
    %3233 = vmatprep.subr.mxu0 0.0
    %3234 = vmatpush1.msra.mxu0 0.0
    %3235 = vmatprep.mubr.f32.mxu0 0.0
    %3236 = vmatmul.mubr.f32.gmra.mrb[0].mxu0 %v3166
    %v3237 = vpop.f32.mrb[0].mxu0
    %v3238 = vadd.f32 0.0, %v3237
    %v3239 = vpop.f32.mrb[0].mxu0
    %3240 = vdwg.mxu0
    %v3241 = vadd.f32 %v3160, %v3238
    %v3242 = vadd.s32 %v910, 12
    %vm3243 = vcmp.eq.s32.totalorder %v912, %v3242
    %v3244 = vsel %vm3243, 1.0, 0.0
    %v3246 = vsel %vm1933, %v3002, 0
    %v3249 = vsel %vm3013, %v3244, 0
    %3251 = vmatprep.subr.mxu0 0.0
    %3252 = vmatpush1.msra.mxu0 %v3249
    %3253 = vmatprep.subr.mxu0 0.0
    %3254 = vmatpush1.msra.mxu0 0.0
    %3255 = vmatprep.subr.mxu0 0.0
    %3256 = vmatpush1.msra.mxu0 0.0
    %3257 = vmatprep.subr.mxu0 0.0
    %3258 = vmatpush1.msra.mxu0 0.0
    %3259 = vmatprep.subr.mxu0 0.0
    %3260 = vmatpush1.msra.mxu0 0.0
    %3261 = vmatprep.subr.mxu0 0.0
    %3262 = vmatpush1.msra.mxu0 0.0
    %3263 = vmatprep.subr.mxu0 0.0
    %3264 = vmatpush1.msra.mxu0 0.0
    %3265 = vmatprep.subr.mxu0 0.0
    %3266 = vmatpush1.msra.mxu0 0.0
    %3267 = vmatprep.subr.mxu0 0.0
    %3268 = vmatpush1.msra.mxu0 0.0
    %3269 = vmatprep.subr.mxu0 0.0
    %3270 = vmatpush1.msra.mxu0 0.0
    %3271 = vmatprep.subr.mxu0 0.0
    %3272 = vmatpush1.msra.mxu0 0.0
    %3273 = vmatprep.subr.mxu0 0.0
    %3274 = vmatpush1.msra.mxu0 0.0
    %3275 = vmatprep.subr.mxu0 0.0
    %3276 = vmatpush1.msra.mxu0 0.0
    %3277 = vmatprep.subr.mxu0 0.0
    %3278 = vmatpush1.msra.mxu0 0.0
    %3279 = vmatprep.subr.mxu0 0.0
    %3280 = vmatpush1.msra.mxu0 0.0
    %3281 = vmatprep.subr.mxu0 0.0
    %3282 = vmatpush1.msra.mxu0 0.0
    %3283 = vmatprep.subr.mxu0 0.0
    %3284 = vmatpush1.msra.mxu0 0.0
    %3285 = vmatprep.subr.mxu0 0.0
    %3286 = vmatpush1.msra.mxu0 0.0
    %3287 = vmatprep.subr.mxu0 0.0
    %3288 = vmatpush1.msra.mxu0 0.0
    %3289 = vmatprep.subr.mxu0 0.0
    %3290 = vmatpush1.msra.mxu0 0.0
    %3291 = vmatprep.subr.mxu0 0.0
    %3292 = vmatpush1.msra.mxu0 0.0
    %3293 = vmatprep.subr.mxu0 0.0
    %3294 = vmatpush1.msra.mxu0 0.0
    %3295 = vmatprep.subr.mxu0 0.0
    %3296 = vmatpush1.msra.mxu0 0.0
    %3297 = vmatprep.subr.mxu0 0.0
    %3298 = vmatpush1.msra.mxu0 0.0
    %3299 = vmatprep.subr.mxu0 0.0
    %3300 = vmatpush1.msra.mxu0 0.0
    %3301 = vmatprep.subr.mxu0 0.0
    %3302 = vmatpush1.msra.mxu0 0.0
    %3303 = vmatprep.subr.mxu0 0.0
    %3304 = vmatpush1.msra.mxu0 0.0
    %3305 = vmatprep.subr.mxu0 0.0
    %3306 = vmatpush1.msra.mxu0 0.0
    %3307 = vmatprep.subr.mxu0 0.0
    %3308 = vmatpush1.msra.mxu0 0.0
    %3309 = vmatprep.subr.mxu0 0.0
    %3310 = vmatpush1.msra.mxu0 0.0
    %3311 = vmatprep.subr.mxu0 0.0
    %3312 = vmatpush1.msra.mxu0 0.0
    %3313 = vmatprep.subr.mxu0 0.0
    %3314 = vmatpush1.msra.mxu0 0.0
    %3315 = vmatprep.mubr.f32.mxu0 0.0
    %3316 = vmatmul.mubr.f32.gmra.mrb[0].mxu0 %v3246
    %v3317 = vpop.f32.mrb[0].mxu0
    %v3318 = vadd.f32 0.0, %v3317
    %v3319 = vpop.f32.mrb[0].mxu0
    %3320 = vdwg.mxu0
    %v3321 = vadd.f32 %v3241, %v3318
    %v3322 = vld [vmem:[%s55] sm:$0xff]
    %v3323 = vld [vmem:[%s55 + $0x8] sm:$0xff]
    %v3324 = vld [vmem:[%s57] sm:$0x1]
    %v3326 = vlaneseq
    %v3327 = vshrl.u32 %v3326, 7
    %v3328 = vsub.s32 0, %v3327
    %v3329 = vrot.slane %v3324, %v3328
    %v3332 = vsel %vm773, %v3321, 0
    %3334 = vmatprep.subr.mxu0 0.0
    %3335 = vmatpush1.msra.mxu0 %v3322
    %3336 = vmatprep.subr.mxu0 0.0
    %3337 = vmatpush1.msra.mxu0 %v3323
    %3338 = vmatprep.subr.mxu0 0.0
    %3339 = vmatpush1.msra.mxu0 0.0
    %3340 = vmatprep.subr.mxu0 0.0
    %3341 = vmatpush1.msra.mxu0 0.0
    %3342 = vmatprep.subr.mxu0 0.0
    %3343 = vmatpush1.msra.mxu0 0.0
    %3344 = vmatprep.subr.mxu0 0.0
    %3345 = vmatpush1.msra.mxu0 0.0
    %3346 = vmatprep.subr.mxu0 0.0
    %3347 = vmatpush1.msra.mxu0 0.0
    %3348 = vmatprep.subr.mxu0 0.0
    %3349 = vmatpush1.msra.mxu0 0.0
    %3350 = vmatprep.subr.mxu0 0.0
    %3351 = vmatpush1.msra.mxu0 0.0
    %3352 = vmatprep.subr.mxu0 0.0
    %3353 = vmatpush1.msra.mxu0 0.0
    %3354 = vmatprep.subr.mxu0 0.0
    %3355 = vmatpush1.msra.mxu0 0.0
    %3356 = vmatprep.subr.mxu0 0.0
    %3357 = vmatpush1.msra.mxu0 0.0
    %3358 = vmatprep.subr.mxu0 0.0
    %3359 = vmatpush1.msra.mxu0 0.0
    %3360 = vmatprep.subr.mxu0 0.0
    %3361 = vmatpush1.msra.mxu0 0.0
    %3362 = vmatprep.subr.mxu0 0.0
    %3363 = vmatpush1.msra.mxu0 0.0
    %3364 = vmatprep.subr.mxu0 0.0
    %3365 = vmatpush1.msra.mxu0 0.0
    %3366 = vmatprep.subr.mxu0 0.0
    %3367 = vmatpush1.msra.mxu0 0.0
    %3368 = vmatprep.subr.mxu0 0.0
    %3369 = vmatpush1.msra.mxu0 0.0
    %3370 = vmatprep.subr.mxu0 0.0
    %3371 = vmatpush1.msra.mxu0 0.0
    %3372 = vmatprep.subr.mxu0 0.0
    %3373 = vmatpush1.msra.mxu0 0.0
    %3374 = vmatprep.subr.mxu0 0.0
    %3375 = vmatpush1.msra.mxu0 0.0
    %3376 = vmatprep.subr.mxu0 0.0
    %3377 = vmatpush1.msra.mxu0 0.0
    %3378 = vmatprep.subr.mxu0 0.0
    %3379 = vmatpush1.msra.mxu0 0.0
    %3380 = vmatprep.subr.mxu0 0.0
    %3381 = vmatpush1.msra.mxu0 0.0
    %3382 = vmatprep.subr.mxu0 0.0
    %3383 = vmatpush1.msra.mxu0 0.0
    %3384 = vmatprep.subr.mxu0 0.0
    %3385 = vmatpush1.msra.mxu0 0.0
    %3386 = vmatprep.subr.mxu0 0.0
    %3387 = vmatpush1.msra.mxu0 0.0
    %3388 = vmatprep.subr.mxu0 0.0
    %3389 = vmatpush1.msra.mxu0 0.0
    %3390 = vmatprep.subr.mxu0 0.0
    %3391 = vmatpush1.msra.mxu0 0.0
    %3392 = vmatprep.subr.mxu0 0.0
    %3393 = vmatpush1.msra.mxu0 0.0
    %3394 = vmatprep.subr.mxu0 0.0
    %3395 = vmatpush1.msra.mxu0 0.0
    %3396 = vmatprep.subr.mxu0 0.0
    %3397 = vmatpush1.msra.mxu0 0.0
    %3398 = vmatprep.mubr.f32.mxu0 0.0
    %3399 = vmatmul.mubr.f32.gmra.mrb[0].mxu0 %v3332
    %v3400 = vpop.f32.mrb[0].mxu0
    %v3401 = vadd.f32 %v3329, %v3400
    %v3402 = vpop.f32.mrb[0].mxu0
    %3403 = vdwg.mxu0
    %3404 = vst.msk [vmem:[#allocation30] sm:$0xff] %vm773, %v3401
    // Predicated region
    $region186: #{tpu_custom_call.1} parent=1 // pred_check
      _
    $region187: #{tpu_custom_call.1} parent=1 // pred_check_branch
      %3406 = sbr.rel (0) target = $region189
    $region188: #{tpu_custom_call.1} parent=1 // pred_region
      %s3408 = ssub.s32 128, 128
      %3409 = vsyncadd [#allocation5], %s3408
      %s3411 = sshll.u32 [#allocation30], 4
      %s3412 = int_to_ptr.vmem [resolvable:$true] %s3411
      %3414 = dma.vmem_to_hbm [thread:$0]  %s3412, 128, %s59, [#allocation5]
    $region189: #{tpu_custom_call.1} parent=1 // pred_fallthru
      _
    // Predicated region
    $region190: #{tpu_custom_call.1} parent=1 // pred_check
      _
    $region191: #{tpu_custom_call.1} parent=1 // pred_check_branch
      %3416 = sbr.rel (0) target = $region193
    $region192: #{tpu_custom_call.1} parent=1 // pred_region
      %3417 = dma.done [#allocation5], 128
    $region193: #{tpu_custom_call.1} parent=1 // pred_fallthru
      _
    %3418 = vsyncpa [#allocation4], 1
    %3419 = vsyncpa [#allocation7], 1
    %3420 = vsyncpa [#allocation10], 1
    %3421 = vsyncpa [#allocation13], 1
    %3422 = vsyncpa [#allocation16], 1
    %3423 = vsyncpa [#allocation19], 1
    %3424 = vsyncpa [#allocation22], 1
    %3425 = vsyncpa [#allocation25], 1
    %3426 = vsyncpa [#allocation28], 1
    %3427 = vsyncpa [#allocation5], 1

</llo_original>
